<compile_context>
chip_gen: v5e
topology: v5e:2x2
jax: 0.10.0
libtpu: 0.0.40
codegen_flags: <defaults>
</compile_context>

<pallas_src>
import jax
import jax.numpy as jnp
from jax import lax
from jax.experimental import pallas as pl
from jax.experimental.pallas import tpu as pltpu

# ----- small, forward-consistent shapes -----
B = 2            # batch
N = 4            # image regions averaged over (dim=1)
IM_DIM = 32      # im_dim: hidden / cell size
IN_DIM = 128     # in_dim: token embedding dim (LSTMCell input size)
VOCAB = 44
NUM_CLASSES = VOCAB + 4   # len(tokenizer.word2idx) = vocab + START/END/PAD/UNK
MAX_LEN = 8

START_ID = 0
END_ID = 1

H = IM_DIM
H_PAD = 128              # hidden padded to a full lane width
V = NUM_CLASSES
V_PAD = 128              # classes padded to a full lane width
NEG_INF = -1e30


def _captioner_kernel(x_ref, w_init_ref, b_init_ref,
                      w_tok_ref, w_rec_ref, bout_ref,
                      tok_out_ref, h_out_ref, c_out_ref):
    HP = H_PAD
    G = 4 * HP   # width of the gate block inside w_rec / hrec

    # prologue: mean over regions + fused [proj_hidden | proj_cell] matmul
    xm = jnp.mean(x_ref[...], axis=1)                               # (B, HP)
    init = jnp.dot(xm, w_init_ref[...],
                   preferred_element_type=jnp.float32) + b_init_ref[...]
    h = init[:, 0:HP]                                               # (B, HP)
    c = init[:, HP:2 * HP]                                          # (B, HP)

    # hoisted bias load/broadcast (used 8 times in the loop)
    bo = bout_ref[...]                                              # (1, V_PAD)

    # h-side projection for step 0 (its logits half is unused/dead)
    hrec = jnp.dot(h, w_rec_ref[...], preferred_element_type=jnp.float32)
    gates_h = hrec[:, 0:G]                                          # (B, 4*HP)

    tok = jnp.full((B, 1), START_ID, jnp.int32)                     # <START>
    fin = jnp.zeros((B, 1), jnp.bool_)
    tok_acc = jnp.zeros((B, MAX_LEN), jnp.int32)

    iota_v = lax.broadcasted_iota(jnp.int32, (B, V_PAD), 1)         # (B, V_PAD)
    iota_l = lax.broadcasted_iota(jnp.int32, (B, MAX_LEN), 1)       # (B, L)

    # fully unrolled greedy decode; all state lives in vregs
    for l in range(MAX_LEN):
        # embedding lookup + Wih + (bih+bhh) all folded into w_tok rows
        onehot = (iota_v == tok).astype(jnp.float32)                # (B, V_PAD)
        gates = jnp.dot(onehot, w_tok_ref[...],
                        preferred_element_type=jnp.float32) + gates_h
        # PyTorch LSTMCell gate order (i, f, g, o); slices are vreg-aligned
        i_g = jax.nn.sigmoid(gates[:, 0:HP])
        f_g = jax.nn.sigmoid(gates[:, HP:2 * HP])
        g_g = jnp.tanh(gates[:, 2 * HP:3 * HP])
        o_g = jax.nn.sigmoid(gates[:, 3 * HP:4 * HP])
        c = f_g * c + i_g * g_g
        h = o_g * jnp.tanh(c)

        # ONE fused h-side matmul: [gates_h for next step | logits this step]
        hrec = jnp.dot(h, w_rec_ref[...], preferred_element_type=jnp.float32)
        gates_h = hrec[:, 0:G]
        logits = hrec[:, G:] + bo                                   # (B, V_PAD)

        # argmax(softmax(logits)) == argmax(logits): skip the softmax.
        # Padded classes carry a -1e30 bias so they never win; first-max
        # tie-breaking via min-index (matches torch.max / jnp.argmax).
        maxv = jnp.max(logits, axis=-1, keepdims=True)
        idx = jnp.min(jnp.where(logits == maxv, iota_v, V_PAD),
                      axis=-1, keepdims=True).astype(jnp.int32)     # (B, 1)

        # record this step's prediction into the carried token tile
        tok_acc = jnp.where(iota_l == l, idx, tok_acc)

        # greedy-decode state update (matches the Python loop in forward()):
        #   if finished: keep token; elif idx == END: finish, keep token;
        #   else: token <- idx
        is_end = idx == END_ID
        keep_old = jnp.logical_or(fin, is_end)
        tok = jnp.where(keep_old, tok, idx)
        fin = jnp.logical_or(fin, is_end)

    # single post-loop stores (no per-step masked stores)
    tok_out_ref[...] = tok_acc
    h_out_ref[...] = h
    c_out_ref[...] = c


def _pad_gate_blocks(m, rows_pad):
    """m: (R, 4*H), gate-ordered (i,f,g,o). Returns (rows_pad, 4*H_PAD) with
    each H-wide gate block placed at the start of its 128-wide padded slot."""
    R = m.shape[0]
    blocks = [jnp.pad(m[:, k * H:(k + 1) * H],
                      ((0, rows_pad - R), (0, H_PAD - H))) for k in range(4)]
    return jnp.concatenate(blocks, axis=1)


def captioner_forward(x, params):
    """params: PyTorch-shaped weights; folded / padded here for the kernel."""
    (wph, bph, wpc, bpc, wih, bih, whh, bhh, wout, bout, emb) = params

    # pad the feature axis so every in-kernel vector op is full-lane (128)
    x_p = jnp.pad(x, ((0, 0), (0, 0), (0, H_PAD - IM_DIM)))

    # fused initial projections: [proj_hidden | proj_cell]
    w_init = jnp.concatenate(
        [jnp.pad(wph.T, ((0, H_PAD - H), (0, H_PAD - H))),
         jnp.pad(wpc.T, ((0, H_PAD - H), (0, H_PAD - H)))], axis=1)
    b_init = jnp.concatenate(
        [jnp.pad(bph, (0, H_PAD - H)), jnp.pad(bpc, (0, H_PAD - H))]
    ).reshape(1, -1)

    # fold the embedding lookup, Wih and the gate biases into one token table:
    #   gates_x = onehot @ (emb @ Wih.T + (bih + bhh))
    # (exact: onehot has a single 1 per row, so the bias add is a row select)
    w_tok = (_pad_gate_blocks(jnp.dot(emb, wih.T,
                                      precision=lax.Precision.HIGHEST), V_PAD)
             + _pad_gate_blocks((bih + bhh).reshape(1, -1), 1))

    # fused recurrent + output projection: h @ [Whh.T | Wout.T]  (128 x 640)
    whh_p = _pad_gate_blocks(whh.T, H_PAD)
    wout_p = jnp.pad(wout.T, ((0, H_PAD - H), (0, V_PAD - V)))
    w_rec = jnp.concatenate([whh_p, wout_p], axis=1)

    # output bias; padded classes get a -1e30 bias (never an argmax winner)
    bout_p = jnp.concatenate(
        [bout, jnp.full((V_PAD - V,), NEG_INF, jnp.float32)]).reshape(1, -1)

    kernel_inputs = (x_p, w_init, b_init, w_tok, w_rec, bout_p)

    vmem = pl.BlockSpec(memory_space=pltpu.MemorySpace.VMEM)
    out_shape = (
        jax.ShapeDtypeStruct((B, MAX_LEN), jnp.int32),    # predicted token ids
        jax.ShapeDtypeStruct((B, H_PAD), jnp.float32),    # final hidden (padded)
        jax.ShapeDtypeStruct((B, H_PAD), jnp.float32),    # final cell (padded)
    )
    toks_bl, h_pad, c_pad = pl.pallas_call(
        _captioner_kernel,
        out_shape=out_shape,
        in_specs=[vmem] * len(kernel_inputs),
        out_specs=(vmem, vmem, vmem),
    )(*kernel_inputs)

    # present the same interface as before: (MAX_LEN, B) token ids, (B, H) states
    return toks_bl.T, h_pad[:, :IM_DIM], c_pad[:, :IM_DIM]


def reference_forward(x, params):
    """Pure-JAX re-implementation of the PyTorch forward() numerics."""
    (wph, bph, wpc, bpc, wih, bih, whh, bhh, wout, bout, emb) = params
    xm = jnp.mean(x, axis=1)
    h = xm @ wph.T + bph
    c = xm @ wpc.T + bpc
    tok = jnp.full((B,), START_ID, jnp.int32)
    fin = jnp.zeros((B,), jnp.bool_)
    toks = []
    for _ in range(MAX_LEN):
        e = emb[tok]
        gates = e @ wih.T + bih + h @ whh.T + bhh
        i = jax.nn.sigmoid(gates[:, :IM_DIM])
        f = jax.nn.sigmoid(gates[:, IM_DIM:2 * IM_DIM])
        g = jnp.tanh(gates[:, 2 * IM_DIM:3 * IM_DIM])
        o = jax.nn.sigmoid(gates[:, 3 * IM_DIM:])
        c = f * c + i * g
        h = o * jnp.tanh(c)
        probs = jax.nn.softmax(h @ wout.T + bout, axis=-1)
        idx = jnp.argmax(probs, axis=-1).astype(jnp.int32)
        toks.append(idx)
        keep_old = jnp.logical_or(fin, idx == END_ID)
        tok = jnp.where(keep_old, tok, idx)
        fin = jnp.logical_or(fin, idx == END_ID)
    return jnp.stack(toks, 0), h, c


def init_params(key):
    ks = jax.random.split(key, 11)
    s = 0.1
    wph = s * jax.random.normal(ks[0], (IM_DIM, IM_DIM), jnp.float32)
    bph = s * jax.random.normal(ks[1], (IM_DIM,), jnp.float32)
    wpc = s * jax.random.normal(ks[2], (IM_DIM, IM_DIM), jnp.float32)
    bpc = s * jax.random.normal(ks[3], (IM_DIM,), jnp.float32)
    wih = s * jax.random.normal(ks[4], (4 * IM_DIM, IN_DIM), jnp.float32)
    bih = s * jax.random.normal(ks[5], (4 * IM_DIM,), jnp.float32)
    whh = s * jax.random.normal(ks[6], (4 * IM_DIM, IM_DIM), jnp.float32)
    bhh = s * jax.random.normal(ks[7], (4 * IM_DIM,), jnp.float32)
    wout = s * jax.random.normal(ks[8], (NUM_CLASSES, IM_DIM), jnp.float32)
    bout = s * jax.random.normal(ks[9], (NUM_CLASSES,), jnp.float32)
    emb = s * jax.random.normal(ks[10], (NUM_CLASSES, IN_DIM), jnp.float32)
    return (wph, bph, wpc, bpc, wih, bih, whh, bhh, wout, bout, emb)


if __name__ == "__main__":
    key = jax.random.PRNGKey(0)
    kx, kp = jax.random.split(key)
    x = jax.random.normal(kx, (B, N, IM_DIM), jnp.float32)
    params = init_params(kp)

    toks, h, c = captioner_forward(x, params)
    jax.block_until_ready((toks, h, c))

    toks_ref, h_ref, c_ref = reference_forward(x, params)
    assert jnp.array_equal(toks, toks_ref), "token mismatch vs reference"
    assert jnp.allclose(h, h_ref, atol=1e-4, rtol=1e-4), "hidden mismatch"
    assert jnp.allclose(c, c_ref, atol=1e-4, rtol=1e-4), "cell mismatch"

    # TODO(synk): the idx2word string decoding of the PyTorch module has no
    # tensor equivalent; token ids are returned instead.
    print("KERNEL_OK")
</pallas_src>

<mosaic_0001>
module attributes {stable_mosaic.version = 11 : i64} {
  func.func @_captioner_kernel(%arg0: memref<2x4x128xf32, #tpu.memory_space<vmem>>, %arg1: memref<128x256xf32, #tpu.memory_space<vmem>>, %arg2: memref<1x256xf32, #tpu.memory_space<vmem>>, %arg3: memref<128x512xf32, #tpu.memory_space<vmem>>, %arg4: memref<128x640xf32, #tpu.memory_space<vmem>>, %arg5: memref<1x128xf32, #tpu.memory_space<vmem>>, %arg6: memref<2x8xi32, #tpu.memory_space<vmem>>, %arg7: memref<2x128xf32, #tpu.memory_space<vmem>>, %arg8: memref<2x128xf32, #tpu.memory_space<vmem>>) attributes {dimension_semantics = [], scalar_prefetch = 0 : i64, scratch_operands = 0 : i64, tpu.core_type = #tpu.core_type<tc>} {
    %c0 = arith.constant 0 : index
    %c0_0 = arith.constant 0 : index
    %c0_1 = arith.constant 0 : index
    %0 = vector.load %arg0[%c0, %c0_0, %c0_1] : memref<2x4x128xf32, #tpu.memory_space<vmem>>, vector<2x4x128xf32>
    %cst = arith.constant dense<0.000000e+00> : vector<2x128xf32>
    %1 = vector.multi_reduction <add>, %0, %cst [1] : vector<2x4x128xf32> to vector<2x128xf32>
    %cst_2 = arith.constant 4.000000e+00 : f32
    %2 = vector.broadcast %cst_2 : f32 to vector<2x128xf32>
    %3 = arith.divf %1, %2 : vector<2x128xf32>
    %c0_3 = arith.constant 0 : index
    %c0_4 = arith.constant 0 : index
    %4 = vector.load %arg1[%c0_3, %c0_4] : memref<128x256xf32, #tpu.memory_space<vmem>>, vector<128x256xf32>
    %cst_5 = arith.constant dense<0.000000e+00> : vector<2x256xf32>
    %5 = tpu.matmul %3, %4, %cst_5 {dimension_numbers = #tpu.dot_dimension_numbers<[1], [0], [0], [1], [0, 0, 1, 1], [], []>} : vector<2x128xf32>, vector<128x256xf32>, vector<2x256xf32> -> vector<2x256xf32>
    %c0_6 = arith.constant 0 : index
    %c0_7 = arith.constant 0 : index
    %6 = vector.load %arg2[%c0_6, %c0_7] : memref<1x256xf32, #tpu.memory_space<vmem>>, vector<1x256xf32>
    %7 = vector.broadcast %6 : vector<1x256xf32> to vector<2x256xf32>
    %8 = arith.addf %5, %7 : vector<2x256xf32>
    %9 = vector.extract_strided_slice %8 {offsets = [0, 0], sizes = [2, 128], strides = [1, 1]} : vector<2x256xf32> to vector<2x128xf32>
    %10 = vector.extract_strided_slice %8 {offsets = [0, 128], sizes = [2, 128], strides = [1, 1]} : vector<2x256xf32> to vector<2x128xf32>
    %c0_8 = arith.constant 0 : index
    %c0_9 = arith.constant 0 : index
    %11 = vector.load %arg5[%c0_8, %c0_9] : memref<1x128xf32, #tpu.memory_space<vmem>>, vector<1x128xf32>
    %c0_10 = arith.constant 0 : index
    %c0_11 = arith.constant 0 : index
    %12 = vector.load %arg4[%c0_10, %c0_11] : memref<128x640xf32, #tpu.memory_space<vmem>>, vector<128x640xf32>
    %cst_12 = arith.constant dense<0.000000e+00> : vector<2x640xf32>
    %13 = tpu.matmul %9, %12, %cst_12 {dimension_numbers = #tpu.dot_dimension_numbers<[1], [0], [0], [1], [0, 0, 1, 1], [], []>} : vector<2x128xf32>, vector<128x640xf32>, vector<2x640xf32> -> vector<2x640xf32>
    %14 = vector.extract_strided_slice %13 {offsets = [0, 0], sizes = [2, 512], strides = [1, 1]} : vector<2x640xf32> to vector<2x512xf32>
    %c0_i32 = arith.constant 0 : i32
    %15 = vector.broadcast %c0_i32 : i32 to vector<2x1xi32>
    %false = arith.constant false
    %16 = vector.broadcast %false : i1 to vector<2x1xi1>
    %c0_i32_13 = arith.constant 0 : i32
    %17 = vector.broadcast %c0_i32_13 : i32 to vector<2x8xi32>
    %18 = tpu.iota {dimensions = array<i32: 1>} : vector<2x128xi32>
    %19 = tpu.iota {dimensions = array<i32: 1>} : vector<2x8xi32>
    %20 = vector.broadcast %15 : vector<2x1xi32> to vector<2x128xi32>
    %21 = arith.cmpi eq, %18, %20 : vector<2x128xi32>
    %22 = arith.extui %21 : vector<2x128xi1> to vector<2x128xi32>
    %23 = arith.sitofp %22 : vector<2x128xi32> to vector<2x128xf32>
    %c0_14 = arith.constant 0 : index
    %c0_15 = arith.constant 0 : index
    %24 = vector.load %arg3[%c0_14, %c0_15] : memref<128x512xf32, #tpu.memory_space<vmem>>, vector<128x512xf32>
    %cst_16 = arith.constant dense<0.000000e+00> : vector<2x512xf32>
    %25 = tpu.matmul %23, %24, %cst_16 {dimension_numbers = #tpu.dot_dimension_numbers<[1], [0], [0], [1], [0, 0, 1, 1], [], []>} : vector<2x128xf32>, vector<128x512xf32>, vector<2x512xf32> -> vector<2x512xf32>
    %26 = arith.addf %25, %14 : vector<2x512xf32>
    %27 = vector.extract_strided_slice %26 {offsets = [0, 0], sizes = [2, 128], strides = [1, 1]} : vector<2x512xf32> to vector<2x128xf32>
    %28 = arith.negf %27 : vector<2x128xf32>
    %29 = math.exp %28 : vector<2x128xf32>
    %cst_17 = arith.constant 1.000000e+00 : f32
    %30 = vector.broadcast %cst_17 : f32 to vector<2x128xf32>
    %31 = arith.addf %30, %29 : vector<2x128xf32>
    %32 = arith.divf %30, %31 : vector<2x128xf32>
    %33 = vector.extract_strided_slice %26 {offsets = [0, 128], sizes = [2, 128], strides = [1, 1]} : vector<2x512xf32> to vector<2x128xf32>
    %34 = arith.negf %33 : vector<2x128xf32>
    %35 = math.exp %34 : vector<2x128xf32>
    %cst_18 = arith.constant 1.000000e+00 : f32
    %36 = vector.broadcast %cst_18 : f32 to vector<2x128xf32>
    %37 = arith.addf %36, %35 : vector<2x128xf32>
    %38 = arith.divf %36, %37 : vector<2x128xf32>
    %39 = vector.extract_strided_slice %26 {offsets = [0, 256], sizes = [2, 128], strides = [1, 1]} : vector<2x512xf32> to vector<2x128xf32>
    %40 = math.tanh %39 : vector<2x128xf32>
    %41 = vector.extract_strided_slice %26 {offsets = [0, 384], sizes = [2, 128], strides = [1, 1]} : vector<2x512xf32> to vector<2x128xf32>
    %42 = arith.negf %41 : vector<2x128xf32>
    %43 = math.exp %42 : vector<2x128xf32>
    %cst_19 = arith.constant 1.000000e+00 : f32
    %44 = vector.broadcast %cst_19 : f32 to vector<2x128xf32>
    %45 = arith.addf %44, %43 : vector<2x128xf32>
    %46 = arith.divf %44, %45 : vector<2x128xf32>
    %47 = arith.mulf %38, %10 : vector<2x128xf32>
    %48 = arith.mulf %32, %40 : vector<2x128xf32>
    %49 = arith.addf %47, %48 : vector<2x128xf32>
    %50 = math.tanh %49 : vector<2x128xf32>
    %51 = arith.mulf %46, %50 : vector<2x128xf32>
    %c0_20 = arith.constant 0 : index
    %c0_21 = arith.constant 0 : index
    %52 = vector.load %arg4[%c0_20, %c0_21] : memref<128x640xf32, #tpu.memory_space<vmem>>, vector<128x640xf32>
    %cst_22 = arith.constant dense<0.000000e+00> : vector<2x640xf32>
    %53 = tpu.matmul %51, %52, %cst_22 {dimension_numbers = #tpu.dot_dimension_numbers<[1], [0], [0], [1], [0, 0, 1, 1], [], []>} : vector<2x128xf32>, vector<128x640xf32>, vector<2x640xf32> -> vector<2x640xf32>
    %54 = vector.extract_strided_slice %53 {offsets = [0, 0], sizes = [2, 512], strides = [1, 1]} : vector<2x640xf32> to vector<2x512xf32>
    %55 = vector.extract_strided_slice %53 {offsets = [0, 512], sizes = [2, 128], strides = [1, 1]} : vector<2x640xf32> to vector<2x128xf32>
    %56 = vector.broadcast %11 : vector<1x128xf32> to vector<2x128xf32>
    %57 = arith.addf %55, %56 : vector<2x128xf32>
    %cst_23 = arith.constant dense<0xFF800000> : vector<2xf32>
    %58 = vector.multi_reduction <maximumf>, %57, %cst_23 [1] : vector<2x128xf32> to vector<2xf32>
    %59 = vector.shape_cast %58 : vector<2xf32> to vector<2x1xf32>
    %60 = vector.broadcast %59 : vector<2x1xf32> to vector<2x128xf32>
    %61 = arith.cmpf oeq, %57, %60 : vector<2x128xf32>
    %c128_i32 = arith.constant 128 : i32
    %62 = vector.broadcast %c128_i32 : i32 to vector<2x128xi32>
    %63 = arith.select %61, %18, %62 : vector<2x128xi1>, vector<2x128xi32>
    %cst_24 = arith.constant dense<2147483647> : vector<2xi32>
    %64 = vector.multi_reduction <minsi>, %63, %cst_24 [1] : vector<2x128xi32> to vector<2xi32>
    %65 = vector.shape_cast %64 : vector<2xi32> to vector<2x1xi32>
    %c0_i32_25 = arith.constant 0 : i32
    %66 = vector.broadcast %c0_i32_25 : i32 to vector<2x8xi32>
    %67 = arith.cmpi eq, %19, %66 : vector<2x8xi32>
    %68 = vector.shape_cast %65 : vector<2x1xi32> to vector<2x1xi32>
    %69 = vector.broadcast %68 : vector<2x1xi32> to vector<2x8xi32>
    %70 = arith.select %67, %69, %17 : vector<2x8xi1>, vector<2x8xi32>
    %c1_i32 = arith.constant 1 : i32
    %71 = vector.broadcast %c1_i32 : i32 to vector<2x1xi32>
    %72 = arith.cmpi eq, %65, %71 : vector<2x1xi32>
    %73 = arith.ori %16, %72 : vector<2x1xi1>
    %74 = arith.select %73, %15, %65 : vector<2x1xi1>, vector<2x1xi32>
    %75 = arith.ori %16, %72 : vector<2x1xi1>
    %76 = vector.broadcast %74 : vector<2x1xi32> to vector<2x128xi32>
    %77 = arith.cmpi eq, %18, %76 : vector<2x128xi32>
    %78 = arith.extui %77 : vector<2x128xi1> to vector<2x128xi32>
    %79 = arith.sitofp %78 : vector<2x128xi32> to vector<2x128xf32>
    %c0_26 = arith.constant 0 : index
    %c0_27 = arith.constant 0 : index
    %80 = vector.load %arg3[%c0_26, %c0_27] : memref<128x512xf32, #tpu.memory_space<vmem>>, vector<128x512xf32>
    %cst_28 = arith.constant dense<0.000000e+00> : vector<2x512xf32>
    %81 = tpu.matmul %79, %80, %cst_28 {dimension_numbers = #tpu.dot_dimension_numbers<[1], [0], [0], [1], [0, 0, 1, 1], [], []>} : vector<2x128xf32>, vector<128x512xf32>, vector<2x512xf32> -> vector<2x512xf32>
    %82 = arith.addf %81, %54 : vector<2x512xf32>
    %83 = vector.extract_strided_slice %82 {offsets = [0, 0], sizes = [2, 128], strides = [1, 1]} : vector<2x512xf32> to vector<2x128xf32>
    %84 = arith.negf %83 : vector<2x128xf32>
    %85 = math.exp %84 : vector<2x128xf32>
    %cst_29 = arith.constant 1.000000e+00 : f32
    %86 = vector.broadcast %cst_29 : f32 to vector<2x128xf32>
    %87 = arith.addf %86, %85 : vector<2x128xf32>
    %88 = arith.divf %86, %87 : vector<2x128xf32>
    %89 = vector.extract_strided_slice %82 {offsets = [0, 128], sizes = [2, 128], strides = [1, 1]} : vector<2x512xf32> to vector<2x128xf32>
    %90 = arith.negf %89 : vector<2x128xf32>
    %91 = math.exp %90 : vector<2x128xf32>
    %cst_30 = arith.constant 1.000000e+00 : f32
    %92 = vector.broadcast %cst_30 : f32 to vector<2x128xf32>
    %93 = arith.addf %92, %91 : vector<2x128xf32>
    %94 = arith.divf %92, %93 : vector<2x128xf32>
    %95 = vector.extract_strided_slice %82 {offsets = [0, 256], sizes = [2, 128], strides = [1, 1]} : vector<2x512xf32> to vector<2x128xf32>
    %96 = math.tanh %95 : vector<2x128xf32>
    %97 = vector.extract_strided_slice %82 {offsets = [0, 384], sizes = [2, 128], strides = [1, 1]} : vector<2x512xf32> to vector<2x128xf32>
    %98 = arith.negf %97 : vector<2x128xf32>
    %99 = math.exp %98 : vector<2x128xf32>
    %cst_31 = arith.constant 1.000000e+00 : f32
    %100 = vector.broadcast %cst_31 : f32 to vector<2x128xf32>
    %101 = arith.addf %100, %99 : vector<2x128xf32>
    %102 = arith.divf %100, %101 : vector<2x128xf32>
    %103 = arith.mulf %94, %49 : vector<2x128xf32>
    %104 = arith.mulf %88, %96 : vector<2x128xf32>
    %105 = arith.addf %103, %104 : vector<2x128xf32>
    %106 = math.tanh %105 : vector<2x128xf32>
    %107 = arith.mulf %102, %106 : vector<2x128xf32>
    %c0_32 = arith.constant 0 : index
    %c0_33 = arith.constant 0 : index
    %108 = vector.load %arg4[%c0_32, %c0_33] : memref<128x640xf32, #tpu.memory_space<vmem>>, vector<128x640xf32>
    %cst_34 = arith.constant dense<0.000000e+00> : vector<2x640xf32>
    %109 = tpu.matmul %107, %108, %cst_34 {dimension_numbers = #tpu.dot_dimension_numbers<[1], [0], [0], [1], [0, 0, 1, 1], [], []>} : vector<2x128xf32>, vector<128x640xf32>, vector<2x640xf32> -> vector<2x640xf32>
    %110 = vector.extract_strided_slice %109 {offsets = [0, 0], sizes = [2, 512], strides = [1, 1]} : vector<2x640xf32> to vector<2x512xf32>
    %111 = vector.extract_strided_slice %109 {offsets = [0, 512], sizes = [2, 128], strides = [1, 1]} : vector<2x640xf32> to vector<2x128xf32>
    %112 = vector.broadcast %11 : vector<1x128xf32> to vector<2x128xf32>
    %113 = arith.addf %111, %112 : vector<2x128xf32>
    %cst_35 = arith.constant dense<0xFF800000> : vector<2xf32>
    %114 = vector.multi_reduction <maximumf>, %113, %cst_35 [1] : vector<2x128xf32> to vector<2xf32>
    %115 = vector.shape_cast %114 : vector<2xf32> to vector<2x1xf32>
    %116 = vector.broadcast %115 : vector<2x1xf32> to vector<2x128xf32>
    %117 = arith.cmpf oeq, %113, %116 : vector<2x128xf32>
    %c128_i32_36 = arith.constant 128 : i32
    %118 = vector.broadcast %c128_i32_36 : i32 to vector<2x128xi32>
    %119 = arith.select %117, %18, %118 : vector<2x128xi1>, vector<2x128xi32>
    %cst_37 = arith.constant dense<2147483647> : vector<2xi32>
    %120 = vector.multi_reduction <minsi>, %119, %cst_37 [1] : vector<2x128xi32> to vector<2xi32>
    %121 = vector.shape_cast %120 : vector<2xi32> to vector<2x1xi32>
    %c1_i32_38 = arith.constant 1 : i32
    %122 = vector.broadcast %c1_i32_38 : i32 to vector<2x8xi32>
    %123 = arith.cmpi eq, %19, %122 : vector<2x8xi32>
    %124 = vector.shape_cast %121 : vector<2x1xi32> to vector<2x1xi32>
    %125 = vector.broadcast %124 : vector<2x1xi32> to vector<2x8xi32>
    %126 = arith.select %123, %125, %70 : vector<2x8xi1>, vector<2x8xi32>
    %c1_i32_39 = arith.constant 1 : i32
    %127 = vector.broadcast %c1_i32_39 : i32 to vector<2x1xi32>
    %128 = arith.cmpi eq, %121, %127 : vector<2x1xi32>
    %129 = arith.ori %75, %128 : vector<2x1xi1>
    %130 = arith.select %129, %74, %121 : vector<2x1xi1>, vector<2x1xi32>
    %131 = arith.ori %75, %128 : vector<2x1xi1>
    %132 = vector.broadcast %130 : vector<2x1xi32> to vector<2x128xi32>
    %133 = arith.cmpi eq, %18, %132 : vector<2x128xi32>
    %134 = arith.extui %133 : vector<2x128xi1> to vector<2x128xi32>
    %135 = arith.sitofp %134 : vector<2x128xi32> to vector<2x128xf32>
    %c0_40 = arith.constant 0 : index
    %c0_41 = arith.constant 0 : index
    %136 = vector.load %arg3[%c0_40, %c0_41] : memref<128x512xf32, #tpu.memory_space<vmem>>, vector<128x512xf32>
    %cst_42 = arith.constant dense<0.000000e+00> : vector<2x512xf32>
    %137 = tpu.matmul %135, %136, %cst_42 {dimension_numbers = #tpu.dot_dimension_numbers<[1], [0], [0], [1], [0, 0, 1, 1], [], []>} : vector<2x128xf32>, vector<128x512xf32>, vector<2x512xf32> -> vector<2x512xf32>
    %138 = arith.addf %137, %110 : vector<2x512xf32>
    %139 = vector.extract_strided_slice %138 {offsets = [0, 0], sizes = [2, 128], strides = [1, 1]} : vector<2x512xf32> to vector<2x128xf32>
    %140 = arith.negf %139 : vector<2x128xf32>
    %141 = math.exp %140 : vector<2x128xf32>
    %cst_43 = arith.constant 1.000000e+00 : f32
    %142 = vector.broadcast %cst_43 : f32 to vector<2x128xf32>
    %143 = arith.addf %142, %141 : vector<2x128xf32>
    %144 = arith.divf %142, %143 : vector<2x128xf32>
    %145 = vector.extract_strided_slice %138 {offsets = [0, 128], sizes = [2, 128], strides = [1, 1]} : vector<2x512xf32> to vector<2x128xf32>
    %146 = arith.negf %145 : vector<2x128xf32>
    %147 = math.exp %146 : vector<2x128xf32>
    %cst_44 = arith.constant 1.000000e+00 : f32
    %148 = vector.broadcast %cst_44 : f32 to vector<2x128xf32>
    %149 = arith.addf %148, %147 : vector<2x128xf32>
    %150 = arith.divf %148, %149 : vector<2x128xf32>
    %151 = vector.extract_strided_slice %138 {offsets = [0, 256], sizes = [2, 128], strides = [1, 1]} : vector<2x512xf32> to vector<2x128xf32>
    %152 = math.tanh %151 : vector<2x128xf32>
    %153 = vector.extract_strided_slice %138 {offsets = [0, 384], sizes = [2, 128], strides = [1, 1]} : vector<2x512xf32> to vector<2x128xf32>
    %154 = arith.negf %153 : vector<2x128xf32>
    %155 = math.exp %154 : vector<2x128xf32>
    %cst_45 = arith.constant 1.000000e+00 : f32
    %156 = vector.broadcast %cst_45 : f32 to vector<2x128xf32>
    %157 = arith.addf %156, %155 : vector<2x128xf32>
    %158 = arith.divf %156, %157 : vector<2x128xf32>
    %159 = arith.mulf %150, %105 : vector<2x128xf32>
    %160 = arith.mulf %144, %152 : vector<2x128xf32>
    %161 = arith.addf %159, %160 : vector<2x128xf32>
    %162 = math.tanh %161 : vector<2x128xf32>
    %163 = arith.mulf %158, %162 : vector<2x128xf32>
    %c0_46 = arith.constant 0 : index
    %c0_47 = arith.constant 0 : index
    %164 = vector.load %arg4[%c0_46, %c0_47] : memref<128x640xf32, #tpu.memory_space<vmem>>, vector<128x640xf32>
    %cst_48 = arith.constant dense<0.000000e+00> : vector<2x640xf32>
    %165 = tpu.matmul %163, %164, %cst_48 {dimension_numbers = #tpu.dot_dimension_numbers<[1], [0], [0], [1], [0, 0, 1, 1], [], []>} : vector<2x128xf32>, vector<128x640xf32>, vector<2x640xf32> -> vector<2x640xf32>
    %166 = vector.extract_strided_slice %165 {offsets = [0, 0], sizes = [2, 512], strides = [1, 1]} : vector<2x640xf32> to vector<2x512xf32>
    %167 = vector.extract_strided_slice %165 {offsets = [0, 512], sizes = [2, 128], strides = [1, 1]} : vector<2x640xf32> to vector<2x128xf32>
    %168 = vector.broadcast %11 : vector<1x128xf32> to vector<2x128xf32>
    %169 = arith.addf %167, %168 : vector<2x128xf32>
    %cst_49 = arith.constant dense<0xFF800000> : vector<2xf32>
    %170 = vector.multi_reduction <maximumf>, %169, %cst_49 [1] : vector<2x128xf32> to vector<2xf32>
    %171 = vector.shape_cast %170 : vector<2xf32> to vector<2x1xf32>
    %172 = vector.broadcast %171 : vector<2x1xf32> to vector<2x128xf32>
    %173 = arith.cmpf oeq, %169, %172 : vector<2x128xf32>
    %c128_i32_50 = arith.constant 128 : i32
    %174 = vector.broadcast %c128_i32_50 : i32 to vector<2x128xi32>
    %175 = arith.select %173, %18, %174 : vector<2x128xi1>, vector<2x128xi32>
    %cst_51 = arith.constant dense<2147483647> : vector<2xi32>
    %176 = vector.multi_reduction <minsi>, %175, %cst_51 [1] : vector<2x128xi32> to vector<2xi32>
    %177 = vector.shape_cast %176 : vector<2xi32> to vector<2x1xi32>
    %c2_i32 = arith.constant 2 : i32
    %178 = vector.broadcast %c2_i32 : i32 to vector<2x8xi32>
    %179 = arith.cmpi eq, %19, %178 : vector<2x8xi32>
    %180 = vector.shape_cast %177 : vector<2x1xi32> to vector<2x1xi32>
    %181 = vector.broadcast %180 : vector<2x1xi32> to vector<2x8xi32>
    %182 = arith.select %179, %181, %126 : vector<2x8xi1>, vector<2x8xi32>
    %c1_i32_52 = arith.constant 1 : i32
    %183 = vector.broadcast %c1_i32_52 : i32 to vector<2x1xi32>
    %184 = arith.cmpi eq, %177, %183 : vector<2x1xi32>
    %185 = arith.ori %131, %184 : vector<2x1xi1>
    %186 = arith.select %185, %130, %177 : vector<2x1xi1>, vector<2x1xi32>
    %187 = arith.ori %131, %184 : vector<2x1xi1>
    %188 = vector.broadcast %186 : vector<2x1xi32> to vector<2x128xi32>
    %189 = arith.cmpi eq, %18, %188 : vector<2x128xi32>
    %190 = arith.extui %189 : vector<2x128xi1> to vector<2x128xi32>
    %191 = arith.sitofp %190 : vector<2x128xi32> to vector<2x128xf32>
    %c0_53 = arith.constant 0 : index
    %c0_54 = arith.constant 0 : index
    %192 = vector.load %arg3[%c0_53, %c0_54] : memref<128x512xf32, #tpu.memory_space<vmem>>, vector<128x512xf32>
    %cst_55 = arith.constant dense<0.000000e+00> : vector<2x512xf32>
    %193 = tpu.matmul %191, %192, %cst_55 {dimension_numbers = #tpu.dot_dimension_numbers<[1], [0], [0], [1], [0, 0, 1, 1], [], []>} : vector<2x128xf32>, vector<128x512xf32>, vector<2x512xf32> -> vector<2x512xf32>
    %194 = arith.addf %193, %166 : vector<2x512xf32>
    %195 = vector.extract_strided_slice %194 {offsets = [0, 0], sizes = [2, 128], strides = [1, 1]} : vector<2x512xf32> to vector<2x128xf32>
    %196 = arith.negf %195 : vector<2x128xf32>
    %197 = math.exp %196 : vector<2x128xf32>
    %cst_56 = arith.constant 1.000000e+00 : f32
    %198 = vector.broadcast %cst_56 : f32 to vector<2x128xf32>
    %199 = arith.addf %198, %197 : vector<2x128xf32>
    %200 = arith.divf %198, %199 : vector<2x128xf32>
    %201 = vector.extract_strided_slice %194 {offsets = [0, 128], sizes = [2, 128], strides = [1, 1]} : vector<2x512xf32> to vector<2x128xf32>
    %202 = arith.negf %201 : vector<2x128xf32>
    %203 = math.exp %202 : vector<2x128xf32>
    %cst_57 = arith.constant 1.000000e+00 : f32
    %204 = vector.broadcast %cst_57 : f32 to vector<2x128xf32>
    %205 = arith.addf %204, %203 : vector<2x128xf32>
    %206 = arith.divf %204, %205 : vector<2x128xf32>
    %207 = vector.extract_strided_slice %194 {offsets = [0, 256], sizes = [2, 128], strides = [1, 1]} : vector<2x512xf32> to vector<2x128xf32>
    %208 = math.tanh %207 : vector<2x128xf32>
    %209 = vector.extract_strided_slice %194 {offsets = [0, 384], sizes = [2, 128], strides = [1, 1]} : vector<2x512xf32> to vector<2x128xf32>
    %210 = arith.negf %209 : vector<2x128xf32>
    %211 = math.exp %210 : vector<2x128xf32>
    %cst_58 = arith.constant 1.000000e+00 : f32
    %212 = vector.broadcast %cst_58 : f32 to vector<2x128xf32>
    %213 = arith.addf %212, %211 : vector<2x128xf32>
    %214 = arith.divf %212, %213 : vector<2x128xf32>
    %215 = arith.mulf %206, %161 : vector<2x128xf32>
    %216 = arith.mulf %200, %208 : vector<2x128xf32>
    %217 = arith.addf %215, %216 : vector<2x128xf32>
    %218 = math.tanh %217 : vector<2x128xf32>
    %219 = arith.mulf %214, %218 : vector<2x128xf32>
    %c0_59 = arith.constant 0 : index
    %c0_60 = arith.constant 0 : index
    %220 = vector.load %arg4[%c0_59, %c0_60] : memref<128x640xf32, #tpu.memory_space<vmem>>, vector<128x640xf32>
    %cst_61 = arith.constant dense<0.000000e+00> : vector<2x640xf32>
    %221 = tpu.matmul %219, %220, %cst_61 {dimension_numbers = #tpu.dot_dimension_numbers<[1], [0], [0], [1], [0, 0, 1, 1], [], []>} : vector<2x128xf32>, vector<128x640xf32>, vector<2x640xf32> -> vector<2x640xf32>
    %222 = vector.extract_strided_slice %221 {offsets = [0, 0], sizes = [2, 512], strides = [1, 1]} : vector<2x640xf32> to vector<2x512xf32>
    %223 = vector.extract_strided_slice %221 {offsets = [0, 512], sizes = [2, 128], strides = [1, 1]} : vector<2x640xf32> to vector<2x128xf32>
    %224 = vector.broadcast %11 : vector<1x128xf32> to vector<2x128xf32>
    %225 = arith.addf %223, %224 : vector<2x128xf32>
    %cst_62 = arith.constant dense<0xFF800000> : vector<2xf32>
    %226 = vector.multi_reduction <maximumf>, %225, %cst_62 [1] : vector<2x128xf32> to vector<2xf32>
    %227 = vector.shape_cast %226 : vector<2xf32> to vector<2x1xf32>
    %228 = vector.broadcast %227 : vector<2x1xf32> to vector<2x128xf32>
    %229 = arith.cmpf oeq, %225, %228 : vector<2x128xf32>
    %c128_i32_63 = arith.constant 128 : i32
    %230 = vector.broadcast %c128_i32_63 : i32 to vector<2x128xi32>
    %231 = arith.select %229, %18, %230 : vector<2x128xi1>, vector<2x128xi32>
    %cst_64 = arith.constant dense<2147483647> : vector<2xi32>
    %232 = vector.multi_reduction <minsi>, %231, %cst_64 [1] : vector<2x128xi32> to vector<2xi32>
    %233 = vector.shape_cast %232 : vector<2xi32> to vector<2x1xi32>
    %c3_i32 = arith.constant 3 : i32
    %234 = vector.broadcast %c3_i32 : i32 to vector<2x8xi32>
    %235 = arith.cmpi eq, %19, %234 : vector<2x8xi32>
    %236 = vector.shape_cast %233 : vector<2x1xi32> to vector<2x1xi32>
    %237 = vector.broadcast %236 : vector<2x1xi32> to vector<2x8xi32>
    %238 = arith.select %235, %237, %182 : vector<2x8xi1>, vector<2x8xi32>
    %c1_i32_65 = arith.constant 1 : i32
    %239 = vector.broadcast %c1_i32_65 : i32 to vector<2x1xi32>
    %240 = arith.cmpi eq, %233, %239 : vector<2x1xi32>
    %241 = arith.ori %187, %240 : vector<2x1xi1>
    %242 = arith.select %241, %186, %233 : vector<2x1xi1>, vector<2x1xi32>
    %243 = arith.ori %187, %240 : vector<2x1xi1>
    %244 = vector.broadcast %242 : vector<2x1xi32> to vector<2x128xi32>
    %245 = arith.cmpi eq, %18, %244 : vector<2x128xi32>
    %246 = arith.extui %245 : vector<2x128xi1> to vector<2x128xi32>
    %247 = arith.sitofp %246 : vector<2x128xi32> to vector<2x128xf32>
    %c0_66 = arith.constant 0 : index
    %c0_67 = arith.constant 0 : index
    %248 = vector.load %arg3[%c0_66, %c0_67] : memref<128x512xf32, #tpu.memory_space<vmem>>, vector<128x512xf32>
    %cst_68 = arith.constant dense<0.000000e+00> : vector<2x512xf32>
    %249 = tpu.matmul %247, %248, %cst_68 {dimension_numbers = #tpu.dot_dimension_numbers<[1], [0], [0], [1], [0, 0, 1, 1], [], []>} : vector<2x128xf32>, vector<128x512xf32>, vector<2x512xf32> -> vector<2x512xf32>
    %250 = arith.addf %249, %222 : vector<2x512xf32>
    %251 = vector.extract_strided_slice %250 {offsets = [0, 0], sizes = [2, 128], strides = [1, 1]} : vector<2x512xf32> to vector<2x128xf32>
    %252 = arith.negf %251 : vector<2x128xf32>
    %253 = math.exp %252 : vector<2x128xf32>
    %cst_69 = arith.constant 1.000000e+00 : f32
    %254 = vector.broadcast %cst_69 : f32 to vector<2x128xf32>
    %255 = arith.addf %254, %253 : vector<2x128xf32>
    %256 = arith.divf %254, %255 : vector<2x128xf32>
    %257 = vector.extract_strided_slice %250 {offsets = [0, 128], sizes = [2, 128], strides = [1, 1]} : vector<2x512xf32> to vector<2x128xf32>
    %258 = arith.negf %257 : vector<2x128xf32>
    %259 = math.exp %258 : vector<2x128xf32>
    %cst_70 = arith.constant 1.000000e+00 : f32
    %260 = vector.broadcast %cst_70 : f32 to vector<2x128xf32>
    %261 = arith.addf %260, %259 : vector<2x128xf32>
    %262 = arith.divf %260, %261 : vector<2x128xf32>
    %263 = vector.extract_strided_slice %250 {offsets = [0, 256], sizes = [2, 128], strides = [1, 1]} : vector<2x512xf32> to vector<2x128xf32>
    %264 = math.tanh %263 : vector<2x128xf32>
    %265 = vector.extract_strided_slice %250 {offsets = [0, 384], sizes = [2, 128], strides = [1, 1]} : vector<2x512xf32> to vector<2x128xf32>
    %266 = arith.negf %265 : vector<2x128xf32>
    %267 = math.exp %266 : vector<2x128xf32>
    %cst_71 = arith.constant 1.000000e+00 : f32
    %268 = vector.broadcast %cst_71 : f32 to vector<2x128xf32>
    %269 = arith.addf %268, %267 : vector<2x128xf32>
    %270 = arith.divf %268, %269 : vector<2x128xf32>
    %271 = arith.mulf %262, %217 : vector<2x128xf32>
    %272 = arith.mulf %256, %264 : vector<2x128xf32>
    %273 = arith.addf %271, %272 : vector<2x128xf32>
    %274 = math.tanh %273 : vector<2x128xf32>
    %275 = arith.mulf %270, %274 : vector<2x128xf32>
    %c0_72 = arith.constant 0 : index
    %c0_73 = arith.constant 0 : index
    %276 = vector.load %arg4[%c0_72, %c0_73] : memref<128x640xf32, #tpu.memory_space<vmem>>, vector<128x640xf32>
    %cst_74 = arith.constant dense<0.000000e+00> : vector<2x640xf32>
    %277 = tpu.matmul %275, %276, %cst_74 {dimension_numbers = #tpu.dot_dimension_numbers<[1], [0], [0], [1], [0, 0, 1, 1], [], []>} : vector<2x128xf32>, vector<128x640xf32>, vector<2x640xf32> -> vector<2x640xf32>
    %278 = vector.extract_strided_slice %277 {offsets = [0, 0], sizes = [2, 512], strides = [1, 1]} : vector<2x640xf32> to vector<2x512xf32>
    %279 = vector.extract_strided_slice %277 {offsets = [0, 512], sizes = [2, 128], strides = [1, 1]} : vector<2x640xf32> to vector<2x128xf32>
    %280 = vector.broadcast %11 : vector<1x128xf32> to vector<2x128xf32>
    %281 = arith.addf %279, %280 : vector<2x128xf32>
    %cst_75 = arith.constant dense<0xFF800000> : vector<2xf32>
    %282 = vector.multi_reduction <maximumf>, %281, %cst_75 [1] : vector<2x128xf32> to vector<2xf32>
    %283 = vector.shape_cast %282 : vector<2xf32> to vector<2x1xf32>
    %284 = vector.broadcast %283 : vector<2x1xf32> to vector<2x128xf32>
    %285 = arith.cmpf oeq, %281, %284 : vector<2x128xf32>
    %c128_i32_76 = arith.constant 128 : i32
    %286 = vector.broadcast %c128_i32_76 : i32 to vector<2x128xi32>
    %287 = arith.select %285, %18, %286 : vector<2x128xi1>, vector<2x128xi32>
    %cst_77 = arith.constant dense<2147483647> : vector<2xi32>
    %288 = vector.multi_reduction <minsi>, %287, %cst_77 [1] : vector<2x128xi32> to vector<2xi32>
    %289 = vector.shape_cast %288 : vector<2xi32> to vector<2x1xi32>
    %c4_i32 = arith.constant 4 : i32
    %290 = vector.broadcast %c4_i32 : i32 to vector<2x8xi32>
    %291 = arith.cmpi eq, %19, %290 : vector<2x8xi32>
    %292 = vector.shape_cast %289 : vector<2x1xi32> to vector<2x1xi32>
    %293 = vector.broadcast %292 : vector<2x1xi32> to vector<2x8xi32>
    %294 = arith.select %291, %293, %238 : vector<2x8xi1>, vector<2x8xi32>
    %c1_i32_78 = arith.constant 1 : i32
    %295 = vector.broadcast %c1_i32_78 : i32 to vector<2x1xi32>
    %296 = arith.cmpi eq, %289, %295 : vector<2x1xi32>
    %297 = arith.ori %243, %296 : vector<2x1xi1>
    %298 = arith.select %297, %242, %289 : vector<2x1xi1>, vector<2x1xi32>
    %299 = arith.ori %243, %296 : vector<2x1xi1>
    %300 = vector.broadcast %298 : vector<2x1xi32> to vector<2x128xi32>
    %301 = arith.cmpi eq, %18, %300 : vector<2x128xi32>
    %302 = arith.extui %301 : vector<2x128xi1> to vector<2x128xi32>
    %303 = arith.sitofp %302 : vector<2x128xi32> to vector<2x128xf32>
    %c0_79 = arith.constant 0 : index
    %c0_80 = arith.constant 0 : index
    %304 = vector.load %arg3[%c0_79, %c0_80] : memref<128x512xf32, #tpu.memory_space<vmem>>, vector<128x512xf32>
    %cst_81 = arith.constant dense<0.000000e+00> : vector<2x512xf32>
    %305 = tpu.matmul %303, %304, %cst_81 {dimension_numbers = #tpu.dot_dimension_numbers<[1], [0], [0], [1], [0, 0, 1, 1], [], []>} : vector<2x128xf32>, vector<128x512xf32>, vector<2x512xf32> -> vector<2x512xf32>
    %306 = arith.addf %305, %278 : vector<2x512xf32>
    %307 = vector.extract_strided_slice %306 {offsets = [0, 0], sizes = [2, 128], strides = [1, 1]} : vector<2x512xf32> to vector<2x128xf32>
    %308 = arith.negf %307 : vector<2x128xf32>
    %309 = math.exp %308 : vector<2x128xf32>
    %cst_82 = arith.constant 1.000000e+00 : f32
    %310 = vector.broadcast %cst_82 : f32 to vector<2x128xf32>
    %311 = arith.addf %310, %309 : vector<2x128xf32>
    %312 = arith.divf %310, %311 : vector<2x128xf32>
    %313 = vector.extract_strided_slice %306 {offsets = [0, 128], sizes = [2, 128], strides = [1, 1]} : vector<2x512xf32> to vector<2x128xf32>
    %314 = arith.negf %313 : vector<2x128xf32>
    %315 = math.exp %314 : vector<2x128xf32>
    %cst_83 = arith.constant 1.000000e+00 : f32
    %316 = vector.broadcast %cst_83 : f32 to vector<2x128xf32>
    %317 = arith.addf %316, %315 : vector<2x128xf32>
    %318 = arith.divf %316, %317 : vector<2x128xf32>
    %319 = vector.extract_strided_slice %306 {offsets = [0, 256], sizes = [2, 128], strides = [1, 1]} : vector<2x512xf32> to vector<2x128xf32>
    %320 = math.tanh %319 : vector<2x128xf32>
    %321 = vector.extract_strided_slice %306 {offsets = [0, 384], sizes = [2, 128], strides = [1, 1]} : vector<2x512xf32> to vector<2x128xf32>
    %322 = arith.negf %321 : vector<2x128xf32>
    %323 = math.exp %322 : vector<2x128xf32>
    %cst_84 = arith.constant 1.000000e+00 : f32
    %324 = vector.broadcast %cst_84 : f32 to vector<2x128xf32>
    %325 = arith.addf %324, %323 : vector<2x128xf32>
    %326 = arith.divf %324, %325 : vector<2x128xf32>
    %327 = arith.mulf %318, %273 : vector<2x128xf32>
    %328 = arith.mulf %312, %320 : vector<2x128xf32>
    %329 = arith.addf %327, %328 : vector<2x128xf32>
    %330 = math.tanh %329 : vector<2x128xf32>
    %331 = arith.mulf %326, %330 : vector<2x128xf32>
    %c0_85 = arith.constant 0 : index
    %c0_86 = arith.constant 0 : index
    %332 = vector.load %arg4[%c0_85, %c0_86] : memref<128x640xf32, #tpu.memory_space<vmem>>, vector<128x640xf32>
    %cst_87 = arith.constant dense<0.000000e+00> : vector<2x640xf32>
    %333 = tpu.matmul %331, %332, %cst_87 {dimension_numbers = #tpu.dot_dimension_numbers<[1], [0], [0], [1], [0, 0, 1, 1], [], []>} : vector<2x128xf32>, vector<128x640xf32>, vector<2x640xf32> -> vector<2x640xf32>
    %334 = vector.extract_strided_slice %333 {offsets = [0, 0], sizes = [2, 512], strides = [1, 1]} : vector<2x640xf32> to vector<2x512xf32>
    %335 = vector.extract_strided_slice %333 {offsets = [0, 512], sizes = [2, 128], strides = [1, 1]} : vector<2x640xf32> to vector<2x128xf32>
    %336 = vector.broadcast %11 : vector<1x128xf32> to vector<2x128xf32>
    %337 = arith.addf %335, %336 : vector<2x128xf32>
    %cst_88 = arith.constant dense<0xFF800000> : vector<2xf32>
    %338 = vector.multi_reduction <maximumf>, %337, %cst_88 [1] : vector<2x128xf32> to vector<2xf32>
    %339 = vector.shape_cast %338 : vector<2xf32> to vector<2x1xf32>
    %340 = vector.broadcast %339 : vector<2x1xf32> to vector<2x128xf32>
    %341 = arith.cmpf oeq, %337, %340 : vector<2x128xf32>
    %c128_i32_89 = arith.constant 128 : i32
    %342 = vector.broadcast %c128_i32_89 : i32 to vector<2x128xi32>
    %343 = arith.select %341, %18, %342 : vector<2x128xi1>, vector<2x128xi32>
    %cst_90 = arith.constant dense<2147483647> : vector<2xi32>
    %344 = vector.multi_reduction <minsi>, %343, %cst_90 [1] : vector<2x128xi32> to vector<2xi32>
    %345 = vector.shape_cast %344 : vector<2xi32> to vector<2x1xi32>
    %c5_i32 = arith.constant 5 : i32
    %346 = vector.broadcast %c5_i32 : i32 to vector<2x8xi32>
    %347 = arith.cmpi eq, %19, %346 : vector<2x8xi32>
    %348 = vector.shape_cast %345 : vector<2x1xi32> to vector<2x1xi32>
    %349 = vector.broadcast %348 : vector<2x1xi32> to vector<2x8xi32>
    %350 = arith.select %347, %349, %294 : vector<2x8xi1>, vector<2x8xi32>
    %c1_i32_91 = arith.constant 1 : i32
    %351 = vector.broadcast %c1_i32_91 : i32 to vector<2x1xi32>
    %352 = arith.cmpi eq, %345, %351 : vector<2x1xi32>
    %353 = arith.ori %299, %352 : vector<2x1xi1>
    %354 = arith.select %353, %298, %345 : vector<2x1xi1>, vector<2x1xi32>
    %355 = arith.ori %299, %352 : vector<2x1xi1>
    %356 = vector.broadcast %354 : vector<2x1xi32> to vector<2x128xi32>
    %357 = arith.cmpi eq, %18, %356 : vector<2x128xi32>
    %358 = arith.extui %357 : vector<2x128xi1> to vector<2x128xi32>
    %359 = arith.sitofp %358 : vector<2x128xi32> to vector<2x128xf32>
    %c0_92 = arith.constant 0 : index
    %c0_93 = arith.constant 0 : index
    %360 = vector.load %arg3[%c0_92, %c0_93] : memref<128x512xf32, #tpu.memory_space<vmem>>, vector<128x512xf32>
    %cst_94 = arith.constant dense<0.000000e+00> : vector<2x512xf32>
    %361 = tpu.matmul %359, %360, %cst_94 {dimension_numbers = #tpu.dot_dimension_numbers<[1], [0], [0], [1], [0, 0, 1, 1], [], []>} : vector<2x128xf32>, vector<128x512xf32>, vector<2x512xf32> -> vector<2x512xf32>
    %362 = arith.addf %361, %334 : vector<2x512xf32>
    %363 = vector.extract_strided_slice %362 {offsets = [0, 0], sizes = [2, 128], strides = [1, 1]} : vector<2x512xf32> to vector<2x128xf32>
    %364 = arith.negf %363 : vector<2x128xf32>
    %365 = math.exp %364 : vector<2x128xf32>
    %cst_95 = arith.constant 1.000000e+00 : f32
    %366 = vector.broadcast %cst_95 : f32 to vector<2x128xf32>
    %367 = arith.addf %366, %365 : vector<2x128xf32>
    %368 = arith.divf %366, %367 : vector<2x128xf32>
    %369 = vector.extract_strided_slice %362 {offsets = [0, 128], sizes = [2, 128], strides = [1, 1]} : vector<2x512xf32> to vector<2x128xf32>
    %370 = arith.negf %369 : vector<2x128xf32>
    %371 = math.exp %370 : vector<2x128xf32>
    %cst_96 = arith.constant 1.000000e+00 : f32
    %372 = vector.broadcast %cst_96 : f32 to vector<2x128xf32>
    %373 = arith.addf %372, %371 : vector<2x128xf32>
    %374 = arith.divf %372, %373 : vector<2x128xf32>
    %375 = vector.extract_strided_slice %362 {offsets = [0, 256], sizes = [2, 128], strides = [1, 1]} : vector<2x512xf32> to vector<2x128xf32>
    %376 = math.tanh %375 : vector<2x128xf32>
    %377 = vector.extract_strided_slice %362 {offsets = [0, 384], sizes = [2, 128], strides = [1, 1]} : vector<2x512xf32> to vector<2x128xf32>
    %378 = arith.negf %377 : vector<2x128xf32>
    %379 = math.exp %378 : vector<2x128xf32>
    %cst_97 = arith.constant 1.000000e+00 : f32
    %380 = vector.broadcast %cst_97 : f32 to vector<2x128xf32>
    %381 = arith.addf %380, %379 : vector<2x128xf32>
    %382 = arith.divf %380, %381 : vector<2x128xf32>
    %383 = arith.mulf %374, %329 : vector<2x128xf32>
    %384 = arith.mulf %368, %376 : vector<2x128xf32>
    %385 = arith.addf %383, %384 : vector<2x128xf32>
    %386 = math.tanh %385 : vector<2x128xf32>
    %387 = arith.mulf %382, %386 : vector<2x128xf32>
    %c0_98 = arith.constant 0 : index
    %c0_99 = arith.constant 0 : index
    %388 = vector.load %arg4[%c0_98, %c0_99] : memref<128x640xf32, #tpu.memory_space<vmem>>, vector<128x640xf32>
    %cst_100 = arith.constant dense<0.000000e+00> : vector<2x640xf32>
    %389 = tpu.matmul %387, %388, %cst_100 {dimension_numbers = #tpu.dot_dimension_numbers<[1], [0], [0], [1], [0, 0, 1, 1], [], []>} : vector<2x128xf32>, vector<128x640xf32>, vector<2x640xf32> -> vector<2x640xf32>
    %390 = vector.extract_strided_slice %389 {offsets = [0, 0], sizes = [2, 512], strides = [1, 1]} : vector<2x640xf32> to vector<2x512xf32>
    %391 = vector.extract_strided_slice %389 {offsets = [0, 512], sizes = [2, 128], strides = [1, 1]} : vector<2x640xf32> to vector<2x128xf32>
    %392 = vector.broadcast %11 : vector<1x128xf32> to vector<2x128xf32>
    %393 = arith.addf %391, %392 : vector<2x128xf32>
    %cst_101 = arith.constant dense<0xFF800000> : vector<2xf32>
    %394 = vector.multi_reduction <maximumf>, %393, %cst_101 [1] : vector<2x128xf32> to vector<2xf32>
    %395 = vector.shape_cast %394 : vector<2xf32> to vector<2x1xf32>
    %396 = vector.broadcast %395 : vector<2x1xf32> to vector<2x128xf32>
    %397 = arith.cmpf oeq, %393, %396 : vector<2x128xf32>
    %c128_i32_102 = arith.constant 128 : i32
    %398 = vector.broadcast %c128_i32_102 : i32 to vector<2x128xi32>
    %399 = arith.select %397, %18, %398 : vector<2x128xi1>, vector<2x128xi32>
    %cst_103 = arith.constant dense<2147483647> : vector<2xi32>
    %400 = vector.multi_reduction <minsi>, %399, %cst_103 [1] : vector<2x128xi32> to vector<2xi32>
    %401 = vector.shape_cast %400 : vector<2xi32> to vector<2x1xi32>
    %c6_i32 = arith.constant 6 : i32
    %402 = vector.broadcast %c6_i32 : i32 to vector<2x8xi32>
    %403 = arith.cmpi eq, %19, %402 : vector<2x8xi32>
    %404 = vector.shape_cast %401 : vector<2x1xi32> to vector<2x1xi32>
    %405 = vector.broadcast %404 : vector<2x1xi32> to vector<2x8xi32>
    %406 = arith.select %403, %405, %350 : vector<2x8xi1>, vector<2x8xi32>
    %c1_i32_104 = arith.constant 1 : i32
    %407 = vector.broadcast %c1_i32_104 : i32 to vector<2x1xi32>
    %408 = arith.cmpi eq, %401, %407 : vector<2x1xi32>
    %409 = arith.ori %355, %408 : vector<2x1xi1>
    %410 = arith.select %409, %354, %401 : vector<2x1xi1>, vector<2x1xi32>
    %411 = vector.broadcast %410 : vector<2x1xi32> to vector<2x128xi32>
    %412 = arith.cmpi eq, %18, %411 : vector<2x128xi32>
    %413 = arith.extui %412 : vector<2x128xi1> to vector<2x128xi32>
    %414 = arith.sitofp %413 : vector<2x128xi32> to vector<2x128xf32>
    %c0_105 = arith.constant 0 : index
    %c0_106 = arith.constant 0 : index
    %415 = vector.load %arg3[%c0_105, %c0_106] : memref<128x512xf32, #tpu.memory_space<vmem>>, vector<128x512xf32>
    %cst_107 = arith.constant dense<0.000000e+00> : vector<2x512xf32>
    %416 = tpu.matmul %414, %415, %cst_107 {dimension_numbers = #tpu.dot_dimension_numbers<[1], [0], [0], [1], [0, 0, 1, 1], [], []>} : vector<2x128xf32>, vector<128x512xf32>, vector<2x512xf32> -> vector<2x512xf32>
    %417 = arith.addf %416, %390 : vector<2x512xf32>
    %418 = vector.extract_strided_slice %417 {offsets = [0, 0], sizes = [2, 128], strides = [1, 1]} : vector<2x512xf32> to vector<2x128xf32>
    %419 = arith.negf %418 : vector<2x128xf32>
    %420 = math.exp %419 : vector<2x128xf32>
    %cst_108 = arith.constant 1.000000e+00 : f32
    %421 = vector.broadcast %cst_108 : f32 to vector<2x128xf32>
    %422 = arith.addf %421, %420 : vector<2x128xf32>
    %423 = arith.divf %421, %422 : vector<2x128xf32>
    %424 = vector.extract_strided_slice %417 {offsets = [0, 128], sizes = [2, 128], strides = [1, 1]} : vector<2x512xf32> to vector<2x128xf32>
    %425 = arith.negf %424 : vector<2x128xf32>
    %426 = math.exp %425 : vector<2x128xf32>
    %cst_109 = arith.constant 1.000000e+00 : f32
    %427 = vector.broadcast %cst_109 : f32 to vector<2x128xf32>
    %428 = arith.addf %427, %426 : vector<2x128xf32>
    %429 = arith.divf %427, %428 : vector<2x128xf32>
    %430 = vector.extract_strided_slice %417 {offsets = [0, 256], sizes = [2, 128], strides = [1, 1]} : vector<2x512xf32> to vector<2x128xf32>
    %431 = math.tanh %430 : vector<2x128xf32>
    %432 = vector.extract_strided_slice %417 {offsets = [0, 384], sizes = [2, 128], strides = [1, 1]} : vector<2x512xf32> to vector<2x128xf32>
    %433 = arith.negf %432 : vector<2x128xf32>
    %434 = math.exp %433 : vector<2x128xf32>
    %cst_110 = arith.constant 1.000000e+00 : f32
    %435 = vector.broadcast %cst_110 : f32 to vector<2x128xf32>
    %436 = arith.addf %435, %434 : vector<2x128xf32>
    %437 = arith.divf %435, %436 : vector<2x128xf32>
    %438 = arith.mulf %429, %385 : vector<2x128xf32>
    %439 = arith.mulf %423, %431 : vector<2x128xf32>
    %440 = arith.addf %438, %439 : vector<2x128xf32>
    %441 = math.tanh %440 : vector<2x128xf32>
    %442 = arith.mulf %437, %441 : vector<2x128xf32>
    %c0_111 = arith.constant 0 : index
    %c0_112 = arith.constant 0 : index
    %443 = vector.load %arg4[%c0_111, %c0_112] : memref<128x640xf32, #tpu.memory_space<vmem>>, vector<128x640xf32>
    %cst_113 = arith.constant dense<0.000000e+00> : vector<2x640xf32>
    %444 = tpu.matmul %442, %443, %cst_113 {dimension_numbers = #tpu.dot_dimension_numbers<[1], [0], [0], [1], [0, 0, 1, 1], [], []>} : vector<2x128xf32>, vector<128x640xf32>, vector<2x640xf32> -> vector<2x640xf32>
    %445 = vector.extract_strided_slice %444 {offsets = [0, 512], sizes = [2, 128], strides = [1, 1]} : vector<2x640xf32> to vector<2x128xf32>
    %446 = vector.broadcast %11 : vector<1x128xf32> to vector<2x128xf32>
    %447 = arith.addf %445, %446 : vector<2x128xf32>
    %cst_114 = arith.constant dense<0xFF800000> : vector<2xf32>
    %448 = vector.multi_reduction <maximumf>, %447, %cst_114 [1] : vector<2x128xf32> to vector<2xf32>
    %449 = vector.shape_cast %448 : vector<2xf32> to vector<2x1xf32>
    %450 = vector.broadcast %449 : vector<2x1xf32> to vector<2x128xf32>
    %451 = arith.cmpf oeq, %447, %450 : vector<2x128xf32>
    %c128_i32_115 = arith.constant 128 : i32
    %452 = vector.broadcast %c128_i32_115 : i32 to vector<2x128xi32>
    %453 = arith.select %451, %18, %452 : vector<2x128xi1>, vector<2x128xi32>
    %cst_116 = arith.constant dense<2147483647> : vector<2xi32>
    %454 = vector.multi_reduction <minsi>, %453, %cst_116 [1] : vector<2x128xi32> to vector<2xi32>
    %455 = vector.shape_cast %454 : vector<2xi32> to vector<2x1xi32>
    %c7_i32 = arith.constant 7 : i32
    %456 = vector.broadcast %c7_i32 : i32 to vector<2x8xi32>
    %457 = arith.cmpi eq, %19, %456 : vector<2x8xi32>
    %458 = vector.shape_cast %455 : vector<2x1xi32> to vector<2x1xi32>
    %459 = vector.broadcast %458 : vector<2x1xi32> to vector<2x8xi32>
    %460 = arith.select %457, %459, %406 : vector<2x8xi1>, vector<2x8xi32>
    %c0_117 = arith.constant 0 : index
    %c0_118 = arith.constant 0 : index
    %461 = vector.load %arg6[%c0_117, %c0_118] : memref<2x8xi32, #tpu.memory_space<vmem>>, vector<2x8xi32>
    tpu.vector_store %arg6[%c0_117, %c0_118], %460 {strides = array<i32>} : memref<2x8xi32, #tpu.memory_space<vmem>>, vector<2x8xi32>,
    %c0_119 = arith.constant 0 : index
    %c0_120 = arith.constant 0 : index
    %462 = vector.load %arg7[%c0_119, %c0_120] : memref<2x128xf32, #tpu.memory_space<vmem>>, vector<2x128xf32>
    tpu.vector_store %arg7[%c0_119, %c0_120], %442 {strides = array<i32>} : memref<2x128xf32, #tpu.memory_space<vmem>>, vector<2x128xf32>,
    %c0_121 = arith.constant 0 : index
    %c0_122 = arith.constant 0 : index
    %463 = vector.load %arg8[%c0_121, %c0_122] : memref<2x128xf32, #tpu.memory_space<vmem>>, vector<2x128xf32>
    tpu.vector_store %arg8[%c0_121, %c0_122], %440 {strides = array<i32>} : memref<2x128xf32, #tpu.memory_space<vmem>>, vector<2x128xf32>,
    return
  }
}

</mosaic_0001>

<llo_original>
// kernel: tpu_custom_call.1
$region0: #{tpu_custom_call.1}
  #allocation0 [shape = 'u32[]', space=smem, size = 0x4, offset = 0x4, fixed_abs, tag = 'smem constant byte address 0x4 - core index']
  #allocation1 [shape = 'u32[72,128]{1,0:T(1,128)}', space=vmem, size = 0x9000, scoped, tag = 'internal scratch']
  %s0 = inlined_call_operand.hbm [shape: f32[2,4,128], index: 0, kind: input, shape index: {}]
  %s1 = inlined_call_operand.hbm [shape: f32[128,256], index: 1, kind: input, shape index: {}]
  %s2 = inlined_call_operand.hbm [shape: f32[1,256], index: 2, kind: input, shape index: {}]
  %s3 = inlined_call_operand.hbm [shape: f32[128,512], index: 3, kind: input, shape index: {}]
  %s4 = inlined_call_operand.hbm [shape: f32[128,640], index: 4, kind: input, shape index: {}]
  %s5 = inlined_call_operand.vmem [shape: f32[1,128], index: 5, kind: input, shape index: {}]
  %s6 = inlined_call_operand.hbm [shape: s32[2,8], index: 6, kind: output, shape index: {0}]
  %s7 = inlined_call_operand.hbm [shape: f32[2,128], index: 7, kind: output, shape index: {1}]
  %s8 = inlined_call_operand.hbm [shape: f32[2,128], index: 8, kind: output, shape index: {2}]
  %9 = xla_tuple %s6, %s7, %s8
  %s10 = sld [smem:[#allocation0]]
  $region70: #{tpu_custom_call.1} parent=0
    _
  %s12 = ssub.s32 1, %s10
  %s13 = scalar_select 0, %s12, %s10
  $region1: #{tpu_custom_call.1} parent=0
    #allocation2 [shape = 'u8[4096]{0}', space=vmem, size = 0x1000, scoped, tag = 'input window, operand 0, single buffered']
    #allocation3 [shape = 's32[1]{0}', space=sflag, size = 0x4, scoped, tag = 'scoped memory for tpu_custom_call.1']
    #allocation4 [shape = 's32[1]{0}', space=sflag, size = 0x4, scoped, tag = 'scoped memory for tpu_custom_call.1']
    #allocation5 [shape = 'u8[131072]{0}', space=vmem, size = 0x20000, scoped, tag = 'input window, operand 1, single buffered']
    #allocation6 [shape = 's32[1]{0}', space=sflag, size = 0x4, scoped, tag = 'scoped memory for tpu_custom_call.1']
    #allocation7 [shape = 'u8[1024]{0}', space=vmem, size = 0x400, scoped, tag = 'input window, operand 2, single buffered']
    #allocation8 [shape = 'u8[262144]{0}', space=vmem, size = 0x40000, scoped, tag = 'input window, operand 3, single buffered']
    #allocation9 [shape = 's32[1]{0}', space=sflag, size = 0x4, scoped, tag = 'scoped memory for tpu_custom_call.1']
    #allocation10 [shape = 'u8[327680]{0}', space=vmem, size = 0x50000, scoped, tag = 'input window, operand 4, single buffered']
    #allocation11 [shape = 'u8[1024]{0}', space=vmem, size = 0x400, scoped, tag = 'output window, operand 0, single buffered']
    #allocation12 [shape = 'u8[1024]{0}', space=vmem, size = 0x400, scoped, tag = 'output window, operand 1, single buffered']
    #allocation13 [shape = 's32[1]{0}', space=sflag, size = 0x4, scoped, tag = 'scoped memory for tpu_custom_call.1']
    #allocation14 [shape = 'u8[1024]{0}', space=vmem, size = 0x400, scoped, tag = 'output window, operand 2, single buffered']
    %14 = vsyncpa [#allocation3], 0
    %15 = vsyncpa [#allocation6], 0
    %16 = vsyncpa [#allocation9], 0
    %17 = vsyncpa [#allocation4], 0
    %18 = vsyncpa [#allocation13], 0
    // Predicated region
    $region2: #{tpu_custom_call.1} parent=1 // pred_check
      _
    $region3: #{tpu_custom_call.1} parent=1 // pred_check_branch
      %20 = sbr.rel (0) target = $region5
    $region4: #{tpu_custom_call.1} parent=1 // pred_region
      %22 = vsyncadd [#allocation3], 0
      %s23 = sshll.u32 %s0, 4
      %s24 = int_to_ptr.hbm [resolvable:$true] %s23
      %s25 = sshll.u32 [#allocation2], 4
      %s26 = int_to_ptr.vmem [resolvable:$true] %s25
      %31 = dma.hbm_to_vmem [thread:$0]  %s24, 128, %s26, [#allocation3], 64, 64, 4
    $region5: #{tpu_custom_call.1} parent=1 // pred_fallthru
      _
    // Predicated region
    $region6: #{tpu_custom_call.1} parent=1 // pred_check
      _
    $region7: #{tpu_custom_call.1} parent=1 // pred_check_branch
      %33 = sbr.rel (0) target = $region9
    $region8: #{tpu_custom_call.1} parent=1 // pred_region
      %35 = vsyncadd [#allocation6], 0
      %s36 = sshll.u32 %s1, 4
      %s37 = int_to_ptr.hbm [resolvable:$true] %s36
      %s38 = sshll.u32 [#allocation5], 4
      %s39 = int_to_ptr.vmem [resolvable:$true] %s38
      %44 = dma.hbm_to_vmem [thread:$0]  %s37, 4096, %s39, [#allocation6], 256, 256, 16
    $region9: #{tpu_custom_call.1} parent=1 // pred_fallthru
      _
    // Predicated region
    $region10: #{tpu_custom_call.1} parent=1 // pred_check
      _
    $region11: #{tpu_custom_call.1} parent=1 // pred_check_branch
      %46 = sbr.rel (0) target = $region13
    $region12: #{tpu_custom_call.1} parent=1 // pred_region
      %48 = vsyncadd [#allocation6], 0
      %s50 = sshll.u32 %s2, 4
      %s51 = int_to_ptr.hbm [resolvable:$true] %s50
      %s52 = sshll.u32 [#allocation7], 4
      %s53 = int_to_ptr.vmem [resolvable:$true] %s52
      %55 = dma.hbm_to_vmem [thread:$0]  %s51, 32, %s53, [#allocation6]
    $region13: #{tpu_custom_call.1} parent=1 // pred_fallthru
      _
    // Predicated region
    $region14: #{tpu_custom_call.1} parent=1 // pred_check
      _
    $region15: #{tpu_custom_call.1} parent=1 // pred_check_branch
      %57 = sbr.rel (0) target = $region17
    $region16: #{tpu_custom_call.1} parent=1 // pred_region
      %59 = vsyncadd [#allocation9], 0
      %s60 = sshll.u32 %s3, 4
      %s61 = int_to_ptr.hbm [resolvable:$true] %s60
      %s62 = sshll.u32 [#allocation8], 4
      %s63 = int_to_ptr.vmem [resolvable:$true] %s62
      %68 = dma.hbm_to_vmem [thread:$0]  %s61, 8192, %s63, [#allocation9], 512, 512, 32
    $region17: #{tpu_custom_call.1} parent=1 // pred_fallthru
      _
    // Predicated region
    $region18: #{tpu_custom_call.1} parent=1 // pred_check
      _
    $region19: #{tpu_custom_call.1} parent=1 // pred_check_branch
      %70 = sbr.rel (0) target = $region21
    $region20: #{tpu_custom_call.1} parent=1 // pred_region
      %72 = vsyncadd [#allocation9], 0
      %s73 = sshll.u32 %s4, 4
      %s74 = int_to_ptr.hbm [resolvable:$true] %s73
      %s75 = sshll.u32 [#allocation10], 4
      %s76 = int_to_ptr.vmem [resolvable:$true] %s75
      %81 = dma.hbm_to_vmem [thread:$0]  %s74, 10240, %s76, [#allocation9], 640, 640, 40
    $region21: #{tpu_custom_call.1} parent=1 // pred_fallthru
      _
    // Predicated region
    $region22: #{tpu_custom_call.1} parent=1 // pred_check
      _
    $region23: #{tpu_custom_call.1} parent=1 // pred_check_branch
      %83 = sbr.rel (0) target = $region25
    $region24: #{tpu_custom_call.1} parent=1 // pred_region
      _
    $region25: #{tpu_custom_call.1} parent=1 // pred_fallthru
      _
    // Predicated region
    $region26: #{tpu_custom_call.1} parent=1 // pred_check
      _
    $region27: #{tpu_custom_call.1} parent=1 // pred_check_branch
      %85 = sbr.rel (0) target = $region29
    $region28: #{tpu_custom_call.1} parent=1 // pred_region
      %87 = dma.done [#allocation3], 128
    $region29: #{tpu_custom_call.1} parent=1 // pred_fallthru
      _
    // Predicated region
    $region30: #{tpu_custom_call.1} parent=1 // pred_check
      _
    $region31: #{tpu_custom_call.1} parent=1 // pred_check_branch
      %89 = sbr.rel (0) target = $region33
    $region32: #{tpu_custom_call.1} parent=1 // pred_region
      %91 = dma.done [#allocation6], 4096
    $region33: #{tpu_custom_call.1} parent=1 // pred_fallthru
      _
    // Predicated region
    $region34: #{tpu_custom_call.1} parent=1 // pred_check
      _
    $region35: #{tpu_custom_call.1} parent=1 // pred_check_branch
      %93 = sbr.rel (0) target = $region37
    $region36: #{tpu_custom_call.1} parent=1 // pred_region
      %95 = dma.done [#allocation6], 32
    $region37: #{tpu_custom_call.1} parent=1 // pred_fallthru
      _
    // Predicated region
    $region38: #{tpu_custom_call.1} parent=1 // pred_check
      _
    $region39: #{tpu_custom_call.1} parent=1 // pred_check_branch
      %97 = sbr.rel (0) target = $region41
    $region40: #{tpu_custom_call.1} parent=1 // pred_region
      %99 = dma.done [#allocation9], 8192
    $region41: #{tpu_custom_call.1} parent=1 // pred_fallthru
      _
    // Predicated region
    $region42: #{tpu_custom_call.1} parent=1 // pred_check
      _
    $region43: #{tpu_custom_call.1} parent=1 // pred_check_branch
      %101 = sbr.rel (0) target = $region45
    $region44: #{tpu_custom_call.1} parent=1 // pred_region
      %103 = dma.done [#allocation9], 10240
    $region45: #{tpu_custom_call.1} parent=1 // pred_fallthru
      _
    %v104 = vld [vmem:[#allocation2] sm:$0xf]
    %v105 = vld [vmem:[#allocation2 + $0x4] sm:$0xf]
    %vm106 = vcmask 1043456
    %v107 = vsel %vm106, %v104, 0.0
    %v108 = vrot.slane %v107, 4
    %v109 = vadd.f32 %v107, %v108
    %v110 = vrot.slane %v109, 2
    %v111 = vadd.f32 %v109, %v110
    %v112 = vrot.slane %v111, 1
    %v113 = vadd.f32 %v111, %v112
    %v114 = vsel %vm106, %v105, 0.0
    %v115 = vrot.slane %v114, 4
    %v116 = vadd.f32 %v114, %v115
    %v117 = vrot.slane %v116, 2
    %v118 = vadd.f32 %v116, %v117
    %v119 = vrot.slane %v118, 1
    %v120 = vadd.f32 %v118, %v119
    %v121 = vrcp.pop 4.0
    %v122 = vmul.f32 4.0, %v121
    %v123 = vsub.f32 1.0, %v122
    %v124 = vmul.f32 %v121, %v123
    %v125 = vadd.f32 %v121, %v124
    %vm126 = vweird.f32 %v121
    %v127 = vsel %vm126, %v121, %v125
    %v128 = vmul.f32 %v113, %v127
    %v129 = vmul.f32 %v120, %v127
    %v130 = vld [vmem:[#allocation5] sm:$0xff]
    %v131 = vld [vmem:[#allocation5 + $0x8] sm:$0xff]
    %v132 = vld [vmem:[#allocation5 + $0x10] sm:$0xff]
    %v133 = vld [vmem:[#allocation5 + $0x18] sm:$0xff]
    %v134 = vld [vmem:[#allocation5 + $0x20] sm:$0xff]
    %v135 = vld [vmem:[#allocation5 + $0x28] sm:$0xff]
    %v136 = vld [vmem:[#allocation5 + $0x30] sm:$0xff]
    %v137 = vld [vmem:[#allocation5 + $0x38] sm:$0xff]
    %v138 = vld [vmem:[#allocation5 + $0x40] sm:$0xff]
    %v139 = vld [vmem:[#allocation5 + $0x48] sm:$0xff]
    %v140 = vld [vmem:[#allocation5 + $0x50] sm:$0xff]
    %v141 = vld [vmem:[#allocation5 + $0x58] sm:$0xff]
    %v142 = vld [vmem:[#allocation5 + $0x60] sm:$0xff]
    %v143 = vld [vmem:[#allocation5 + $0x68] sm:$0xff]
    %v144 = vld [vmem:[#allocation5 + $0x70] sm:$0xff]
    %v145 = vld [vmem:[#allocation5 + $0x78] sm:$0xff]
    %v146 = vld [vmem:[#allocation5 + $0x80] sm:$0xff]
    %v147 = vld [vmem:[#allocation5 + $0x88] sm:$0xff]
    %v148 = vld [vmem:[#allocation5 + $0x90] sm:$0xff]
    %v149 = vld [vmem:[#allocation5 + $0x98] sm:$0xff]
    %v150 = vld [vmem:[#allocation5 + $0xa0] sm:$0xff]
    %v151 = vld [vmem:[#allocation5 + $0xa8] sm:$0xff]
    %v152 = vld [vmem:[#allocation5 + $0xb0] sm:$0xff]
    %v153 = vld [vmem:[#allocation5 + $0xb8] sm:$0xff]
    %v154 = vld [vmem:[#allocation5 + $0xc0] sm:$0xff]
    %v155 = vld [vmem:[#allocation5 + $0xc8] sm:$0xff]
    %v156 = vld [vmem:[#allocation5 + $0xd0] sm:$0xff]
    %v157 = vld [vmem:[#allocation5 + $0xd8] sm:$0xff]
    %v158 = vld [vmem:[#allocation5 + $0xe0] sm:$0xff]
    %v159 = vld [vmem:[#allocation5 + $0xe8] sm:$0xff]
    %v160 = vld [vmem:[#allocation5 + $0xf0] sm:$0xff]
    %v161 = vld [vmem:[#allocation5 + $0xf8] sm:$0xff]
    %v162 = vld [vmem:[#allocation7] sm:$0x3]
    %v164 = vperm.slane %v162, 0
    %v165 = vperm.slane %v162, 1
    %vm170 = vcmask 1041409
    %v171 = vsel %vm170, %v129, %v128
    %173 = vmatpush.msra.mxu0 %v160
    %174 = vmatpush.msra.mxu0 %v158
    %175 = vmatpush.msra.mxu0 %v156
    %176 = vmatpush.msra.mxu0 %v154
    %177 = vmatpush.msra.mxu0 %v152
    %178 = vmatpush.msra.mxu0 %v150
    %179 = vmatpush.msra.mxu0 %v148
    %180 = vmatpush.msra.mxu0 %v146
    %181 = vmatpush.msra.mxu0 %v144
    %182 = vmatpush.msra.mxu0 %v142
    %183 = vmatpush.msra.mxu0 %v140
    %184 = vmatpush.msra.mxu0 %v138
    %185 = vmatpush.msra.mxu0 %v136
    %186 = vmatpush.msra.mxu0 %v134
    %187 = vmatpush.msra.mxu0 %v132
    %188 = vmatpush.msra.mxu0 %v130
    %189 = vmatmul.f32.gmra.mxu0 %v171
    %v190 = vpop.f32.mrf.mxu0
    %v191 = vadd.f32 %v164, %v190
    %192 = vdwg.mxu0
    %193 = vmatpush.msra.mxu0 %v161
    %194 = vmatpush.msra.mxu0 %v159
    %195 = vmatpush.msra.mxu0 %v157
    %196 = vmatpush.msra.mxu0 %v155
    %197 = vmatpush.msra.mxu0 %v153
    %198 = vmatpush.msra.mxu0 %v151
    %199 = vmatpush.msra.mxu0 %v149
    %200 = vmatpush.msra.mxu0 %v147
    %201 = vmatpush.msra.mxu0 %v145
    %202 = vmatpush.msra.mxu0 %v143
    %203 = vmatpush.msra.mxu0 %v141
    %204 = vmatpush.msra.mxu0 %v139
    %205 = vmatpush.msra.mxu0 %v137
    %206 = vmatpush.msra.mxu0 %v135
    %207 = vmatpush.msra.mxu0 %v133
    %208 = vmatpush.msra.mxu0 %v131
    %209 = vmatmul.f32.gmra.mxu0 %v171
    %v210 = vpop.f32.mrf.mxu0
    %v211 = vadd.f32 %v165, %v210
    %212 = vdwg.mxu0
    %v213 = vld [vmem:[%s5] sm:$0x1]
    %v214 = vld [vmem:[#allocation10] sm:$0xff]
    %v215 = vld [vmem:[#allocation10 + $0x8] sm:$0xff]
    %v216 = vld [vmem:[#allocation10 + $0x10] sm:$0xff]
    %v217 = vld [vmem:[#allocation10 + $0x18] sm:$0xff]
    %v218 = vld [vmem:[#allocation10 + $0x20] sm:$0xff]
    %v219 = vld [vmem:[#allocation10 + $0x28] sm:$0xff]
    %v220 = vld [vmem:[#allocation10 + $0x30] sm:$0xff]
    %v221 = vld [vmem:[#allocation10 + $0x38] sm:$0xff]
    %v222 = vld [vmem:[#allocation10 + $0x40] sm:$0xff]
    %v223 = vld [vmem:[#allocation10 + $0x48] sm:$0xff]
    %v224 = vld [vmem:[#allocation10 + $0x50] sm:$0xff]
    %v225 = vld [vmem:[#allocation10 + $0x58] sm:$0xff]
    %v226 = vld [vmem:[#allocation10 + $0x60] sm:$0xff]
    %v227 = vld [vmem:[#allocation10 + $0x68] sm:$0xff]
    %v228 = vld [vmem:[#allocation10 + $0x70] sm:$0xff]
    %v229 = vld [vmem:[#allocation10 + $0x78] sm:$0xff]
    %v230 = vld [vmem:[#allocation10 + $0x80] sm:$0xff]
    %v231 = vld [vmem:[#allocation10 + $0x88] sm:$0xff]
    %v232 = vld [vmem:[#allocation10 + $0x90] sm:$0xff]
    %v233 = vld [vmem:[#allocation10 + $0x98] sm:$0xff]
    %v234 = vld [vmem:[#allocation10 + $0xa0] sm:$0xff]
    %v235 = vld [vmem:[#allocation10 + $0xa8] sm:$0xff]
    %v236 = vld [vmem:[#allocation10 + $0xb0] sm:$0xff]
    %v237 = vld [vmem:[#allocation10 + $0xb8] sm:$0xff]
    %v238 = vld [vmem:[#allocation10 + $0xc0] sm:$0xff]
    %v239 = vld [vmem:[#allocation10 + $0xc8] sm:$0xff]
    %v240 = vld [vmem:[#allocation10 + $0xd0] sm:$0xff]
    %v241 = vld [vmem:[#allocation10 + $0xd8] sm:$0xff]
    %v242 = vld [vmem:[#allocation10 + $0xe0] sm:$0xff]
    %v243 = vld [vmem:[#allocation10 + $0xe8] sm:$0xff]
    %v244 = vld [vmem:[#allocation10 + $0xf0] sm:$0xff]
    %v245 = vld [vmem:[#allocation10 + $0xf8] sm:$0xff]
    %v246 = vld [vmem:[#allocation10 + $0x100] sm:$0xff]
    %v247 = vld [vmem:[#allocation10 + $0x108] sm:$0xff]
    %v248 = vld [vmem:[#allocation10 + $0x110] sm:$0xff]
    %v249 = vld [vmem:[#allocation10 + $0x118] sm:$0xff]
    %v250 = vld [vmem:[#allocation10 + $0x120] sm:$0xff]
    %v251 = vld [vmem:[#allocation10 + $0x128] sm:$0xff]
    %v252 = vld [vmem:[#allocation10 + $0x130] sm:$0xff]
    %v253 = vld [vmem:[#allocation10 + $0x138] sm:$0xff]
    %v254 = vld [vmem:[#allocation10 + $0x140] sm:$0xff]
    %v255 = vld [vmem:[#allocation10 + $0x148] sm:$0xff]
    %v256 = vld [vmem:[#allocation10 + $0x150] sm:$0xff]
    %v257 = vld [vmem:[#allocation10 + $0x158] sm:$0xff]
    %v258 = vld [vmem:[#allocation10 + $0x160] sm:$0xff]
    %v259 = vld [vmem:[#allocation10 + $0x168] sm:$0xff]
    %v260 = vld [vmem:[#allocation10 + $0x170] sm:$0xff]
    %v261 = vld [vmem:[#allocation10 + $0x178] sm:$0xff]
    %v262 = vld [vmem:[#allocation10 + $0x180] sm:$0xff]
    %v263 = vld [vmem:[#allocation10 + $0x188] sm:$0xff]
    %v264 = vld [vmem:[#allocation10 + $0x190] sm:$0xff]
    %v265 = vld [vmem:[#allocation10 + $0x198] sm:$0xff]
    %v266 = vld [vmem:[#allocation10 + $0x1a0] sm:$0xff]
    %v267 = vld [vmem:[#allocation10 + $0x1a8] sm:$0xff]
    %v268 = vld [vmem:[#allocation10 + $0x1b0] sm:$0xff]
    %v269 = vld [vmem:[#allocation10 + $0x1b8] sm:$0xff]
    %v270 = vld [vmem:[#allocation10 + $0x1c0] sm:$0xff]
    %v271 = vld [vmem:[#allocation10 + $0x1c8] sm:$0xff]
    %v272 = vld [vmem:[#allocation10 + $0x1d0] sm:$0xff]
    %v273 = vld [vmem:[#allocation10 + $0x1d8] sm:$0xff]
    %v274 = vld [vmem:[#allocation10 + $0x1e0] sm:$0xff]
    %v275 = vld [vmem:[#allocation10 + $0x1e8] sm:$0xff]
    %v276 = vld [vmem:[#allocation10 + $0x1f0] sm:$0xff]
    %v277 = vld [vmem:[#allocation10 + $0x1f8] sm:$0xff]
    %v278 = vld [vmem:[#allocation10 + $0x200] sm:$0xff]
    %v279 = vld [vmem:[#allocation10 + $0x208] sm:$0xff]
    %v280 = vld [vmem:[#allocation10 + $0x210] sm:$0xff]
    %v281 = vld [vmem:[#allocation10 + $0x218] sm:$0xff]
    %v282 = vld [vmem:[#allocation10 + $0x220] sm:$0xff]
    %v283 = vld [vmem:[#allocation10 + $0x228] sm:$0xff]
    %v284 = vld [vmem:[#allocation10 + $0x230] sm:$0xff]
    %v285 = vld [vmem:[#allocation10 + $0x238] sm:$0xff]
    %v286 = vld [vmem:[#allocation10 + $0x240] sm:$0xff]
    %v287 = vld [vmem:[#allocation10 + $0x248] sm:$0xff]
    %v288 = vld [vmem:[#allocation10 + $0x250] sm:$0xff]
    %v289 = vld [vmem:[#allocation10 + $0x258] sm:$0xff]
    %v290 = vld [vmem:[#allocation10 + $0x260] sm:$0xff]
    %v291 = vld [vmem:[#allocation10 + $0x268] sm:$0xff]
    %v292 = vld [vmem:[#allocation10 + $0x270] sm:$0xff]
    %v293 = vld [vmem:[#allocation10 + $0x278] sm:$0xff]
    %294 = vmatpush.msra.mxu0 %v289
    %295 = vmatpush.msra.mxu0 %v284
    %296 = vmatpush.msra.mxu0 %v279
    %297 = vmatpush.msra.mxu0 %v274
    %298 = vmatpush.msra.mxu0 %v269
    %299 = vmatpush.msra.mxu0 %v264
    %300 = vmatpush.msra.mxu0 %v259
    %301 = vmatpush.msra.mxu0 %v254
    %302 = vmatpush.msra.mxu0 %v249
    %303 = vmatpush.msra.mxu0 %v244
    %304 = vmatpush.msra.mxu0 %v239
    %305 = vmatpush.msra.mxu0 %v234
    %306 = vmatpush.msra.mxu0 %v229
    %307 = vmatpush.msra.mxu0 %v224
    %308 = vmatpush.msra.mxu0 %v219
    %309 = vmatpush.msra.mxu0 %v214
    %310 = vmatmul.f32.gmra.mxu0 %v191
    %v311 = vpop.f32.mrf.mxu0
    %v312 = vadd.f32 0.0, %v311
    %313 = vdwg.mxu0
    %314 = vmatpush.msra.mxu0 %v290
    %315 = vmatpush.msra.mxu0 %v285
    %316 = vmatpush.msra.mxu0 %v280
    %317 = vmatpush.msra.mxu0 %v275
    %318 = vmatpush.msra.mxu0 %v270
    %319 = vmatpush.msra.mxu0 %v265
    %320 = vmatpush.msra.mxu0 %v260
    %321 = vmatpush.msra.mxu0 %v255
    %322 = vmatpush.msra.mxu0 %v250
    %323 = vmatpush.msra.mxu0 %v245
    %324 = vmatpush.msra.mxu0 %v240
    %325 = vmatpush.msra.mxu0 %v235
    %326 = vmatpush.msra.mxu0 %v230
    %327 = vmatpush.msra.mxu0 %v225
    %328 = vmatpush.msra.mxu0 %v220
    %329 = vmatpush.msra.mxu0 %v215
    %330 = vmatmul.f32.gmra.mxu0 %v191
    %v331 = vpop.f32.mrf.mxu0
    %v332 = vadd.f32 0.0, %v331
    %333 = vdwg.mxu0
    %334 = vmatpush.msra.mxu0 %v291
    %335 = vmatpush.msra.mxu0 %v286
    %336 = vmatpush.msra.mxu0 %v281
    %337 = vmatpush.msra.mxu0 %v276
    %338 = vmatpush.msra.mxu0 %v271
    %339 = vmatpush.msra.mxu0 %v266
    %340 = vmatpush.msra.mxu0 %v261
    %341 = vmatpush.msra.mxu0 %v256
    %342 = vmatpush.msra.mxu0 %v251
    %343 = vmatpush.msra.mxu0 %v246
    %344 = vmatpush.msra.mxu0 %v241
    %345 = vmatpush.msra.mxu0 %v236
    %346 = vmatpush.msra.mxu0 %v231
    %347 = vmatpush.msra.mxu0 %v226
    %348 = vmatpush.msra.mxu0 %v221
    %349 = vmatpush.msra.mxu0 %v216
    %350 = vmatmul.f32.gmra.mxu0 %v191
    %v351 = vpop.f32.mrf.mxu0
    %v352 = vadd.f32 0.0, %v351
    %353 = vdwg.mxu0
    %354 = vmatpush.msra.mxu0 %v292
    %355 = vmatpush.msra.mxu0 %v287
    %356 = vmatpush.msra.mxu0 %v282
    %357 = vmatpush.msra.mxu0 %v277
    %358 = vmatpush.msra.mxu0 %v272
    %359 = vmatpush.msra.mxu0 %v267
    %360 = vmatpush.msra.mxu0 %v262
    %361 = vmatpush.msra.mxu0 %v257
    %362 = vmatpush.msra.mxu0 %v252
    %363 = vmatpush.msra.mxu0 %v247
    %364 = vmatpush.msra.mxu0 %v242
    %365 = vmatpush.msra.mxu0 %v237
    %366 = vmatpush.msra.mxu0 %v232
    %367 = vmatpush.msra.mxu0 %v227
    %368 = vmatpush.msra.mxu0 %v222
    %369 = vmatpush.msra.mxu0 %v217
    %370 = vmatmul.f32.gmra.mxu0 %v191
    %v371 = vpop.f32.mrf.mxu0
    %v372 = vadd.f32 0.0, %v371
    %373 = vdwg.mxu0
    %v374 = vlaneseq
    %v375 = vand.u32 %v374, 127
    %vm376 = vcmp.eq.s32.totalorder %v375, 0
    %v377 = vsel %vm376, 1, 0
    %v378 = vcvt.s32.f32 %v377
    %v379 = vld [vmem:[#allocation8] sm:$0xff]
    %v380 = vld [vmem:[#allocation8 + $0x8] sm:$0xff]
    %v381 = vld [vmem:[#allocation8 + $0x10] sm:$0xff]
    %v382 = vld [vmem:[#allocation8 + $0x18] sm:$0xff]
    %v383 = vld [vmem:[#allocation8 + $0x20] sm:$0xff]
    %v384 = vld [vmem:[#allocation8 + $0x28] sm:$0xff]
    %v385 = vld [vmem:[#allocation8 + $0x30] sm:$0xff]
    %v386 = vld [vmem:[#allocation8 + $0x38] sm:$0xff]
    %v387 = vld [vmem:[#allocation8 + $0x40] sm:$0xff]
    %v388 = vld [vmem:[#allocation8 + $0x48] sm:$0xff]
    %v389 = vld [vmem:[#allocation8 + $0x50] sm:$0xff]
    %v390 = vld [vmem:[#allocation8 + $0x58] sm:$0xff]
    %v391 = vld [vmem:[#allocation8 + $0x60] sm:$0xff]
    %v392 = vld [vmem:[#allocation8 + $0x68] sm:$0xff]
    %v393 = vld [vmem:[#allocation8 + $0x70] sm:$0xff]
    %v394 = vld [vmem:[#allocation8 + $0x78] sm:$0xff]
    %v395 = vld [vmem:[#allocation8 + $0x80] sm:$0xff]
    %v396 = vld [vmem:[#allocation8 + $0x88] sm:$0xff]
    %v397 = vld [vmem:[#allocation8 + $0x90] sm:$0xff]
    %v398 = vld [vmem:[#allocation8 + $0x98] sm:$0xff]
    %v399 = vld [vmem:[#allocation8 + $0xa0] sm:$0xff]
    %v400 = vld [vmem:[#allocation8 + $0xa8] sm:$0xff]
    %v401 = vld [vmem:[#allocation8 + $0xb0] sm:$0xff]
    %v402 = vld [vmem:[#allocation8 + $0xb8] sm:$0xff]
    %v403 = vld [vmem:[#allocation8 + $0xc0] sm:$0xff]
    %v404 = vld [vmem:[#allocation8 + $0xc8] sm:$0xff]
    %v405 = vld [vmem:[#allocation8 + $0xd0] sm:$0xff]
    %v406 = vld [vmem:[#allocation8 + $0xd8] sm:$0xff]
    %v407 = vld [vmem:[#allocation8 + $0xe0] sm:$0xff]
    %v408 = vld [vmem:[#allocation8 + $0xe8] sm:$0xff]
    %v409 = vld [vmem:[#allocation8 + $0xf0] sm:$0xff]
    %v410 = vld [vmem:[#allocation8 + $0xf8] sm:$0xff]
    %v411 = vld [vmem:[#allocation8 + $0x100] sm:$0xff]
    %v412 = vld [vmem:[#allocation8 + $0x108] sm:$0xff]
    %v413 = vld [vmem:[#allocation8 + $0x110] sm:$0xff]
    %v414 = vld [vmem:[#allocation8 + $0x118] sm:$0xff]
    %v415 = vld [vmem:[#allocation8 + $0x120] sm:$0xff]
    %v416 = vld [vmem:[#allocation8 + $0x128] sm:$0xff]
    %v417 = vld [vmem:[#allocation8 + $0x130] sm:$0xff]
    %v418 = vld [vmem:[#allocation8 + $0x138] sm:$0xff]
    %v419 = vld [vmem:[#allocation8 + $0x140] sm:$0xff]
    %v420 = vld [vmem:[#allocation8 + $0x148] sm:$0xff]
    %v421 = vld [vmem:[#allocation8 + $0x150] sm:$0xff]
    %v422 = vld [vmem:[#allocation8 + $0x158] sm:$0xff]
    %v423 = vld [vmem:[#allocation8 + $0x160] sm:$0xff]
    %v424 = vld [vmem:[#allocation8 + $0x168] sm:$0xff]
    %v425 = vld [vmem:[#allocation8 + $0x170] sm:$0xff]
    %v426 = vld [vmem:[#allocation8 + $0x178] sm:$0xff]
    %v427 = vld [vmem:[#allocation8 + $0x180] sm:$0xff]
    %v428 = vld [vmem:[#allocation8 + $0x188] sm:$0xff]
    %v429 = vld [vmem:[#allocation8 + $0x190] sm:$0xff]
    %v430 = vld [vmem:[#allocation8 + $0x198] sm:$0xff]
    %v431 = vld [vmem:[#allocation8 + $0x1a0] sm:$0xff]
    %v432 = vld [vmem:[#allocation8 + $0x1a8] sm:$0xff]
    %v433 = vld [vmem:[#allocation8 + $0x1b0] sm:$0xff]
    %v434 = vld [vmem:[#allocation8 + $0x1b8] sm:$0xff]
    %v435 = vld [vmem:[#allocation8 + $0x1c0] sm:$0xff]
    %v436 = vld [vmem:[#allocation8 + $0x1c8] sm:$0xff]
    %v437 = vld [vmem:[#allocation8 + $0x1d0] sm:$0xff]
    %v438 = vld [vmem:[#allocation8 + $0x1d8] sm:$0xff]
    %v439 = vld [vmem:[#allocation8 + $0x1e0] sm:$0xff]
    %v440 = vld [vmem:[#allocation8 + $0x1e8] sm:$0xff]
    %v441 = vld [vmem:[#allocation8 + $0x1f0] sm:$0xff]
    %v442 = vld [vmem:[#allocation8 + $0x1f8] sm:$0xff]
    %443 = vmatpush.msra.mxu0 %v439
    %444 = vmatpush.msra.mxu0 %v435
    %445 = vmatpush.msra.mxu0 %v431
    %446 = vmatpush.msra.mxu0 %v427
    %447 = vmatpush.msra.mxu0 %v423
    %448 = vmatpush.msra.mxu0 %v419
    %449 = vmatpush.msra.mxu0 %v415
    %450 = vmatpush.msra.mxu0 %v411
    %451 = vmatpush.msra.mxu0 %v407
    %452 = vmatpush.msra.mxu0 %v403
    %453 = vmatpush.msra.mxu0 %v399
    %454 = vmatpush.msra.mxu0 %v395
    %455 = vmatpush.msra.mxu0 %v391
    %456 = vmatpush.msra.mxu0 %v387
    %457 = vmatpush.msra.mxu0 %v383
    %458 = vmatpush.msra.mxu0 %v379
    %459 = vmatmul.f32.gmra.mxu0 %v378
    %v460 = vpop.f32.mrf.mxu0
    %v461 = vadd.f32 %v312, %v460
    %462 = vdwg.mxu0
    %463 = vmatpush.msra.mxu0 %v440
    %464 = vmatpush.msra.mxu0 %v436
    %465 = vmatpush.msra.mxu0 %v432
    %466 = vmatpush.msra.mxu0 %v428
    %467 = vmatpush.msra.mxu0 %v424
    %468 = vmatpush.msra.mxu0 %v420
    %469 = vmatpush.msra.mxu0 %v416
    %470 = vmatpush.msra.mxu0 %v412
    %471 = vmatpush.msra.mxu0 %v408
    %472 = vmatpush.msra.mxu0 %v404
    %473 = vmatpush.msra.mxu0 %v400
    %474 = vmatpush.msra.mxu0 %v396
    %475 = vmatpush.msra.mxu0 %v392
    %476 = vmatpush.msra.mxu0 %v388
    %477 = vmatpush.msra.mxu0 %v384
    %478 = vmatpush.msra.mxu0 %v380
    %479 = vmatmul.f32.gmra.mxu0 %v378
    %v480 = vpop.f32.mrf.mxu0
    %v481 = vadd.f32 %v332, %v480
    %482 = vdwg.mxu0
    %483 = vmatpush.msra.mxu0 %v441
    %484 = vmatpush.msra.mxu0 %v437
    %485 = vmatpush.msra.mxu0 %v433
    %486 = vmatpush.msra.mxu0 %v429
    %487 = vmatpush.msra.mxu0 %v425
    %488 = vmatpush.msra.mxu0 %v421
    %489 = vmatpush.msra.mxu0 %v417
    %490 = vmatpush.msra.mxu0 %v413
    %491 = vmatpush.msra.mxu0 %v409
    %492 = vmatpush.msra.mxu0 %v405
    %493 = vmatpush.msra.mxu0 %v401
    %494 = vmatpush.msra.mxu0 %v397
    %495 = vmatpush.msra.mxu0 %v393
    %496 = vmatpush.msra.mxu0 %v389
    %497 = vmatpush.msra.mxu0 %v385
    %498 = vmatpush.msra.mxu0 %v381
    %499 = vmatmul.f32.gmra.mxu0 %v378
    %v500 = vpop.f32.mrf.mxu0
    %v501 = vadd.f32 %v352, %v500
    %502 = vdwg.mxu0
    %503 = vmatpush.msra.mxu0 %v442
    %504 = vmatpush.msra.mxu0 %v438
    %505 = vmatpush.msra.mxu0 %v434
    %506 = vmatpush.msra.mxu0 %v430
    %507 = vmatpush.msra.mxu0 %v426
    %508 = vmatpush.msra.mxu0 %v422
    %509 = vmatpush.msra.mxu0 %v418
    %510 = vmatpush.msra.mxu0 %v414
    %511 = vmatpush.msra.mxu0 %v410
    %512 = vmatpush.msra.mxu0 %v406
    %513 = vmatpush.msra.mxu0 %v402
    %514 = vmatpush.msra.mxu0 %v398
    %515 = vmatpush.msra.mxu0 %v394
    %516 = vmatpush.msra.mxu0 %v390
    %517 = vmatpush.msra.mxu0 %v386
    %518 = vmatpush.msra.mxu0 %v382
    %519 = vmatmul.f32.gmra.mxu0 %v378
    %v520 = vpop.f32.mrf.mxu0
    %v521 = vadd.f32 %v372, %v520
    %522 = vdwg.mxu0
    %v523 = vxor.u32 %v461, 2147483648
    %v524 = vmul.f32 %v523, 1.442695
    %v525 = vpow.pop %v524
    %v526 = vadd.f32 %v525, 1.0
    %v527 = vrcp.pop %v526
    %v528 = vmul.f32 %v526, %v527
    %v529 = vsub.f32 1.0, %v528
    %v530 = vmul.f32 %v527, %v529
    %v531 = vadd.f32 %v527, %v530
    %vm532 = vweird.f32 %v526
    %vm533 = vweird.f32 %v527
    %vm534 = vmor %vm532, %vm533
    %v535 = vsel %vm534, %v527, %v531
    %v536 = vand.u32 2147483647, %v526
    %vm537 = vcmp.eq.f32.partialorder %v536, 8.507059e+37
    %v538 = vand.u32 %v526, 2147483648
    %v539 = vor.u32 1.1754944e-38, %v538
    %v540 = vsel %vm537, %v539, %v535
    %v541 = vmul.f32 1.0, %v540
    %v542 = vxor.u32 %v481, 2147483648
    %v543 = vmul.f32 %v542, 1.442695
    %v544 = vpow.pop %v543
    %v545 = vadd.f32 %v544, 1.0
    %v546 = vrcp.pop %v545
    %v547 = vmul.f32 %v545, %v546
    %v548 = vsub.f32 1.0, %v547
    %v549 = vmul.f32 %v546, %v548
    %v550 = vadd.f32 %v546, %v549
    %vm551 = vweird.f32 %v545
    %vm552 = vweird.f32 %v546
    %vm553 = vmor %vm551, %vm552
    %v554 = vsel %vm553, %v546, %v550
    %v555 = vand.u32 2147483647, %v545
    %vm556 = vcmp.eq.f32.partialorder %v555, 8.507059e+37
    %v557 = vand.u32 %v545, 2147483648
    %v558 = vor.u32 1.1754944e-38, %v557
    %v559 = vsel %vm556, %v558, %v554
    %v560 = vmul.f32 1.0, %v559
    %v561 = vtanh.pop %v501
    %v562 = vxor.u32 %v521, 2147483648
    %v563 = vmul.f32 %v562, 1.442695
    %v564 = vpow.pop %v563
    %v565 = vadd.f32 %v564, 1.0
    %v566 = vrcp.pop %v565
    %v567 = vmul.f32 %v565, %v566
    %v568 = vsub.f32 1.0, %v567
    %v569 = vmul.f32 %v566, %v568
    %v570 = vadd.f32 %v566, %v569
    %vm571 = vweird.f32 %v565
    %vm572 = vweird.f32 %v566
    %vm573 = vmor %vm571, %vm572
    %v574 = vsel %vm573, %v566, %v570
    %v575 = vand.u32 2147483647, %v565
    %vm576 = vcmp.eq.f32.partialorder %v575, 8.507059e+37
    %v577 = vand.u32 %v565, 2147483648
    %v578 = vor.u32 1.1754944e-38, %v577
    %v579 = vsel %vm576, %v578, %v574
    %v580 = vmul.f32 1.0, %v579
    %v581 = vmul.f32 %v560, %v211
    %v582 = vmul.f32 %v541, %v561
    %v583 = vadd.f32 %v581, %v582
    %v584 = vtanh.pop %v583
    %v585 = vmul.f32 %v580, %v584
    %586 = vmatpush.msra.mxu0 %v289
    %587 = vmatpush.msra.mxu0 %v284
    %588 = vmatpush.msra.mxu0 %v279
    %589 = vmatpush.msra.mxu0 %v274
    %590 = vmatpush.msra.mxu0 %v269
    %591 = vmatpush.msra.mxu0 %v264
    %592 = vmatpush.msra.mxu0 %v259
    %593 = vmatpush.msra.mxu0 %v254
    %594 = vmatpush.msra.mxu0 %v249
    %595 = vmatpush.msra.mxu0 %v244
    %596 = vmatpush.msra.mxu0 %v239
    %597 = vmatpush.msra.mxu0 %v234
    %598 = vmatpush.msra.mxu0 %v229
    %599 = vmatpush.msra.mxu0 %v224
    %600 = vmatpush.msra.mxu0 %v219
    %601 = vmatpush.msra.mxu0 %v214
    %602 = vmatmul.f32.gmra.mxu0 %v585
    %v603 = vpop.f32.mrf.mxu0
    %v604 = vadd.f32 0.0, %v603
    %605 = vdwg.mxu0
    %606 = vmatpush.msra.mxu0 %v290
    %607 = vmatpush.msra.mxu0 %v285
    %608 = vmatpush.msra.mxu0 %v280
    %609 = vmatpush.msra.mxu0 %v275
    %610 = vmatpush.msra.mxu0 %v270
    %611 = vmatpush.msra.mxu0 %v265
    %612 = vmatpush.msra.mxu0 %v260
    %613 = vmatpush.msra.mxu0 %v255
    %614 = vmatpush.msra.mxu0 %v250
    %615 = vmatpush.msra.mxu0 %v245
    %616 = vmatpush.msra.mxu0 %v240
    %617 = vmatpush.msra.mxu0 %v235
    %618 = vmatpush.msra.mxu0 %v230
    %619 = vmatpush.msra.mxu0 %v225
    %620 = vmatpush.msra.mxu0 %v220
    %621 = vmatpush.msra.mxu0 %v215
    %622 = vmatmul.f32.gmra.mxu0 %v585
    %v623 = vpop.f32.mrf.mxu0
    %v624 = vadd.f32 0.0, %v623
    %625 = vdwg.mxu0
    %626 = vmatpush.msra.mxu0 %v291
    %627 = vmatpush.msra.mxu0 %v286
    %628 = vmatpush.msra.mxu0 %v281
    %629 = vmatpush.msra.mxu0 %v276
    %630 = vmatpush.msra.mxu0 %v271
    %631 = vmatpush.msra.mxu0 %v266
    %632 = vmatpush.msra.mxu0 %v261
    %633 = vmatpush.msra.mxu0 %v256
    %634 = vmatpush.msra.mxu0 %v251
    %635 = vmatpush.msra.mxu0 %v246
    %636 = vmatpush.msra.mxu0 %v241
    %637 = vmatpush.msra.mxu0 %v236
    %638 = vmatpush.msra.mxu0 %v231
    %639 = vmatpush.msra.mxu0 %v226
    %640 = vmatpush.msra.mxu0 %v221
    %641 = vmatpush.msra.mxu0 %v216
    %642 = vmatmul.f32.gmra.mxu0 %v585
    %v643 = vpop.f32.mrf.mxu0
    %v644 = vadd.f32 0.0, %v643
    %645 = vdwg.mxu0
    %646 = vmatpush.msra.mxu0 %v292
    %647 = vmatpush.msra.mxu0 %v287
    %648 = vmatpush.msra.mxu0 %v282
    %649 = vmatpush.msra.mxu0 %v277
    %650 = vmatpush.msra.mxu0 %v272
    %651 = vmatpush.msra.mxu0 %v267
    %652 = vmatpush.msra.mxu0 %v262
    %653 = vmatpush.msra.mxu0 %v257
    %654 = vmatpush.msra.mxu0 %v252
    %655 = vmatpush.msra.mxu0 %v247
    %656 = vmatpush.msra.mxu0 %v242
    %657 = vmatpush.msra.mxu0 %v237
    %658 = vmatpush.msra.mxu0 %v232
    %659 = vmatpush.msra.mxu0 %v227
    %660 = vmatpush.msra.mxu0 %v222
    %661 = vmatpush.msra.mxu0 %v217
    %662 = vmatmul.f32.gmra.mxu0 %v585
    %v663 = vpop.f32.mrf.mxu0
    %v664 = vadd.f32 0.0, %v663
    %665 = vdwg.mxu0
    %666 = vmatpush.msra.mxu0 %v293
    %667 = vmatpush.msra.mxu0 %v288
    %668 = vmatpush.msra.mxu0 %v283
    %669 = vmatpush.msra.mxu0 %v278
    %670 = vmatpush.msra.mxu0 %v273
    %671 = vmatpush.msra.mxu0 %v268
    %672 = vmatpush.msra.mxu0 %v263
    %673 = vmatpush.msra.mxu0 %v258
    %674 = vmatpush.msra.mxu0 %v253
    %675 = vmatpush.msra.mxu0 %v248
    %676 = vmatpush.msra.mxu0 %v243
    %677 = vmatpush.msra.mxu0 %v238
    %678 = vmatpush.msra.mxu0 %v233
    %679 = vmatpush.msra.mxu0 %v228
    %680 = vmatpush.msra.mxu0 %v223
    %681 = vmatpush.msra.mxu0 %v218
    %682 = vmatmul.f32.gmra.mxu0 %v585
    %v683 = vpop.f32.mrf.mxu0
    %v684 = vadd.f32 0.0, %v683
    %685 = vdwg.mxu0
    %v687 = vperm.slane %v213, 0
    %v689 = vadd.f32 %v684, %v687
    %vm690 = vcmask 1041408
    %v691 = vsel %vm690, %v689, -inf
    %692 = vmax.xlane.f32.xlu0 %v691
    %v693 = vpop.xlane.xlu0 %692
    %vm694 = vcmp.eq.f32.partialorder %v689, %v693
    %v695 = vsel %vm694, %v375, 128
    %v696 = vsel %vm690, %v695, 2147483647
    %v697 = vand.u32 %v696, 65535
    %v698 = vshra.s32 %v696, 16
    %v699 = vcvt.s32.f32 %v697
    %v700 = vcvt.s32.f32 %v698
    %701 = vmin.xlane.f32.xlu0 %v700
    %v702 = vpop.xlane.xlu0 %701
    %vm703 = vcmp.eq.f32.partialorder %v700, %v702
    %v704 = vsel %vm703, %v699, inf
    %705 = vmin.xlane.f32.xlu0 %v704
    %v706 = vpop.xlane.xlu0 %705
    %v707 = vcvt.f32.s32 %v706
    %v708 = vcvt.f32.s32 %v702
    %v709 = vshll.u32 %v708, 16
    %v710 = vadd.s32 %v709, %v707
    %v711 = vsel %vm376, %v710, 0
    %vm712 = vcmp.eq.s32.totalorder %v710, 1
    %v713 = vsel %vm712, 0, %v710
    %vm714 = vcmp.eq.s32.totalorder %v375, %v713
    %v715 = vsel %vm714, 1, 0
    %v716 = vcvt.s32.f32 %v715
    %717 = vmatpush.msra.mxu0 %v439
    %718 = vmatpush.msra.mxu0 %v435
    %719 = vmatpush.msra.mxu0 %v431
    %720 = vmatpush.msra.mxu0 %v427
    %721 = vmatpush.msra.mxu0 %v423
    %722 = vmatpush.msra.mxu0 %v419
    %723 = vmatpush.msra.mxu0 %v415
    %724 = vmatpush.msra.mxu0 %v411
    %725 = vmatpush.msra.mxu0 %v407
    %726 = vmatpush.msra.mxu0 %v403
    %727 = vmatpush.msra.mxu0 %v399
    %728 = vmatpush.msra.mxu0 %v395
    %729 = vmatpush.msra.mxu0 %v391
    %730 = vmatpush.msra.mxu0 %v387
    %731 = vmatpush.msra.mxu0 %v383
    %732 = vmatpush.msra.mxu0 %v379
    %733 = vmatmul.f32.gmra.mxu0 %v716
    %v734 = vpop.f32.mrf.mxu0
    %v735 = vadd.f32 %v604, %v734
    %736 = vdwg.mxu0
    %737 = vmatpush.msra.mxu0 %v440
    %738 = vmatpush.msra.mxu0 %v436
    %739 = vmatpush.msra.mxu0 %v432
    %740 = vmatpush.msra.mxu0 %v428
    %741 = vmatpush.msra.mxu0 %v424
    %742 = vmatpush.msra.mxu0 %v420
    %743 = vmatpush.msra.mxu0 %v416
    %744 = vmatpush.msra.mxu0 %v412
    %745 = vmatpush.msra.mxu0 %v408
    %746 = vmatpush.msra.mxu0 %v404
    %747 = vmatpush.msra.mxu0 %v400
    %748 = vmatpush.msra.mxu0 %v396
    %749 = vmatpush.msra.mxu0 %v392
    %750 = vmatpush.msra.mxu0 %v388
    %751 = vmatpush.msra.mxu0 %v384
    %752 = vmatpush.msra.mxu0 %v380
    %753 = vmatmul.f32.gmra.mxu0 %v716
    %v754 = vpop.f32.mrf.mxu0
    %v755 = vadd.f32 %v624, %v754
    %756 = vdwg.mxu0
    %757 = vmatpush.msra.mxu0 %v441
    %758 = vmatpush.msra.mxu0 %v437
    %759 = vmatpush.msra.mxu0 %v433
    %760 = vmatpush.msra.mxu0 %v429
    %761 = vmatpush.msra.mxu0 %v425
    %762 = vmatpush.msra.mxu0 %v421
    %763 = vmatpush.msra.mxu0 %v417
    %764 = vmatpush.msra.mxu0 %v413
    %765 = vmatpush.msra.mxu0 %v409
    %766 = vmatpush.msra.mxu0 %v405
    %767 = vmatpush.msra.mxu0 %v401
    %768 = vmatpush.msra.mxu0 %v397
    %769 = vmatpush.msra.mxu0 %v393
    %770 = vmatpush.msra.mxu0 %v389
    %771 = vmatpush.msra.mxu0 %v385
    %772 = vmatpush.msra.mxu0 %v381
    %773 = vmatmul.f32.gmra.mxu0 %v716
    %v774 = vpop.f32.mrf.mxu0
    %v775 = vadd.f32 %v644, %v774
    %776 = vdwg.mxu0
    %777 = vmatpush.msra.mxu0 %v442
    %778 = vmatpush.msra.mxu0 %v438
    %779 = vmatpush.msra.mxu0 %v434
    %780 = vmatpush.msra.mxu0 %v430
    %781 = vmatpush.msra.mxu0 %v426
    %782 = vmatpush.msra.mxu0 %v422
    %783 = vmatpush.msra.mxu0 %v418
    %784 = vmatpush.msra.mxu0 %v414
    %785 = vmatpush.msra.mxu0 %v410
    %786 = vmatpush.msra.mxu0 %v406
    %787 = vmatpush.msra.mxu0 %v402
    %788 = vmatpush.msra.mxu0 %v398
    %789 = vmatpush.msra.mxu0 %v394
    %790 = vmatpush.msra.mxu0 %v390
    %791 = vmatpush.msra.mxu0 %v386
    %792 = vmatpush.msra.mxu0 %v382
    %793 = vmatmul.f32.gmra.mxu0 %v716
    %v794 = vpop.f32.mrf.mxu0
    %v795 = vadd.f32 %v664, %v794
    %796 = vdwg.mxu0
    %v797 = vxor.u32 %v735, 2147483648
    %v798 = vmul.f32 %v797, 1.442695
    %v799 = vpow.pop %v798
    %v800 = vadd.f32 %v799, 1.0
    %v801 = vrcp.pop %v800
    %v802 = vmul.f32 %v800, %v801
    %v803 = vsub.f32 1.0, %v802
    %v804 = vmul.f32 %v801, %v803
    %v805 = vadd.f32 %v801, %v804
    %vm806 = vweird.f32 %v800
    %vm807 = vweird.f32 %v801
    %vm808 = vmor %vm806, %vm807
    %v809 = vsel %vm808, %v801, %v805
    %v810 = vand.u32 2147483647, %v800
    %vm811 = vcmp.eq.f32.partialorder %v810, 8.507059e+37
    %v812 = vand.u32 %v800, 2147483648
    %v813 = vor.u32 1.1754944e-38, %v812
    %v814 = vsel %vm811, %v813, %v809
    %v815 = vmul.f32 1.0, %v814
    %v816 = vxor.u32 %v755, 2147483648
    %v817 = vmul.f32 %v816, 1.442695
    %v818 = vpow.pop %v817
    %v819 = vadd.f32 %v818, 1.0
    %v820 = vrcp.pop %v819
    %v821 = vmul.f32 %v819, %v820
    %v822 = vsub.f32 1.0, %v821
    %v823 = vmul.f32 %v820, %v822
    %v824 = vadd.f32 %v820, %v823
    %vm825 = vweird.f32 %v819
    %vm826 = vweird.f32 %v820
    %vm827 = vmor %vm825, %vm826
    %v828 = vsel %vm827, %v820, %v824
    %v829 = vand.u32 2147483647, %v819
    %vm830 = vcmp.eq.f32.partialorder %v829, 8.507059e+37
    %v831 = vand.u32 %v819, 2147483648
    %v832 = vor.u32 1.1754944e-38, %v831
    %v833 = vsel %vm830, %v832, %v828
    %v834 = vmul.f32 1.0, %v833
    %v835 = vtanh.pop %v775
    %v836 = vxor.u32 %v795, 2147483648
    %v837 = vmul.f32 %v836, 1.442695
    %v838 = vpow.pop %v837
    %v839 = vadd.f32 %v838, 1.0
    %v840 = vrcp.pop %v839
    %v841 = vmul.f32 %v839, %v840
    %v842 = vsub.f32 1.0, %v841
    %v843 = vmul.f32 %v840, %v842
    %v844 = vadd.f32 %v840, %v843
    %vm845 = vweird.f32 %v839
    %vm846 = vweird.f32 %v840
    %vm847 = vmor %vm845, %vm846
    %v848 = vsel %vm847, %v840, %v844
    %v849 = vand.u32 2147483647, %v839
    %vm850 = vcmp.eq.f32.partialorder %v849, 8.507059e+37
    %v851 = vand.u32 %v839, 2147483648
    %v852 = vor.u32 1.1754944e-38, %v851
    %v853 = vsel %vm850, %v852, %v848
    %v854 = vmul.f32 1.0, %v853
    %v855 = vmul.f32 %v834, %v583
    %v856 = vmul.f32 %v815, %v835
    %v857 = vadd.f32 %v855, %v856
    %v858 = vtanh.pop %v857
    %v859 = vmul.f32 %v854, %v858
    %860 = vmatpush.msra.mxu0 %v289
    %861 = vmatpush.msra.mxu0 %v284
    %862 = vmatpush.msra.mxu0 %v279
    %863 = vmatpush.msra.mxu0 %v274
    %864 = vmatpush.msra.mxu0 %v269
    %865 = vmatpush.msra.mxu0 %v264
    %866 = vmatpush.msra.mxu0 %v259
    %867 = vmatpush.msra.mxu0 %v254
    %868 = vmatpush.msra.mxu0 %v249
    %869 = vmatpush.msra.mxu0 %v244
    %870 = vmatpush.msra.mxu0 %v239
    %871 = vmatpush.msra.mxu0 %v234
    %872 = vmatpush.msra.mxu0 %v229
    %873 = vmatpush.msra.mxu0 %v224
    %874 = vmatpush.msra.mxu0 %v219
    %875 = vmatpush.msra.mxu0 %v214
    %876 = vmatmul.f32.gmra.mxu0 %v859
    %v877 = vpop.f32.mrf.mxu0
    %v878 = vadd.f32 0.0, %v877
    %879 = vdwg.mxu0
    %880 = vmatpush.msra.mxu0 %v290
    %881 = vmatpush.msra.mxu0 %v285
    %882 = vmatpush.msra.mxu0 %v280
    %883 = vmatpush.msra.mxu0 %v275
    %884 = vmatpush.msra.mxu0 %v270
    %885 = vmatpush.msra.mxu0 %v265
    %886 = vmatpush.msra.mxu0 %v260
    %887 = vmatpush.msra.mxu0 %v255
    %888 = vmatpush.msra.mxu0 %v250
    %889 = vmatpush.msra.mxu0 %v245
    %890 = vmatpush.msra.mxu0 %v240
    %891 = vmatpush.msra.mxu0 %v235
    %892 = vmatpush.msra.mxu0 %v230
    %893 = vmatpush.msra.mxu0 %v225
    %894 = vmatpush.msra.mxu0 %v220
    %895 = vmatpush.msra.mxu0 %v215
    %896 = vmatmul.f32.gmra.mxu0 %v859
    %v897 = vpop.f32.mrf.mxu0
    %v898 = vadd.f32 0.0, %v897
    %899 = vdwg.mxu0
    %900 = vmatpush.msra.mxu0 %v291
    %901 = vmatpush.msra.mxu0 %v286
    %902 = vmatpush.msra.mxu0 %v281
    %903 = vmatpush.msra.mxu0 %v276
    %904 = vmatpush.msra.mxu0 %v271
    %905 = vmatpush.msra.mxu0 %v266
    %906 = vmatpush.msra.mxu0 %v261
    %907 = vmatpush.msra.mxu0 %v256
    %908 = vmatpush.msra.mxu0 %v251
    %909 = vmatpush.msra.mxu0 %v246
    %910 = vmatpush.msra.mxu0 %v241
    %911 = vmatpush.msra.mxu0 %v236
    %912 = vmatpush.msra.mxu0 %v231
    %913 = vmatpush.msra.mxu0 %v226
    %914 = vmatpush.msra.mxu0 %v221
    %915 = vmatpush.msra.mxu0 %v216
    %916 = vmatmul.f32.gmra.mxu0 %v859
    %v917 = vpop.f32.mrf.mxu0
    %v918 = vadd.f32 0.0, %v917
    %919 = vdwg.mxu0
    %920 = vmatpush.msra.mxu0 %v292
    %921 = vmatpush.msra.mxu0 %v287
    %922 = vmatpush.msra.mxu0 %v282
    %923 = vmatpush.msra.mxu0 %v277
    %924 = vmatpush.msra.mxu0 %v272
    %925 = vmatpush.msra.mxu0 %v267
    %926 = vmatpush.msra.mxu0 %v262
    %927 = vmatpush.msra.mxu0 %v257
    %928 = vmatpush.msra.mxu0 %v252
    %929 = vmatpush.msra.mxu0 %v247
    %930 = vmatpush.msra.mxu0 %v242
    %931 = vmatpush.msra.mxu0 %v237
    %932 = vmatpush.msra.mxu0 %v232
    %933 = vmatpush.msra.mxu0 %v227
    %934 = vmatpush.msra.mxu0 %v222
    %935 = vmatpush.msra.mxu0 %v217
    %936 = vmatmul.f32.gmra.mxu0 %v859
    %v937 = vpop.f32.mrf.mxu0
    %v938 = vadd.f32 0.0, %v937
    %939 = vdwg.mxu0
    %940 = vmatpush.msra.mxu0 %v293
    %941 = vmatpush.msra.mxu0 %v288
    %942 = vmatpush.msra.mxu0 %v283
    %943 = vmatpush.msra.mxu0 %v278
    %944 = vmatpush.msra.mxu0 %v273
    %945 = vmatpush.msra.mxu0 %v268
    %946 = vmatpush.msra.mxu0 %v263
    %947 = vmatpush.msra.mxu0 %v258
    %948 = vmatpush.msra.mxu0 %v253
    %949 = vmatpush.msra.mxu0 %v248
    %950 = vmatpush.msra.mxu0 %v243
    %951 = vmatpush.msra.mxu0 %v238
    %952 = vmatpush.msra.mxu0 %v233
    %953 = vmatpush.msra.mxu0 %v228
    %954 = vmatpush.msra.mxu0 %v223
    %955 = vmatpush.msra.mxu0 %v218
    %956 = vmatmul.f32.gmra.mxu0 %v859
    %v957 = vpop.f32.mrf.mxu0
    %v958 = vadd.f32 0.0, %v957
    %959 = vdwg.mxu0
    %v960 = vadd.f32 %v958, %v687
    %v961 = vsel %vm690, %v960, -inf
    %962 = vmax.xlane.f32.xlu0 %v961
    %v963 = vpop.xlane.xlu0 %962
    %vm964 = vcmp.eq.f32.partialorder %v960, %v963
    %v965 = vsel %vm964, %v375, 128
    %v966 = vsel %vm690, %v965, 2147483647
    %v967 = vand.u32 %v966, 65535
    %v968 = vshra.s32 %v966, 16
    %v969 = vcvt.s32.f32 %v967
    %v970 = vcvt.s32.f32 %v968
    %971 = vmin.xlane.f32.xlu0 %v970
    %v972 = vpop.xlane.xlu0 %971
    %vm973 = vcmp.eq.f32.partialorder %v970, %v972
    %v974 = vsel %vm973, %v969, inf
    %975 = vmin.xlane.f32.xlu0 %v974
    %v976 = vpop.xlane.xlu0 %975
    %v977 = vcvt.f32.s32 %v976
    %v978 = vcvt.f32.s32 %v972
    %v979 = vshll.u32 %v978, 16
    %v980 = vadd.s32 %v979, %v977
    %vm981 = vcmp.eq.s32.totalorder %v375, 1
    %v982 = vsel %vm981, %v980, %v711
    %vm983 = vcmp.eq.s32.totalorder %v980, 1
    %vm984 = vmor %vm712, %vm983
    %v985 = vsel %vm984, %v713, %v980
    %vm986 = vcmp.eq.s32.totalorder %v375, %v985
    %v987 = vsel %vm986, 1, 0
    %v988 = vcvt.s32.f32 %v987
    %989 = vmatpush.msra.mxu0 %v439
    %990 = vmatpush.msra.mxu0 %v435
    %991 = vmatpush.msra.mxu0 %v431
    %992 = vmatpush.msra.mxu0 %v427
    %993 = vmatpush.msra.mxu0 %v423
    %994 = vmatpush.msra.mxu0 %v419
    %995 = vmatpush.msra.mxu0 %v415
    %996 = vmatpush.msra.mxu0 %v411
    %997 = vmatpush.msra.mxu0 %v407
    %998 = vmatpush.msra.mxu0 %v403
    %999 = vmatpush.msra.mxu0 %v399
    %1000 = vmatpush.msra.mxu0 %v395
    %1001 = vmatpush.msra.mxu0 %v391
    %1002 = vmatpush.msra.mxu0 %v387
    %1003 = vmatpush.msra.mxu0 %v383
    %1004 = vmatpush.msra.mxu0 %v379
    %1005 = vmatmul.f32.gmra.mxu0 %v988
    %v1006 = vpop.f32.mrf.mxu0
    %v1007 = vadd.f32 %v878, %v1006
    %1008 = vdwg.mxu0
    %1009 = vmatpush.msra.mxu0 %v440
    %1010 = vmatpush.msra.mxu0 %v436
    %1011 = vmatpush.msra.mxu0 %v432
    %1012 = vmatpush.msra.mxu0 %v428
    %1013 = vmatpush.msra.mxu0 %v424
    %1014 = vmatpush.msra.mxu0 %v420
    %1015 = vmatpush.msra.mxu0 %v416
    %1016 = vmatpush.msra.mxu0 %v412
    %1017 = vmatpush.msra.mxu0 %v408
    %1018 = vmatpush.msra.mxu0 %v404
    %1019 = vmatpush.msra.mxu0 %v400
    %1020 = vmatpush.msra.mxu0 %v396
    %1021 = vmatpush.msra.mxu0 %v392
    %1022 = vmatpush.msra.mxu0 %v388
    %1023 = vmatpush.msra.mxu0 %v384
    %1024 = vmatpush.msra.mxu0 %v380
    %1025 = vmatmul.f32.gmra.mxu0 %v988
    %v1026 = vpop.f32.mrf.mxu0
    %v1027 = vadd.f32 %v898, %v1026
    %1028 = vdwg.mxu0
    %1029 = vmatpush.msra.mxu0 %v441
    %1030 = vmatpush.msra.mxu0 %v437
    %1031 = vmatpush.msra.mxu0 %v433
    %1032 = vmatpush.msra.mxu0 %v429
    %1033 = vmatpush.msra.mxu0 %v425
    %1034 = vmatpush.msra.mxu0 %v421
    %1035 = vmatpush.msra.mxu0 %v417
    %1036 = vmatpush.msra.mxu0 %v413
    %1037 = vmatpush.msra.mxu0 %v409
    %1038 = vmatpush.msra.mxu0 %v405
    %1039 = vmatpush.msra.mxu0 %v401
    %1040 = vmatpush.msra.mxu0 %v397
    %1041 = vmatpush.msra.mxu0 %v393
    %1042 = vmatpush.msra.mxu0 %v389
    %1043 = vmatpush.msra.mxu0 %v385
    %1044 = vmatpush.msra.mxu0 %v381
    %1045 = vmatmul.f32.gmra.mxu0 %v988
    %v1046 = vpop.f32.mrf.mxu0
    %v1047 = vadd.f32 %v918, %v1046
    %1048 = vdwg.mxu0
    %1049 = vmatpush.msra.mxu0 %v442
    %1050 = vmatpush.msra.mxu0 %v438
    %1051 = vmatpush.msra.mxu0 %v434
    %1052 = vmatpush.msra.mxu0 %v430
    %1053 = vmatpush.msra.mxu0 %v426
    %1054 = vmatpush.msra.mxu0 %v422
    %1055 = vmatpush.msra.mxu0 %v418
    %1056 = vmatpush.msra.mxu0 %v414
    %1057 = vmatpush.msra.mxu0 %v410
    %1058 = vmatpush.msra.mxu0 %v406
    %1059 = vmatpush.msra.mxu0 %v402
    %1060 = vmatpush.msra.mxu0 %v398
    %1061 = vmatpush.msra.mxu0 %v394
    %1062 = vmatpush.msra.mxu0 %v390
    %1063 = vmatpush.msra.mxu0 %v386
    %1064 = vmatpush.msra.mxu0 %v382
    %1065 = vmatmul.f32.gmra.mxu0 %v988
    %v1066 = vpop.f32.mrf.mxu0
    %v1067 = vadd.f32 %v938, %v1066
    %1068 = vdwg.mxu0
    %v1069 = vxor.u32 %v1007, 2147483648
    %v1070 = vmul.f32 %v1069, 1.442695
    %v1071 = vpow.pop %v1070
    %v1072 = vadd.f32 %v1071, 1.0
    %v1073 = vrcp.pop %v1072
    %v1074 = vmul.f32 %v1072, %v1073
    %v1075 = vsub.f32 1.0, %v1074
    %v1076 = vmul.f32 %v1073, %v1075
    %v1077 = vadd.f32 %v1073, %v1076
    %vm1078 = vweird.f32 %v1072
    %vm1079 = vweird.f32 %v1073
    %vm1080 = vmor %vm1078, %vm1079
    %v1081 = vsel %vm1080, %v1073, %v1077
    %v1082 = vand.u32 2147483647, %v1072
    %vm1083 = vcmp.eq.f32.partialorder %v1082, 8.507059e+37
    %v1084 = vand.u32 %v1072, 2147483648
    %v1085 = vor.u32 1.1754944e-38, %v1084
    %v1086 = vsel %vm1083, %v1085, %v1081
    %v1087 = vmul.f32 1.0, %v1086
    %v1088 = vxor.u32 %v1027, 2147483648
    %v1089 = vmul.f32 %v1088, 1.442695
    %v1090 = vpow.pop %v1089
    %v1091 = vadd.f32 %v1090, 1.0
    %v1092 = vrcp.pop %v1091
    %v1093 = vmul.f32 %v1091, %v1092
    %v1094 = vsub.f32 1.0, %v1093
    %v1095 = vmul.f32 %v1092, %v1094
    %v1096 = vadd.f32 %v1092, %v1095
    %vm1097 = vweird.f32 %v1091
    %vm1098 = vweird.f32 %v1092
    %vm1099 = vmor %vm1097, %vm1098
    %v1100 = vsel %vm1099, %v1092, %v1096
    %v1101 = vand.u32 2147483647, %v1091
    %vm1102 = vcmp.eq.f32.partialorder %v1101, 8.507059e+37
    %v1103 = vand.u32 %v1091, 2147483648
    %v1104 = vor.u32 1.1754944e-38, %v1103
    %v1105 = vsel %vm1102, %v1104, %v1100
    %v1106 = vmul.f32 1.0, %v1105
    %v1107 = vtanh.pop %v1047
    %v1108 = vxor.u32 %v1067, 2147483648
    %v1109 = vmul.f32 %v1108, 1.442695
    %v1110 = vpow.pop %v1109
    %v1111 = vadd.f32 %v1110, 1.0
    %v1112 = vrcp.pop %v1111
    %v1113 = vmul.f32 %v1111, %v1112
    %v1114 = vsub.f32 1.0, %v1113
    %v1115 = vmul.f32 %v1112, %v1114
    %v1116 = vadd.f32 %v1112, %v1115
    %vm1117 = vweird.f32 %v1111
    %vm1118 = vweird.f32 %v1112
    %vm1119 = vmor %vm1117, %vm1118
    %v1120 = vsel %vm1119, %v1112, %v1116
    %v1121 = vand.u32 2147483647, %v1111
    %vm1122 = vcmp.eq.f32.partialorder %v1121, 8.507059e+37
    %v1123 = vand.u32 %v1111, 2147483648
    %v1124 = vor.u32 1.1754944e-38, %v1123
    %v1125 = vsel %vm1122, %v1124, %v1120
    %v1126 = vmul.f32 1.0, %v1125
    %v1127 = vmul.f32 %v1106, %v857
    %v1128 = vmul.f32 %v1087, %v1107
    %v1129 = vadd.f32 %v1127, %v1128
    %v1130 = vtanh.pop %v1129
    %v1131 = vmul.f32 %v1126, %v1130
    %1132 = vmatpush.msra.mxu0 %v289
    %1133 = vmatpush.msra.mxu0 %v284
    %1134 = vmatpush.msra.mxu0 %v279
    %1135 = vmatpush.msra.mxu0 %v274
    %1136 = vmatpush.msra.mxu0 %v269
    %1137 = vmatpush.msra.mxu0 %v264
    %1138 = vmatpush.msra.mxu0 %v259
    %1139 = vmatpush.msra.mxu0 %v254
    %1140 = vmatpush.msra.mxu0 %v249
    %1141 = vmatpush.msra.mxu0 %v244
    %1142 = vmatpush.msra.mxu0 %v239
    %1143 = vmatpush.msra.mxu0 %v234
    %1144 = vmatpush.msra.mxu0 %v229
    %1145 = vmatpush.msra.mxu0 %v224
    %1146 = vmatpush.msra.mxu0 %v219
    %1147 = vmatpush.msra.mxu0 %v214
    %1148 = vmatmul.f32.gmra.mxu0 %v1131
    %v1149 = vpop.f32.mrf.mxu0
    %v1150 = vadd.f32 0.0, %v1149
    %1151 = vdwg.mxu0
    %1152 = vmatpush.msra.mxu0 %v290
    %1153 = vmatpush.msra.mxu0 %v285
    %1154 = vmatpush.msra.mxu0 %v280
    %1155 = vmatpush.msra.mxu0 %v275
    %1156 = vmatpush.msra.mxu0 %v270
    %1157 = vmatpush.msra.mxu0 %v265
    %1158 = vmatpush.msra.mxu0 %v260
    %1159 = vmatpush.msra.mxu0 %v255
    %1160 = vmatpush.msra.mxu0 %v250
    %1161 = vmatpush.msra.mxu0 %v245
    %1162 = vmatpush.msra.mxu0 %v240
    %1163 = vmatpush.msra.mxu0 %v235
    %1164 = vmatpush.msra.mxu0 %v230
    %1165 = vmatpush.msra.mxu0 %v225
    %1166 = vmatpush.msra.mxu0 %v220
    %1167 = vmatpush.msra.mxu0 %v215
    %1168 = vmatmul.f32.gmra.mxu0 %v1131
    %v1169 = vpop.f32.mrf.mxu0
    %v1170 = vadd.f32 0.0, %v1169
    %1171 = vdwg.mxu0
    %1172 = vmatpush.msra.mxu0 %v291
    %1173 = vmatpush.msra.mxu0 %v286
    %1174 = vmatpush.msra.mxu0 %v281
    %1175 = vmatpush.msra.mxu0 %v276
    %1176 = vmatpush.msra.mxu0 %v271
    %1177 = vmatpush.msra.mxu0 %v266
    %1178 = vmatpush.msra.mxu0 %v261
    %1179 = vmatpush.msra.mxu0 %v256
    %1180 = vmatpush.msra.mxu0 %v251
    %1181 = vmatpush.msra.mxu0 %v246
    %1182 = vmatpush.msra.mxu0 %v241
    %1183 = vmatpush.msra.mxu0 %v236
    %1184 = vmatpush.msra.mxu0 %v231
    %1185 = vmatpush.msra.mxu0 %v226
    %1186 = vmatpush.msra.mxu0 %v221
    %1187 = vmatpush.msra.mxu0 %v216
    %1188 = vmatmul.f32.gmra.mxu0 %v1131
    %v1189 = vpop.f32.mrf.mxu0
    %v1190 = vadd.f32 0.0, %v1189
    %1191 = vdwg.mxu0
    %1192 = vmatpush.msra.mxu0 %v292
    %1193 = vmatpush.msra.mxu0 %v287
    %1194 = vmatpush.msra.mxu0 %v282
    %1195 = vmatpush.msra.mxu0 %v277
    %1196 = vmatpush.msra.mxu0 %v272
    %1197 = vmatpush.msra.mxu0 %v267
    %1198 = vmatpush.msra.mxu0 %v262
    %1199 = vmatpush.msra.mxu0 %v257
    %1200 = vmatpush.msra.mxu0 %v252
    %1201 = vmatpush.msra.mxu0 %v247
    %1202 = vmatpush.msra.mxu0 %v242
    %1203 = vmatpush.msra.mxu0 %v237
    %1204 = vmatpush.msra.mxu0 %v232
    %1205 = vmatpush.msra.mxu0 %v227
    %1206 = vmatpush.msra.mxu0 %v222
    %1207 = vmatpush.msra.mxu0 %v217
    %1208 = vmatmul.f32.gmra.mxu0 %v1131
    %v1209 = vpop.f32.mrf.mxu0
    %v1210 = vadd.f32 0.0, %v1209
    %1211 = vdwg.mxu0
    %1212 = vmatpush.msra.mxu0 %v293
    %1213 = vmatpush.msra.mxu0 %v288
    %1214 = vmatpush.msra.mxu0 %v283
    %1215 = vmatpush.msra.mxu0 %v278
    %1216 = vmatpush.msra.mxu0 %v273
    %1217 = vmatpush.msra.mxu0 %v268
    %1218 = vmatpush.msra.mxu0 %v263
    %1219 = vmatpush.msra.mxu0 %v258
    %1220 = vmatpush.msra.mxu0 %v253
    %1221 = vmatpush.msra.mxu0 %v248
    %1222 = vmatpush.msra.mxu0 %v243
    %1223 = vmatpush.msra.mxu0 %v238
    %1224 = vmatpush.msra.mxu0 %v233
    %1225 = vmatpush.msra.mxu0 %v228
    %1226 = vmatpush.msra.mxu0 %v223
    %1227 = vmatpush.msra.mxu0 %v218
    %1228 = vmatmul.f32.gmra.mxu0 %v1131
    %v1229 = vpop.f32.mrf.mxu0
    %v1230 = vadd.f32 0.0, %v1229
    %1231 = vdwg.mxu0
    %v1232 = vadd.f32 %v1230, %v687
    %v1233 = vsel %vm690, %v1232, -inf
    %1234 = vmax.xlane.f32.xlu0 %v1233
    %v1235 = vpop.xlane.xlu0 %1234
    %vm1236 = vcmp.eq.f32.partialorder %v1232, %v1235
    %v1237 = vsel %vm1236, %v375, 128
    %v1238 = vsel %vm690, %v1237, 2147483647
    %v1239 = vand.u32 %v1238, 65535
    %v1240 = vshra.s32 %v1238, 16
    %v1241 = vcvt.s32.f32 %v1239
    %v1242 = vcvt.s32.f32 %v1240
    %1243 = vmin.xlane.f32.xlu0 %v1242
    %v1244 = vpop.xlane.xlu0 %1243
    %vm1245 = vcmp.eq.f32.partialorder %v1242, %v1244
    %v1246 = vsel %vm1245, %v1241, inf
    %1247 = vmin.xlane.f32.xlu0 %v1246
    %v1248 = vpop.xlane.xlu0 %1247
    %v1249 = vcvt.f32.s32 %v1248
    %v1250 = vcvt.f32.s32 %v1244
    %v1251 = vshll.u32 %v1250, 16
    %v1252 = vadd.s32 %v1251, %v1249
    %vm1253 = vcmp.eq.s32.totalorder %v375, 2
    %v1254 = vsel %vm1253, %v1252, %v982
    %vm1255 = vcmp.eq.s32.totalorder %v1252, 1
    %vm1256 = vmor %vm984, %vm1255
    %v1257 = vsel %vm1256, %v985, %v1252
    %vm1258 = vcmp.eq.s32.totalorder %v375, %v1257
    %v1259 = vsel %vm1258, 1, 0
    %v1260 = vcvt.s32.f32 %v1259
    %1261 = vmatpush.msra.mxu0 %v439
    %1262 = vmatpush.msra.mxu0 %v435
    %1263 = vmatpush.msra.mxu0 %v431
    %1264 = vmatpush.msra.mxu0 %v427
    %1265 = vmatpush.msra.mxu0 %v423
    %1266 = vmatpush.msra.mxu0 %v419
    %1267 = vmatpush.msra.mxu0 %v415
    %1268 = vmatpush.msra.mxu0 %v411
    %1269 = vmatpush.msra.mxu0 %v407
    %1270 = vmatpush.msra.mxu0 %v403
    %1271 = vmatpush.msra.mxu0 %v399
    %1272 = vmatpush.msra.mxu0 %v395
    %1273 = vmatpush.msra.mxu0 %v391
    %1274 = vmatpush.msra.mxu0 %v387
    %1275 = vmatpush.msra.mxu0 %v383
    %1276 = vmatpush.msra.mxu0 %v379
    %1277 = vmatmul.f32.gmra.mxu0 %v1260
    %v1278 = vpop.f32.mrf.mxu0
    %v1279 = vadd.f32 %v1150, %v1278
    %1280 = vdwg.mxu0
    %1281 = vmatpush.msra.mxu0 %v440
    %1282 = vmatpush.msra.mxu0 %v436
    %1283 = vmatpush.msra.mxu0 %v432
    %1284 = vmatpush.msra.mxu0 %v428
    %1285 = vmatpush.msra.mxu0 %v424
    %1286 = vmatpush.msra.mxu0 %v420
    %1287 = vmatpush.msra.mxu0 %v416
    %1288 = vmatpush.msra.mxu0 %v412
    %1289 = vmatpush.msra.mxu0 %v408
    %1290 = vmatpush.msra.mxu0 %v404
    %1291 = vmatpush.msra.mxu0 %v400
    %1292 = vmatpush.msra.mxu0 %v396
    %1293 = vmatpush.msra.mxu0 %v392
    %1294 = vmatpush.msra.mxu0 %v388
    %1295 = vmatpush.msra.mxu0 %v384
    %1296 = vmatpush.msra.mxu0 %v380
    %1297 = vmatmul.f32.gmra.mxu0 %v1260
    %v1298 = vpop.f32.mrf.mxu0
    %v1299 = vadd.f32 %v1170, %v1298
    %1300 = vdwg.mxu0
    %1301 = vmatpush.msra.mxu0 %v441
    %1302 = vmatpush.msra.mxu0 %v437
    %1303 = vmatpush.msra.mxu0 %v433
    %1304 = vmatpush.msra.mxu0 %v429
    %1305 = vmatpush.msra.mxu0 %v425
    %1306 = vmatpush.msra.mxu0 %v421
    %1307 = vmatpush.msra.mxu0 %v417
    %1308 = vmatpush.msra.mxu0 %v413
    %1309 = vmatpush.msra.mxu0 %v409
    %1310 = vmatpush.msra.mxu0 %v405
    %1311 = vmatpush.msra.mxu0 %v401
    %1312 = vmatpush.msra.mxu0 %v397
    %1313 = vmatpush.msra.mxu0 %v393
    %1314 = vmatpush.msra.mxu0 %v389
    %1315 = vmatpush.msra.mxu0 %v385
    %1316 = vmatpush.msra.mxu0 %v381
    %1317 = vmatmul.f32.gmra.mxu0 %v1260
    %v1318 = vpop.f32.mrf.mxu0
    %v1319 = vadd.f32 %v1190, %v1318
    %1320 = vdwg.mxu0
    %1321 = vmatpush.msra.mxu0 %v442
    %1322 = vmatpush.msra.mxu0 %v438
    %1323 = vmatpush.msra.mxu0 %v434
    %1324 = vmatpush.msra.mxu0 %v430
    %1325 = vmatpush.msra.mxu0 %v426
    %1326 = vmatpush.msra.mxu0 %v422
    %1327 = vmatpush.msra.mxu0 %v418
    %1328 = vmatpush.msra.mxu0 %v414
    %1329 = vmatpush.msra.mxu0 %v410
    %1330 = vmatpush.msra.mxu0 %v406
    %1331 = vmatpush.msra.mxu0 %v402
    %1332 = vmatpush.msra.mxu0 %v398
    %1333 = vmatpush.msra.mxu0 %v394
    %1334 = vmatpush.msra.mxu0 %v390
    %1335 = vmatpush.msra.mxu0 %v386
    %1336 = vmatpush.msra.mxu0 %v382
    %1337 = vmatmul.f32.gmra.mxu0 %v1260
    %v1338 = vpop.f32.mrf.mxu0
    %v1339 = vadd.f32 %v1210, %v1338
    %1340 = vdwg.mxu0
    %v1341 = vxor.u32 %v1279, 2147483648
    %v1342 = vmul.f32 %v1341, 1.442695
    %v1343 = vpow.pop %v1342
    %v1344 = vadd.f32 %v1343, 1.0
    %v1345 = vrcp.pop %v1344
    %v1346 = vmul.f32 %v1344, %v1345
    %v1347 = vsub.f32 1.0, %v1346
    %v1348 = vmul.f32 %v1345, %v1347
    %v1349 = vadd.f32 %v1345, %v1348
    %vm1350 = vweird.f32 %v1344
    %vm1351 = vweird.f32 %v1345
    %vm1352 = vmor %vm1350, %vm1351
    %v1353 = vsel %vm1352, %v1345, %v1349
    %v1354 = vand.u32 2147483647, %v1344
    %vm1355 = vcmp.eq.f32.partialorder %v1354, 8.507059e+37
    %v1356 = vand.u32 %v1344, 2147483648
    %v1357 = vor.u32 1.1754944e-38, %v1356
    %v1358 = vsel %vm1355, %v1357, %v1353
    %v1359 = vmul.f32 1.0, %v1358
    %v1360 = vxor.u32 %v1299, 2147483648
    %v1361 = vmul.f32 %v1360, 1.442695
    %v1362 = vpow.pop %v1361
    %v1363 = vadd.f32 %v1362, 1.0
    %v1364 = vrcp.pop %v1363
    %v1365 = vmul.f32 %v1363, %v1364
    %v1366 = vsub.f32 1.0, %v1365
    %v1367 = vmul.f32 %v1364, %v1366
    %v1368 = vadd.f32 %v1364, %v1367
    %vm1369 = vweird.f32 %v1363
    %vm1370 = vweird.f32 %v1364
    %vm1371 = vmor %vm1369, %vm1370
    %v1372 = vsel %vm1371, %v1364, %v1368
    %v1373 = vand.u32 2147483647, %v1363
    %vm1374 = vcmp.eq.f32.partialorder %v1373, 8.507059e+37
    %v1375 = vand.u32 %v1363, 2147483648
    %v1376 = vor.u32 1.1754944e-38, %v1375
    %v1377 = vsel %vm1374, %v1376, %v1372
    %v1378 = vmul.f32 1.0, %v1377
    %v1379 = vtanh.pop %v1319
    %v1380 = vxor.u32 %v1339, 2147483648
    %v1381 = vmul.f32 %v1380, 1.442695
    %v1382 = vpow.pop %v1381
    %v1383 = vadd.f32 %v1382, 1.0
    %v1384 = vrcp.pop %v1383
    %v1385 = vmul.f32 %v1383, %v1384
    %v1386 = vsub.f32 1.0, %v1385
    %v1387 = vmul.f32 %v1384, %v1386
    %v1388 = vadd.f32 %v1384, %v1387
    %vm1389 = vweird.f32 %v1383
    %vm1390 = vweird.f32 %v1384
    %vm1391 = vmor %vm1389, %vm1390
    %v1392 = vsel %vm1391, %v1384, %v1388
    %v1393 = vand.u32 2147483647, %v1383
    %vm1394 = vcmp.eq.f32.partialorder %v1393, 8.507059e+37
    %v1395 = vand.u32 %v1383, 2147483648
    %v1396 = vor.u32 1.1754944e-38, %v1395
    %v1397 = vsel %vm1394, %v1396, %v1392
    %v1398 = vmul.f32 1.0, %v1397
    %v1399 = vmul.f32 %v1378, %v1129
    %v1400 = vmul.f32 %v1359, %v1379
    %v1401 = vadd.f32 %v1399, %v1400
    %v1402 = vtanh.pop %v1401
    %v1403 = vmul.f32 %v1398, %v1402
    %1404 = vmatpush.msra.mxu0 %v289
    %1405 = vmatpush.msra.mxu0 %v284
    %1406 = vmatpush.msra.mxu0 %v279
    %1407 = vmatpush.msra.mxu0 %v274
    %1408 = vmatpush.msra.mxu0 %v269
    %1409 = vmatpush.msra.mxu0 %v264
    %1410 = vmatpush.msra.mxu0 %v259
    %1411 = vmatpush.msra.mxu0 %v254
    %1412 = vmatpush.msra.mxu0 %v249
    %1413 = vmatpush.msra.mxu0 %v244
    %1414 = vmatpush.msra.mxu0 %v239
    %1415 = vmatpush.msra.mxu0 %v234
    %1416 = vmatpush.msra.mxu0 %v229
    %1417 = vmatpush.msra.mxu0 %v224
    %1418 = vmatpush.msra.mxu0 %v219
    %1419 = vmatpush.msra.mxu0 %v214
    %1420 = vmatmul.f32.gmra.mxu0 %v1403
    %v1421 = vpop.f32.mrf.mxu0
    %v1422 = vadd.f32 0.0, %v1421
    %1423 = vdwg.mxu0
    %1424 = vmatpush.msra.mxu0 %v290
    %1425 = vmatpush.msra.mxu0 %v285
    %1426 = vmatpush.msra.mxu0 %v280
    %1427 = vmatpush.msra.mxu0 %v275
    %1428 = vmatpush.msra.mxu0 %v270
    %1429 = vmatpush.msra.mxu0 %v265
    %1430 = vmatpush.msra.mxu0 %v260
    %1431 = vmatpush.msra.mxu0 %v255
    %1432 = vmatpush.msra.mxu0 %v250
    %1433 = vmatpush.msra.mxu0 %v245
    %1434 = vmatpush.msra.mxu0 %v240
    %1435 = vmatpush.msra.mxu0 %v235
    %1436 = vmatpush.msra.mxu0 %v230
    %1437 = vmatpush.msra.mxu0 %v225
    %1438 = vmatpush.msra.mxu0 %v220
    %1439 = vmatpush.msra.mxu0 %v215
    %1440 = vmatmul.f32.gmra.mxu0 %v1403
    %v1441 = vpop.f32.mrf.mxu0
    %v1442 = vadd.f32 0.0, %v1441
    %1443 = vdwg.mxu0
    %1444 = vmatpush.msra.mxu0 %v291
    %1445 = vmatpush.msra.mxu0 %v286
    %1446 = vmatpush.msra.mxu0 %v281
    %1447 = vmatpush.msra.mxu0 %v276
    %1448 = vmatpush.msra.mxu0 %v271
    %1449 = vmatpush.msra.mxu0 %v266
    %1450 = vmatpush.msra.mxu0 %v261
    %1451 = vmatpush.msra.mxu0 %v256
    %1452 = vmatpush.msra.mxu0 %v251
    %1453 = vmatpush.msra.mxu0 %v246
    %1454 = vmatpush.msra.mxu0 %v241
    %1455 = vmatpush.msra.mxu0 %v236
    %1456 = vmatpush.msra.mxu0 %v231
    %1457 = vmatpush.msra.mxu0 %v226
    %1458 = vmatpush.msra.mxu0 %v221
    %1459 = vmatpush.msra.mxu0 %v216
    %1460 = vmatmul.f32.gmra.mxu0 %v1403
    %v1461 = vpop.f32.mrf.mxu0
    %v1462 = vadd.f32 0.0, %v1461
    %1463 = vdwg.mxu0
    %1464 = vmatpush.msra.mxu0 %v292
    %1465 = vmatpush.msra.mxu0 %v287
    %1466 = vmatpush.msra.mxu0 %v282
    %1467 = vmatpush.msra.mxu0 %v277
    %1468 = vmatpush.msra.mxu0 %v272
    %1469 = vmatpush.msra.mxu0 %v267
    %1470 = vmatpush.msra.mxu0 %v262
    %1471 = vmatpush.msra.mxu0 %v257
    %1472 = vmatpush.msra.mxu0 %v252
    %1473 = vmatpush.msra.mxu0 %v247
    %1474 = vmatpush.msra.mxu0 %v242
    %1475 = vmatpush.msra.mxu0 %v237
    %1476 = vmatpush.msra.mxu0 %v232
    %1477 = vmatpush.msra.mxu0 %v227
    %1478 = vmatpush.msra.mxu0 %v222
    %1479 = vmatpush.msra.mxu0 %v217
    %1480 = vmatmul.f32.gmra.mxu0 %v1403
    %v1481 = vpop.f32.mrf.mxu0
    %v1482 = vadd.f32 0.0, %v1481
    %1483 = vdwg.mxu0
    %1484 = vmatpush.msra.mxu0 %v293
    %1485 = vmatpush.msra.mxu0 %v288
    %1486 = vmatpush.msra.mxu0 %v283
    %1487 = vmatpush.msra.mxu0 %v278
    %1488 = vmatpush.msra.mxu0 %v273
    %1489 = vmatpush.msra.mxu0 %v268
    %1490 = vmatpush.msra.mxu0 %v263
    %1491 = vmatpush.msra.mxu0 %v258
    %1492 = vmatpush.msra.mxu0 %v253
    %1493 = vmatpush.msra.mxu0 %v248
    %1494 = vmatpush.msra.mxu0 %v243
    %1495 = vmatpush.msra.mxu0 %v238
    %1496 = vmatpush.msra.mxu0 %v233
    %1497 = vmatpush.msra.mxu0 %v228
    %1498 = vmatpush.msra.mxu0 %v223
    %1499 = vmatpush.msra.mxu0 %v218
    %1500 = vmatmul.f32.gmra.mxu0 %v1403
    %v1501 = vpop.f32.mrf.mxu0
    %v1502 = vadd.f32 0.0, %v1501
    %1503 = vdwg.mxu0
    %v1504 = vadd.f32 %v1502, %v687
    %v1505 = vsel %vm690, %v1504, -inf
    %1506 = vmax.xlane.f32.xlu0 %v1505
    %v1507 = vpop.xlane.xlu0 %1506
    %vm1508 = vcmp.eq.f32.partialorder %v1504, %v1507
    %v1509 = vsel %vm1508, %v375, 128
    %v1510 = vsel %vm690, %v1509, 2147483647
    %v1511 = vand.u32 %v1510, 65535
    %v1512 = vshra.s32 %v1510, 16
    %v1513 = vcvt.s32.f32 %v1511
    %v1514 = vcvt.s32.f32 %v1512
    %1515 = vmin.xlane.f32.xlu0 %v1514
    %v1516 = vpop.xlane.xlu0 %1515
    %vm1517 = vcmp.eq.f32.partialorder %v1514, %v1516
    %v1518 = vsel %vm1517, %v1513, inf
    %1519 = vmin.xlane.f32.xlu0 %v1518
    %v1520 = vpop.xlane.xlu0 %1519
    %v1521 = vcvt.f32.s32 %v1520
    %v1522 = vcvt.f32.s32 %v1516
    %v1523 = vshll.u32 %v1522, 16
    %v1524 = vadd.s32 %v1523, %v1521
    %vm1525 = vcmp.eq.s32.totalorder %v375, 3
    %v1526 = vsel %vm1525, %v1524, %v1254
    %vm1527 = vcmp.eq.s32.totalorder %v1524, 1
    %vm1528 = vmor %vm1256, %vm1527
    %v1529 = vsel %vm1528, %v1257, %v1524
    %vm1530 = vcmp.eq.s32.totalorder %v375, %v1529
    %v1531 = vsel %vm1530, 1, 0
    %v1532 = vcvt.s32.f32 %v1531
    %1533 = vmatpush.msra.mxu0 %v439
    %1534 = vmatpush.msra.mxu0 %v435
    %1535 = vmatpush.msra.mxu0 %v431
    %1536 = vmatpush.msra.mxu0 %v427
    %1537 = vmatpush.msra.mxu0 %v423
    %1538 = vmatpush.msra.mxu0 %v419
    %1539 = vmatpush.msra.mxu0 %v415
    %1540 = vmatpush.msra.mxu0 %v411
    %1541 = vmatpush.msra.mxu0 %v407
    %1542 = vmatpush.msra.mxu0 %v403
    %1543 = vmatpush.msra.mxu0 %v399
    %1544 = vmatpush.msra.mxu0 %v395
    %1545 = vmatpush.msra.mxu0 %v391
    %1546 = vmatpush.msra.mxu0 %v387
    %1547 = vmatpush.msra.mxu0 %v383
    %1548 = vmatpush.msra.mxu0 %v379
    %1549 = vmatmul.f32.gmra.mxu0 %v1532
    %v1550 = vpop.f32.mrf.mxu0
    %v1551 = vadd.f32 %v1422, %v1550
    %1552 = vdwg.mxu0
    %1553 = vmatpush.msra.mxu0 %v440
    %1554 = vmatpush.msra.mxu0 %v436
    %1555 = vmatpush.msra.mxu0 %v432
    %1556 = vmatpush.msra.mxu0 %v428
    %1557 = vmatpush.msra.mxu0 %v424
    %1558 = vmatpush.msra.mxu0 %v420
    %1559 = vmatpush.msra.mxu0 %v416
    %1560 = vmatpush.msra.mxu0 %v412
    %1561 = vmatpush.msra.mxu0 %v408
    %1562 = vmatpush.msra.mxu0 %v404
    %1563 = vmatpush.msra.mxu0 %v400
    %1564 = vmatpush.msra.mxu0 %v396
    %1565 = vmatpush.msra.mxu0 %v392
    %1566 = vmatpush.msra.mxu0 %v388
    %1567 = vmatpush.msra.mxu0 %v384
    %1568 = vmatpush.msra.mxu0 %v380
    %1569 = vmatmul.f32.gmra.mxu0 %v1532
    %v1570 = vpop.f32.mrf.mxu0
    %v1571 = vadd.f32 %v1442, %v1570
    %1572 = vdwg.mxu0
    %1573 = vmatpush.msra.mxu0 %v441
    %1574 = vmatpush.msra.mxu0 %v437
    %1575 = vmatpush.msra.mxu0 %v433
    %1576 = vmatpush.msra.mxu0 %v429
    %1577 = vmatpush.msra.mxu0 %v425
    %1578 = vmatpush.msra.mxu0 %v421
    %1579 = vmatpush.msra.mxu0 %v417
    %1580 = vmatpush.msra.mxu0 %v413
    %1581 = vmatpush.msra.mxu0 %v409
    %1582 = vmatpush.msra.mxu0 %v405
    %1583 = vmatpush.msra.mxu0 %v401
    %1584 = vmatpush.msra.mxu0 %v397
    %1585 = vmatpush.msra.mxu0 %v393
    %1586 = vmatpush.msra.mxu0 %v389
    %1587 = vmatpush.msra.mxu0 %v385
    %1588 = vmatpush.msra.mxu0 %v381
    %1589 = vmatmul.f32.gmra.mxu0 %v1532
    %v1590 = vpop.f32.mrf.mxu0
    %v1591 = vadd.f32 %v1462, %v1590
    %1592 = vdwg.mxu0
    %1593 = vmatpush.msra.mxu0 %v442
    %1594 = vmatpush.msra.mxu0 %v438
    %1595 = vmatpush.msra.mxu0 %v434
    %1596 = vmatpush.msra.mxu0 %v430
    %1597 = vmatpush.msra.mxu0 %v426
    %1598 = vmatpush.msra.mxu0 %v422
    %1599 = vmatpush.msra.mxu0 %v418
    %1600 = vmatpush.msra.mxu0 %v414
    %1601 = vmatpush.msra.mxu0 %v410
    %1602 = vmatpush.msra.mxu0 %v406
    %1603 = vmatpush.msra.mxu0 %v402
    %1604 = vmatpush.msra.mxu0 %v398
    %1605 = vmatpush.msra.mxu0 %v394
    %1606 = vmatpush.msra.mxu0 %v390
    %1607 = vmatpush.msra.mxu0 %v386
    %1608 = vmatpush.msra.mxu0 %v382
    %1609 = vmatmul.f32.gmra.mxu0 %v1532
    %v1610 = vpop.f32.mrf.mxu0
    %v1611 = vadd.f32 %v1482, %v1610
    %1612 = vdwg.mxu0
    %v1613 = vxor.u32 %v1551, 2147483648
    %v1614 = vmul.f32 %v1613, 1.442695
    %v1615 = vpow.pop %v1614
    %v1616 = vadd.f32 %v1615, 1.0
    %v1617 = vrcp.pop %v1616
    %v1618 = vmul.f32 %v1616, %v1617
    %v1619 = vsub.f32 1.0, %v1618
    %v1620 = vmul.f32 %v1617, %v1619
    %v1621 = vadd.f32 %v1617, %v1620
    %vm1622 = vweird.f32 %v1616
    %vm1623 = vweird.f32 %v1617
    %vm1624 = vmor %vm1622, %vm1623
    %v1625 = vsel %vm1624, %v1617, %v1621
    %v1626 = vand.u32 2147483647, %v1616
    %vm1627 = vcmp.eq.f32.partialorder %v1626, 8.507059e+37
    %v1628 = vand.u32 %v1616, 2147483648
    %v1629 = vor.u32 1.1754944e-38, %v1628
    %v1630 = vsel %vm1627, %v1629, %v1625
    %v1631 = vmul.f32 1.0, %v1630
    %v1632 = vxor.u32 %v1571, 2147483648
    %v1633 = vmul.f32 %v1632, 1.442695
    %v1634 = vpow.pop %v1633
    %v1635 = vadd.f32 %v1634, 1.0
    %v1636 = vrcp.pop %v1635
    %v1637 = vmul.f32 %v1635, %v1636
    %v1638 = vsub.f32 1.0, %v1637
    %v1639 = vmul.f32 %v1636, %v1638
    %v1640 = vadd.f32 %v1636, %v1639
    %vm1641 = vweird.f32 %v1635
    %vm1642 = vweird.f32 %v1636
    %vm1643 = vmor %vm1641, %vm1642
    %v1644 = vsel %vm1643, %v1636, %v1640
    %v1645 = vand.u32 2147483647, %v1635
    %vm1646 = vcmp.eq.f32.partialorder %v1645, 8.507059e+37
    %v1647 = vand.u32 %v1635, 2147483648
    %v1648 = vor.u32 1.1754944e-38, %v1647
    %v1649 = vsel %vm1646, %v1648, %v1644
    %v1650 = vmul.f32 1.0, %v1649
    %v1651 = vtanh.pop %v1591
    %v1652 = vxor.u32 %v1611, 2147483648
    %v1653 = vmul.f32 %v1652, 1.442695
    %v1654 = vpow.pop %v1653
    %v1655 = vadd.f32 %v1654, 1.0
    %v1656 = vrcp.pop %v1655
    %v1657 = vmul.f32 %v1655, %v1656
    %v1658 = vsub.f32 1.0, %v1657
    %v1659 = vmul.f32 %v1656, %v1658
    %v1660 = vadd.f32 %v1656, %v1659
    %vm1661 = vweird.f32 %v1655
    %vm1662 = vweird.f32 %v1656
    %vm1663 = vmor %vm1661, %vm1662
    %v1664 = vsel %vm1663, %v1656, %v1660
    %v1665 = vand.u32 2147483647, %v1655
    %vm1666 = vcmp.eq.f32.partialorder %v1665, 8.507059e+37
    %v1667 = vand.u32 %v1655, 2147483648
    %v1668 = vor.u32 1.1754944e-38, %v1667
    %v1669 = vsel %vm1666, %v1668, %v1664
    %v1670 = vmul.f32 1.0, %v1669
    %v1671 = vmul.f32 %v1650, %v1401
    %v1672 = vmul.f32 %v1631, %v1651
    %v1673 = vadd.f32 %v1671, %v1672
    %v1674 = vtanh.pop %v1673
    %v1675 = vmul.f32 %v1670, %v1674
    %1676 = vmatpush.msra.mxu0 %v289
    %1677 = vmatpush.msra.mxu0 %v284
    %1678 = vmatpush.msra.mxu0 %v279
    %1679 = vmatpush.msra.mxu0 %v274
    %1680 = vmatpush.msra.mxu0 %v269
    %1681 = vmatpush.msra.mxu0 %v264
    %1682 = vmatpush.msra.mxu0 %v259
    %1683 = vmatpush.msra.mxu0 %v254
    %1684 = vmatpush.msra.mxu0 %v249
    %1685 = vmatpush.msra.mxu0 %v244
    %1686 = vmatpush.msra.mxu0 %v239
    %1687 = vmatpush.msra.mxu0 %v234
    %1688 = vmatpush.msra.mxu0 %v229
    %1689 = vmatpush.msra.mxu0 %v224
    %1690 = vmatpush.msra.mxu0 %v219
    %1691 = vmatpush.msra.mxu0 %v214
    %1692 = vmatmul.f32.gmra.mxu0 %v1675
    %v1693 = vpop.f32.mrf.mxu0
    %v1694 = vadd.f32 0.0, %v1693
    %1695 = vdwg.mxu0
    %1696 = vmatpush.msra.mxu0 %v290
    %1697 = vmatpush.msra.mxu0 %v285
    %1698 = vmatpush.msra.mxu0 %v280
    %1699 = vmatpush.msra.mxu0 %v275
    %1700 = vmatpush.msra.mxu0 %v270
    %1701 = vmatpush.msra.mxu0 %v265
    %1702 = vmatpush.msra.mxu0 %v260
    %1703 = vmatpush.msra.mxu0 %v255
    %1704 = vmatpush.msra.mxu0 %v250
    %1705 = vmatpush.msra.mxu0 %v245
    %1706 = vmatpush.msra.mxu0 %v240
    %1707 = vmatpush.msra.mxu0 %v235
    %1708 = vmatpush.msra.mxu0 %v230
    %1709 = vmatpush.msra.mxu0 %v225
    %1710 = vmatpush.msra.mxu0 %v220
    %1711 = vmatpush.msra.mxu0 %v215
    %1712 = vmatmul.f32.gmra.mxu0 %v1675
    %v1713 = vpop.f32.mrf.mxu0
    %v1714 = vadd.f32 0.0, %v1713
    %1715 = vdwg.mxu0
    %1716 = vmatpush.msra.mxu0 %v291
    %1717 = vmatpush.msra.mxu0 %v286
    %1718 = vmatpush.msra.mxu0 %v281
    %1719 = vmatpush.msra.mxu0 %v276
    %1720 = vmatpush.msra.mxu0 %v271
    %1721 = vmatpush.msra.mxu0 %v266
    %1722 = vmatpush.msra.mxu0 %v261
    %1723 = vmatpush.msra.mxu0 %v256
    %1724 = vmatpush.msra.mxu0 %v251
    %1725 = vmatpush.msra.mxu0 %v246
    %1726 = vmatpush.msra.mxu0 %v241
    %1727 = vmatpush.msra.mxu0 %v236
    %1728 = vmatpush.msra.mxu0 %v231
    %1729 = vmatpush.msra.mxu0 %v226
    %1730 = vmatpush.msra.mxu0 %v221
    %1731 = vmatpush.msra.mxu0 %v216
    %1732 = vmatmul.f32.gmra.mxu0 %v1675
    %v1733 = vpop.f32.mrf.mxu0
    %v1734 = vadd.f32 0.0, %v1733
    %1735 = vdwg.mxu0
    %1736 = vmatpush.msra.mxu0 %v292
    %1737 = vmatpush.msra.mxu0 %v287
    %1738 = vmatpush.msra.mxu0 %v282
    %1739 = vmatpush.msra.mxu0 %v277
    %1740 = vmatpush.msra.mxu0 %v272
    %1741 = vmatpush.msra.mxu0 %v267
    %1742 = vmatpush.msra.mxu0 %v262
    %1743 = vmatpush.msra.mxu0 %v257
    %1744 = vmatpush.msra.mxu0 %v252
    %1745 = vmatpush.msra.mxu0 %v247
    %1746 = vmatpush.msra.mxu0 %v242
    %1747 = vmatpush.msra.mxu0 %v237
    %1748 = vmatpush.msra.mxu0 %v232
    %1749 = vmatpush.msra.mxu0 %v227
    %1750 = vmatpush.msra.mxu0 %v222
    %1751 = vmatpush.msra.mxu0 %v217
    %1752 = vmatmul.f32.gmra.mxu0 %v1675
    %v1753 = vpop.f32.mrf.mxu0
    %v1754 = vadd.f32 0.0, %v1753
    %1755 = vdwg.mxu0
    %1756 = vmatpush.msra.mxu0 %v293
    %1757 = vmatpush.msra.mxu0 %v288
    %1758 = vmatpush.msra.mxu0 %v283
    %1759 = vmatpush.msra.mxu0 %v278
    %1760 = vmatpush.msra.mxu0 %v273
    %1761 = vmatpush.msra.mxu0 %v268
    %1762 = vmatpush.msra.mxu0 %v263
    %1763 = vmatpush.msra.mxu0 %v258
    %1764 = vmatpush.msra.mxu0 %v253
    %1765 = vmatpush.msra.mxu0 %v248
    %1766 = vmatpush.msra.mxu0 %v243
    %1767 = vmatpush.msra.mxu0 %v238
    %1768 = vmatpush.msra.mxu0 %v233
    %1769 = vmatpush.msra.mxu0 %v228
    %1770 = vmatpush.msra.mxu0 %v223
    %1771 = vmatpush.msra.mxu0 %v218
    %1772 = vmatmul.f32.gmra.mxu0 %v1675
    %v1773 = vpop.f32.mrf.mxu0
    %v1774 = vadd.f32 0.0, %v1773
    %1775 = vdwg.mxu0
    %v1776 = vadd.f32 %v1774, %v687
    %v1777 = vsel %vm690, %v1776, -inf
    %1778 = vmax.xlane.f32.xlu0 %v1777
    %v1779 = vpop.xlane.xlu0 %1778
    %vm1780 = vcmp.eq.f32.partialorder %v1776, %v1779
    %v1781 = vsel %vm1780, %v375, 128
    %v1782 = vsel %vm690, %v1781, 2147483647
    %v1783 = vand.u32 %v1782, 65535
    %v1784 = vshra.s32 %v1782, 16
    %v1785 = vcvt.s32.f32 %v1783
    %v1786 = vcvt.s32.f32 %v1784
    %1787 = vmin.xlane.f32.xlu0 %v1786
    %v1788 = vpop.xlane.xlu0 %1787
    %vm1789 = vcmp.eq.f32.partialorder %v1786, %v1788
    %v1790 = vsel %vm1789, %v1785, inf
    %1791 = vmin.xlane.f32.xlu0 %v1790
    %v1792 = vpop.xlane.xlu0 %1791
    %v1793 = vcvt.f32.s32 %v1792
    %v1794 = vcvt.f32.s32 %v1788
    %v1795 = vshll.u32 %v1794, 16
    %v1796 = vadd.s32 %v1795, %v1793
    %vm1797 = vcmp.eq.s32.totalorder %v375, 4
    %v1798 = vsel %vm1797, %v1796, %v1526
    %vm1799 = vcmp.eq.s32.totalorder %v1796, 1
    %vm1800 = vmor %vm1528, %vm1799
    %v1801 = vsel %vm1800, %v1529, %v1796
    %vm1802 = vcmp.eq.s32.totalorder %v375, %v1801
    %v1803 = vsel %vm1802, 1, 0
    %v1804 = vcvt.s32.f32 %v1803
    %1805 = vmatpush.msra.mxu0 %v439
    %1806 = vmatpush.msra.mxu0 %v435
    %1807 = vmatpush.msra.mxu0 %v431
    %1808 = vmatpush.msra.mxu0 %v427
    %1809 = vmatpush.msra.mxu0 %v423
    %1810 = vmatpush.msra.mxu0 %v419
    %1811 = vmatpush.msra.mxu0 %v415
    %1812 = vmatpush.msra.mxu0 %v411
    %1813 = vmatpush.msra.mxu0 %v407
    %1814 = vmatpush.msra.mxu0 %v403
    %1815 = vmatpush.msra.mxu0 %v399
    %1816 = vmatpush.msra.mxu0 %v395
    %1817 = vmatpush.msra.mxu0 %v391
    %1818 = vmatpush.msra.mxu0 %v387
    %1819 = vmatpush.msra.mxu0 %v383
    %1820 = vmatpush.msra.mxu0 %v379
    %1821 = vmatmul.f32.gmra.mxu0 %v1804
    %v1822 = vpop.f32.mrf.mxu0
    %v1823 = vadd.f32 %v1694, %v1822
    %1824 = vdwg.mxu0
    %1825 = vmatpush.msra.mxu0 %v440
    %1826 = vmatpush.msra.mxu0 %v436
    %1827 = vmatpush.msra.mxu0 %v432
    %1828 = vmatpush.msra.mxu0 %v428
    %1829 = vmatpush.msra.mxu0 %v424
    %1830 = vmatpush.msra.mxu0 %v420
    %1831 = vmatpush.msra.mxu0 %v416
    %1832 = vmatpush.msra.mxu0 %v412
    %1833 = vmatpush.msra.mxu0 %v408
    %1834 = vmatpush.msra.mxu0 %v404
    %1835 = vmatpush.msra.mxu0 %v400
    %1836 = vmatpush.msra.mxu0 %v396
    %1837 = vmatpush.msra.mxu0 %v392
    %1838 = vmatpush.msra.mxu0 %v388
    %1839 = vmatpush.msra.mxu0 %v384
    %1840 = vmatpush.msra.mxu0 %v380
    %1841 = vmatmul.f32.gmra.mxu0 %v1804
    %v1842 = vpop.f32.mrf.mxu0
    %v1843 = vadd.f32 %v1714, %v1842
    %1844 = vdwg.mxu0
    %1845 = vmatpush.msra.mxu0 %v441
    %1846 = vmatpush.msra.mxu0 %v437
    %1847 = vmatpush.msra.mxu0 %v433
    %1848 = vmatpush.msra.mxu0 %v429
    %1849 = vmatpush.msra.mxu0 %v425
    %1850 = vmatpush.msra.mxu0 %v421
    %1851 = vmatpush.msra.mxu0 %v417
    %1852 = vmatpush.msra.mxu0 %v413
    %1853 = vmatpush.msra.mxu0 %v409
    %1854 = vmatpush.msra.mxu0 %v405
    %1855 = vmatpush.msra.mxu0 %v401
    %1856 = vmatpush.msra.mxu0 %v397
    %1857 = vmatpush.msra.mxu0 %v393
    %1858 = vmatpush.msra.mxu0 %v389
    %1859 = vmatpush.msra.mxu0 %v385
    %1860 = vmatpush.msra.mxu0 %v381
    %1861 = vmatmul.f32.gmra.mxu0 %v1804
    %v1862 = vpop.f32.mrf.mxu0
    %v1863 = vadd.f32 %v1734, %v1862
    %1864 = vdwg.mxu0
    %1865 = vmatpush.msra.mxu0 %v442
    %1866 = vmatpush.msra.mxu0 %v438
    %1867 = vmatpush.msra.mxu0 %v434
    %1868 = vmatpush.msra.mxu0 %v430
    %1869 = vmatpush.msra.mxu0 %v426
    %1870 = vmatpush.msra.mxu0 %v422
    %1871 = vmatpush.msra.mxu0 %v418
    %1872 = vmatpush.msra.mxu0 %v414
    %1873 = vmatpush.msra.mxu0 %v410
    %1874 = vmatpush.msra.mxu0 %v406
    %1875 = vmatpush.msra.mxu0 %v402
    %1876 = vmatpush.msra.mxu0 %v398
    %1877 = vmatpush.msra.mxu0 %v394
    %1878 = vmatpush.msra.mxu0 %v390
    %1879 = vmatpush.msra.mxu0 %v386
    %1880 = vmatpush.msra.mxu0 %v382
    %1881 = vmatmul.f32.gmra.mxu0 %v1804
    %v1882 = vpop.f32.mrf.mxu0
    %v1883 = vadd.f32 %v1754, %v1882
    %1884 = vdwg.mxu0
    %v1885 = vxor.u32 %v1823, 2147483648
    %v1886 = vmul.f32 %v1885, 1.442695
    %v1887 = vpow.pop %v1886
    %v1888 = vadd.f32 %v1887, 1.0
    %v1889 = vrcp.pop %v1888
    %v1890 = vmul.f32 %v1888, %v1889
    %v1891 = vsub.f32 1.0, %v1890
    %v1892 = vmul.f32 %v1889, %v1891
    %v1893 = vadd.f32 %v1889, %v1892
    %vm1894 = vweird.f32 %v1888
    %vm1895 = vweird.f32 %v1889
    %vm1896 = vmor %vm1894, %vm1895
    %v1897 = vsel %vm1896, %v1889, %v1893
    %v1898 = vand.u32 2147483647, %v1888
    %vm1899 = vcmp.eq.f32.partialorder %v1898, 8.507059e+37
    %v1900 = vand.u32 %v1888, 2147483648
    %v1901 = vor.u32 1.1754944e-38, %v1900
    %v1902 = vsel %vm1899, %v1901, %v1897
    %v1903 = vmul.f32 1.0, %v1902
    %v1904 = vxor.u32 %v1843, 2147483648
    %v1905 = vmul.f32 %v1904, 1.442695
    %v1906 = vpow.pop %v1905
    %v1907 = vadd.f32 %v1906, 1.0
    %v1908 = vrcp.pop %v1907
    %v1909 = vmul.f32 %v1907, %v1908
    %v1910 = vsub.f32 1.0, %v1909
    %v1911 = vmul.f32 %v1908, %v1910
    %v1912 = vadd.f32 %v1908, %v1911
    %vm1913 = vweird.f32 %v1907
    %vm1914 = vweird.f32 %v1908
    %vm1915 = vmor %vm1913, %vm1914
    %v1916 = vsel %vm1915, %v1908, %v1912
    %v1917 = vand.u32 2147483647, %v1907
    %vm1918 = vcmp.eq.f32.partialorder %v1917, 8.507059e+37
    %v1919 = vand.u32 %v1907, 2147483648
    %v1920 = vor.u32 1.1754944e-38, %v1919
    %v1921 = vsel %vm1918, %v1920, %v1916
    %v1922 = vmul.f32 1.0, %v1921
    %v1923 = vtanh.pop %v1863
    %v1924 = vxor.u32 %v1883, 2147483648
    %v1925 = vmul.f32 %v1924, 1.442695
    %v1926 = vpow.pop %v1925
    %v1927 = vadd.f32 %v1926, 1.0
    %v1928 = vrcp.pop %v1927
    %v1929 = vmul.f32 %v1927, %v1928
    %v1930 = vsub.f32 1.0, %v1929
    %v1931 = vmul.f32 %v1928, %v1930
    %v1932 = vadd.f32 %v1928, %v1931
    %vm1933 = vweird.f32 %v1927
    %vm1934 = vweird.f32 %v1928
    %vm1935 = vmor %vm1933, %vm1934
    %v1936 = vsel %vm1935, %v1928, %v1932
    %v1937 = vand.u32 2147483647, %v1927
    %vm1938 = vcmp.eq.f32.partialorder %v1937, 8.507059e+37
    %v1939 = vand.u32 %v1927, 2147483648
    %v1940 = vor.u32 1.1754944e-38, %v1939
    %v1941 = vsel %vm1938, %v1940, %v1936
    %v1942 = vmul.f32 1.0, %v1941
    %v1943 = vmul.f32 %v1922, %v1673
    %v1944 = vmul.f32 %v1903, %v1923
    %v1945 = vadd.f32 %v1943, %v1944
    %v1946 = vtanh.pop %v1945
    %v1947 = vmul.f32 %v1942, %v1946
    %1948 = vmatpush.msra.mxu0 %v289
    %1949 = vmatpush.msra.mxu0 %v284
    %1950 = vmatpush.msra.mxu0 %v279
    %1951 = vmatpush.msra.mxu0 %v274
    %1952 = vmatpush.msra.mxu0 %v269
    %1953 = vmatpush.msra.mxu0 %v264
    %1954 = vmatpush.msra.mxu0 %v259
    %1955 = vmatpush.msra.mxu0 %v254
    %1956 = vmatpush.msra.mxu0 %v249
    %1957 = vmatpush.msra.mxu0 %v244
    %1958 = vmatpush.msra.mxu0 %v239
    %1959 = vmatpush.msra.mxu0 %v234
    %1960 = vmatpush.msra.mxu0 %v229
    %1961 = vmatpush.msra.mxu0 %v224
    %1962 = vmatpush.msra.mxu0 %v219
    %1963 = vmatpush.msra.mxu0 %v214
    %1964 = vmatmul.f32.gmra.mxu0 %v1947
    %v1965 = vpop.f32.mrf.mxu0
    %v1966 = vadd.f32 0.0, %v1965
    %1967 = vdwg.mxu0
    %1968 = vmatpush.msra.mxu0 %v290
    %1969 = vmatpush.msra.mxu0 %v285
    %1970 = vmatpush.msra.mxu0 %v280
    %1971 = vmatpush.msra.mxu0 %v275
    %1972 = vmatpush.msra.mxu0 %v270
    %1973 = vmatpush.msra.mxu0 %v265
    %1974 = vmatpush.msra.mxu0 %v260
    %1975 = vmatpush.msra.mxu0 %v255
    %1976 = vmatpush.msra.mxu0 %v250
    %1977 = vmatpush.msra.mxu0 %v245
    %1978 = vmatpush.msra.mxu0 %v240
    %1979 = vmatpush.msra.mxu0 %v235
    %1980 = vmatpush.msra.mxu0 %v230
    %1981 = vmatpush.msra.mxu0 %v225
    %1982 = vmatpush.msra.mxu0 %v220
    %1983 = vmatpush.msra.mxu0 %v215
    %1984 = vmatmul.f32.gmra.mxu0 %v1947
    %v1985 = vpop.f32.mrf.mxu0
    %v1986 = vadd.f32 0.0, %v1985
    %1987 = vdwg.mxu0
    %1988 = vmatpush.msra.mxu0 %v291
    %1989 = vmatpush.msra.mxu0 %v286
    %1990 = vmatpush.msra.mxu0 %v281
    %1991 = vmatpush.msra.mxu0 %v276
    %1992 = vmatpush.msra.mxu0 %v271
    %1993 = vmatpush.msra.mxu0 %v266
    %1994 = vmatpush.msra.mxu0 %v261
    %1995 = vmatpush.msra.mxu0 %v256
    %1996 = vmatpush.msra.mxu0 %v251
    %1997 = vmatpush.msra.mxu0 %v246
    %1998 = vmatpush.msra.mxu0 %v241
    %1999 = vmatpush.msra.mxu0 %v236
    %2000 = vmatpush.msra.mxu0 %v231
    %2001 = vmatpush.msra.mxu0 %v226
    %2002 = vmatpush.msra.mxu0 %v221
    %2003 = vmatpush.msra.mxu0 %v216
    %2004 = vmatmul.f32.gmra.mxu0 %v1947
    %v2005 = vpop.f32.mrf.mxu0
    %v2006 = vadd.f32 0.0, %v2005
    %2007 = vdwg.mxu0
    %2008 = vmatpush.msra.mxu0 %v292
    %2009 = vmatpush.msra.mxu0 %v287
    %2010 = vmatpush.msra.mxu0 %v282
    %2011 = vmatpush.msra.mxu0 %v277
    %2012 = vmatpush.msra.mxu0 %v272
    %2013 = vmatpush.msra.mxu0 %v267
    %2014 = vmatpush.msra.mxu0 %v262
    %2015 = vmatpush.msra.mxu0 %v257
    %2016 = vmatpush.msra.mxu0 %v252
    %2017 = vmatpush.msra.mxu0 %v247
    %2018 = vmatpush.msra.mxu0 %v242
    %2019 = vmatpush.msra.mxu0 %v237
    %2020 = vmatpush.msra.mxu0 %v232
    %2021 = vmatpush.msra.mxu0 %v227
    %2022 = vmatpush.msra.mxu0 %v222
    %2023 = vmatpush.msra.mxu0 %v217
    %2024 = vmatmul.f32.gmra.mxu0 %v1947
    %v2025 = vpop.f32.mrf.mxu0
    %v2026 = vadd.f32 0.0, %v2025
    %2027 = vdwg.mxu0
    %2028 = vmatpush.msra.mxu0 %v293
    %2029 = vmatpush.msra.mxu0 %v288
    %2030 = vmatpush.msra.mxu0 %v283
    %2031 = vmatpush.msra.mxu0 %v278
    %2032 = vmatpush.msra.mxu0 %v273
    %2033 = vmatpush.msra.mxu0 %v268
    %2034 = vmatpush.msra.mxu0 %v263
    %2035 = vmatpush.msra.mxu0 %v258
    %2036 = vmatpush.msra.mxu0 %v253
    %2037 = vmatpush.msra.mxu0 %v248
    %2038 = vmatpush.msra.mxu0 %v243
    %2039 = vmatpush.msra.mxu0 %v238
    %2040 = vmatpush.msra.mxu0 %v233
    %2041 = vmatpush.msra.mxu0 %v228
    %2042 = vmatpush.msra.mxu0 %v223
    %2043 = vmatpush.msra.mxu0 %v218
    %2044 = vmatmul.f32.gmra.mxu0 %v1947
    %v2045 = vpop.f32.mrf.mxu0
    %v2046 = vadd.f32 0.0, %v2045
    %2047 = vdwg.mxu0
    %v2048 = vadd.f32 %v2046, %v687
    %v2049 = vsel %vm690, %v2048, -inf
    %2050 = vmax.xlane.f32.xlu0 %v2049
    %v2051 = vpop.xlane.xlu0 %2050
    %vm2052 = vcmp.eq.f32.partialorder %v2048, %v2051
    %v2053 = vsel %vm2052, %v375, 128
    %v2054 = vsel %vm690, %v2053, 2147483647
    %v2055 = vand.u32 %v2054, 65535
    %v2056 = vshra.s32 %v2054, 16
    %v2057 = vcvt.s32.f32 %v2055
    %v2058 = vcvt.s32.f32 %v2056
    %2059 = vmin.xlane.f32.xlu0 %v2058
    %v2060 = vpop.xlane.xlu0 %2059
    %vm2061 = vcmp.eq.f32.partialorder %v2058, %v2060
    %v2062 = vsel %vm2061, %v2057, inf
    %2063 = vmin.xlane.f32.xlu0 %v2062
    %v2064 = vpop.xlane.xlu0 %2063
    %v2065 = vcvt.f32.s32 %v2064
    %v2066 = vcvt.f32.s32 %v2060
    %v2067 = vshll.u32 %v2066, 16
    %v2068 = vadd.s32 %v2067, %v2065
    %vm2069 = vcmp.eq.s32.totalorder %v375, 5
    %v2070 = vsel %vm2069, %v2068, %v1798
    %vm2071 = vcmp.eq.s32.totalorder %v2068, 1
    %vm2072 = vmor %vm1800, %vm2071
    %v2073 = vsel %vm2072, %v1801, %v2068
    %vm2074 = vcmp.eq.s32.totalorder %v375, %v2073
    %v2075 = vsel %vm2074, 1, 0
    %v2076 = vcvt.s32.f32 %v2075
    %2077 = vmatpush.msra.mxu0 %v439
    %2078 = vmatpush.msra.mxu0 %v435
    %2079 = vmatpush.msra.mxu0 %v431
    %2080 = vmatpush.msra.mxu0 %v427
    %2081 = vmatpush.msra.mxu0 %v423
    %2082 = vmatpush.msra.mxu0 %v419
    %2083 = vmatpush.msra.mxu0 %v415
    %2084 = vmatpush.msra.mxu0 %v411
    %2085 = vmatpush.msra.mxu0 %v407
    %2086 = vmatpush.msra.mxu0 %v403
    %2087 = vmatpush.msra.mxu0 %v399
    %2088 = vmatpush.msra.mxu0 %v395
    %2089 = vmatpush.msra.mxu0 %v391
    %2090 = vmatpush.msra.mxu0 %v387
    %2091 = vmatpush.msra.mxu0 %v383
    %2092 = vmatpush.msra.mxu0 %v379
    %2093 = vmatmul.f32.gmra.mxu0 %v2076
    %v2094 = vpop.f32.mrf.mxu0
    %v2095 = vadd.f32 %v1966, %v2094
    %2096 = vdwg.mxu0
    %2097 = vmatpush.msra.mxu0 %v440
    %2098 = vmatpush.msra.mxu0 %v436
    %2099 = vmatpush.msra.mxu0 %v432
    %2100 = vmatpush.msra.mxu0 %v428
    %2101 = vmatpush.msra.mxu0 %v424
    %2102 = vmatpush.msra.mxu0 %v420
    %2103 = vmatpush.msra.mxu0 %v416
    %2104 = vmatpush.msra.mxu0 %v412
    %2105 = vmatpush.msra.mxu0 %v408
    %2106 = vmatpush.msra.mxu0 %v404
    %2107 = vmatpush.msra.mxu0 %v400
    %2108 = vmatpush.msra.mxu0 %v396
    %2109 = vmatpush.msra.mxu0 %v392
    %2110 = vmatpush.msra.mxu0 %v388
    %2111 = vmatpush.msra.mxu0 %v384
    %2112 = vmatpush.msra.mxu0 %v380
    %2113 = vmatmul.f32.gmra.mxu0 %v2076
    %v2114 = vpop.f32.mrf.mxu0
    %v2115 = vadd.f32 %v1986, %v2114
    %2116 = vdwg.mxu0
    %2117 = vmatpush.msra.mxu0 %v441
    %2118 = vmatpush.msra.mxu0 %v437
    %2119 = vmatpush.msra.mxu0 %v433
    %2120 = vmatpush.msra.mxu0 %v429
    %2121 = vmatpush.msra.mxu0 %v425
    %2122 = vmatpush.msra.mxu0 %v421
    %2123 = vmatpush.msra.mxu0 %v417
    %2124 = vmatpush.msra.mxu0 %v413
    %2125 = vmatpush.msra.mxu0 %v409
    %2126 = vmatpush.msra.mxu0 %v405
    %2127 = vmatpush.msra.mxu0 %v401
    %2128 = vmatpush.msra.mxu0 %v397
    %2129 = vmatpush.msra.mxu0 %v393
    %2130 = vmatpush.msra.mxu0 %v389
    %2131 = vmatpush.msra.mxu0 %v385
    %2132 = vmatpush.msra.mxu0 %v381
    %2133 = vmatmul.f32.gmra.mxu0 %v2076
    %v2134 = vpop.f32.mrf.mxu0
    %v2135 = vadd.f32 %v2006, %v2134
    %2136 = vdwg.mxu0
    %2137 = vmatpush.msra.mxu0 %v442
    %2138 = vmatpush.msra.mxu0 %v438
    %2139 = vmatpush.msra.mxu0 %v434
    %2140 = vmatpush.msra.mxu0 %v430
    %2141 = vmatpush.msra.mxu0 %v426
    %2142 = vmatpush.msra.mxu0 %v422
    %2143 = vmatpush.msra.mxu0 %v418
    %2144 = vmatpush.msra.mxu0 %v414
    %2145 = vmatpush.msra.mxu0 %v410
    %2146 = vmatpush.msra.mxu0 %v406
    %2147 = vmatpush.msra.mxu0 %v402
    %2148 = vmatpush.msra.mxu0 %v398
    %2149 = vmatpush.msra.mxu0 %v394
    %2150 = vmatpush.msra.mxu0 %v390
    %2151 = vmatpush.msra.mxu0 %v386
    %2152 = vmatpush.msra.mxu0 %v382
    %2153 = vmatmul.f32.gmra.mxu0 %v2076
    %v2154 = vpop.f32.mrf.mxu0
    %v2155 = vadd.f32 %v2026, %v2154
    %2156 = vdwg.mxu0
    %v2157 = vxor.u32 %v2095, 2147483648
    %v2158 = vmul.f32 %v2157, 1.442695
    %v2159 = vpow.pop %v2158
    %v2160 = vadd.f32 %v2159, 1.0
    %v2161 = vrcp.pop %v2160
    %v2162 = vmul.f32 %v2160, %v2161
    %v2163 = vsub.f32 1.0, %v2162
    %v2164 = vmul.f32 %v2161, %v2163
    %v2165 = vadd.f32 %v2161, %v2164
    %vm2166 = vweird.f32 %v2160
    %vm2167 = vweird.f32 %v2161
    %vm2168 = vmor %vm2166, %vm2167
    %v2169 = vsel %vm2168, %v2161, %v2165
    %v2170 = vand.u32 2147483647, %v2160
    %vm2171 = vcmp.eq.f32.partialorder %v2170, 8.507059e+37
    %v2172 = vand.u32 %v2160, 2147483648
    %v2173 = vor.u32 1.1754944e-38, %v2172
    %v2174 = vsel %vm2171, %v2173, %v2169
    %v2175 = vmul.f32 1.0, %v2174
    %v2176 = vxor.u32 %v2115, 2147483648
    %v2177 = vmul.f32 %v2176, 1.442695
    %v2178 = vpow.pop %v2177
    %v2179 = vadd.f32 %v2178, 1.0
    %v2180 = vrcp.pop %v2179
    %v2181 = vmul.f32 %v2179, %v2180
    %v2182 = vsub.f32 1.0, %v2181
    %v2183 = vmul.f32 %v2180, %v2182
    %v2184 = vadd.f32 %v2180, %v2183
    %vm2185 = vweird.f32 %v2179
    %vm2186 = vweird.f32 %v2180
    %vm2187 = vmor %vm2185, %vm2186
    %v2188 = vsel %vm2187, %v2180, %v2184
    %v2189 = vand.u32 2147483647, %v2179
    %vm2190 = vcmp.eq.f32.partialorder %v2189, 8.507059e+37
    %v2191 = vand.u32 %v2179, 2147483648
    %v2192 = vor.u32 1.1754944e-38, %v2191
    %v2193 = vsel %vm2190, %v2192, %v2188
    %v2194 = vmul.f32 1.0, %v2193
    %v2195 = vtanh.pop %v2135
    %v2196 = vxor.u32 %v2155, 2147483648
    %v2197 = vmul.f32 %v2196, 1.442695
    %v2198 = vpow.pop %v2197
    %v2199 = vadd.f32 %v2198, 1.0
    %v2200 = vrcp.pop %v2199
    %v2201 = vmul.f32 %v2199, %v2200
    %v2202 = vsub.f32 1.0, %v2201
    %v2203 = vmul.f32 %v2200, %v2202
    %v2204 = vadd.f32 %v2200, %v2203
    %vm2205 = vweird.f32 %v2199
    %vm2206 = vweird.f32 %v2200
    %vm2207 = vmor %vm2205, %vm2206
    %v2208 = vsel %vm2207, %v2200, %v2204
    %v2209 = vand.u32 2147483647, %v2199
    %vm2210 = vcmp.eq.f32.partialorder %v2209, 8.507059e+37
    %v2211 = vand.u32 %v2199, 2147483648
    %v2212 = vor.u32 1.1754944e-38, %v2211
    %v2213 = vsel %vm2210, %v2212, %v2208
    %v2214 = vmul.f32 1.0, %v2213
    %v2215 = vmul.f32 %v2194, %v1945
    %v2216 = vmul.f32 %v2175, %v2195
    %v2217 = vadd.f32 %v2215, %v2216
    %v2218 = vtanh.pop %v2217
    %v2219 = vmul.f32 %v2214, %v2218
    %2220 = vmatpush.msra.mxu0 %v289
    %2221 = vmatpush.msra.mxu0 %v284
    %2222 = vmatpush.msra.mxu0 %v279
    %2223 = vmatpush.msra.mxu0 %v274
    %2224 = vmatpush.msra.mxu0 %v269
    %2225 = vmatpush.msra.mxu0 %v264
    %2226 = vmatpush.msra.mxu0 %v259
    %2227 = vmatpush.msra.mxu0 %v254
    %2228 = vmatpush.msra.mxu0 %v249
    %2229 = vmatpush.msra.mxu0 %v244
    %2230 = vmatpush.msra.mxu0 %v239
    %2231 = vmatpush.msra.mxu0 %v234
    %2232 = vmatpush.msra.mxu0 %v229
    %2233 = vmatpush.msra.mxu0 %v224
    %2234 = vmatpush.msra.mxu0 %v219
    %2235 = vmatpush.msra.mxu0 %v214
    %2236 = vmatmul.f32.gmra.mxu0 %v2219
    %v2237 = vpop.f32.mrf.mxu0
    %v2238 = vadd.f32 0.0, %v2237
    %2239 = vdwg.mxu0
    %2240 = vmatpush.msra.mxu0 %v290
    %2241 = vmatpush.msra.mxu0 %v285
    %2242 = vmatpush.msra.mxu0 %v280
    %2243 = vmatpush.msra.mxu0 %v275
    %2244 = vmatpush.msra.mxu0 %v270
    %2245 = vmatpush.msra.mxu0 %v265
    %2246 = vmatpush.msra.mxu0 %v260
    %2247 = vmatpush.msra.mxu0 %v255
    %2248 = vmatpush.msra.mxu0 %v250
    %2249 = vmatpush.msra.mxu0 %v245
    %2250 = vmatpush.msra.mxu0 %v240
    %2251 = vmatpush.msra.mxu0 %v235
    %2252 = vmatpush.msra.mxu0 %v230
    %2253 = vmatpush.msra.mxu0 %v225
    %2254 = vmatpush.msra.mxu0 %v220
    %2255 = vmatpush.msra.mxu0 %v215
    %2256 = vmatmul.f32.gmra.mxu0 %v2219
    %v2257 = vpop.f32.mrf.mxu0
    %v2258 = vadd.f32 0.0, %v2257
    %2259 = vdwg.mxu0
    %2260 = vmatpush.msra.mxu0 %v291
    %2261 = vmatpush.msra.mxu0 %v286
    %2262 = vmatpush.msra.mxu0 %v281
    %2263 = vmatpush.msra.mxu0 %v276
    %2264 = vmatpush.msra.mxu0 %v271
    %2265 = vmatpush.msra.mxu0 %v266
    %2266 = vmatpush.msra.mxu0 %v261
    %2267 = vmatpush.msra.mxu0 %v256
    %2268 = vmatpush.msra.mxu0 %v251
    %2269 = vmatpush.msra.mxu0 %v246
    %2270 = vmatpush.msra.mxu0 %v241
    %2271 = vmatpush.msra.mxu0 %v236
    %2272 = vmatpush.msra.mxu0 %v231
    %2273 = vmatpush.msra.mxu0 %v226
    %2274 = vmatpush.msra.mxu0 %v221
    %2275 = vmatpush.msra.mxu0 %v216
    %2276 = vmatmul.f32.gmra.mxu0 %v2219
    %v2277 = vpop.f32.mrf.mxu0
    %v2278 = vadd.f32 0.0, %v2277
    %2279 = vdwg.mxu0
    %2280 = vmatpush.msra.mxu0 %v292
    %2281 = vmatpush.msra.mxu0 %v287
    %2282 = vmatpush.msra.mxu0 %v282
    %2283 = vmatpush.msra.mxu0 %v277
    %2284 = vmatpush.msra.mxu0 %v272
    %2285 = vmatpush.msra.mxu0 %v267
    %2286 = vmatpush.msra.mxu0 %v262
    %2287 = vmatpush.msra.mxu0 %v257
    %2288 = vmatpush.msra.mxu0 %v252
    %2289 = vmatpush.msra.mxu0 %v247
    %2290 = vmatpush.msra.mxu0 %v242
    %2291 = vmatpush.msra.mxu0 %v237
    %2292 = vmatpush.msra.mxu0 %v232
    %2293 = vmatpush.msra.mxu0 %v227
    %2294 = vmatpush.msra.mxu0 %v222
    %2295 = vmatpush.msra.mxu0 %v217
    %2296 = vmatmul.f32.gmra.mxu0 %v2219
    %v2297 = vpop.f32.mrf.mxu0
    %v2298 = vadd.f32 0.0, %v2297
    %2299 = vdwg.mxu0
    %2300 = vmatpush.msra.mxu0 %v293
    %2301 = vmatpush.msra.mxu0 %v288
    %2302 = vmatpush.msra.mxu0 %v283
    %2303 = vmatpush.msra.mxu0 %v278
    %2304 = vmatpush.msra.mxu0 %v273
    %2305 = vmatpush.msra.mxu0 %v268
    %2306 = vmatpush.msra.mxu0 %v263
    %2307 = vmatpush.msra.mxu0 %v258
    %2308 = vmatpush.msra.mxu0 %v253
    %2309 = vmatpush.msra.mxu0 %v248
    %2310 = vmatpush.msra.mxu0 %v243
    %2311 = vmatpush.msra.mxu0 %v238
    %2312 = vmatpush.msra.mxu0 %v233
    %2313 = vmatpush.msra.mxu0 %v228
    %2314 = vmatpush.msra.mxu0 %v223
    %2315 = vmatpush.msra.mxu0 %v218
    %2316 = vmatmul.f32.gmra.mxu0 %v2219
    %v2317 = vpop.f32.mrf.mxu0
    %v2318 = vadd.f32 0.0, %v2317
    %2319 = vdwg.mxu0
    %v2320 = vadd.f32 %v2318, %v687
    %v2321 = vsel %vm690, %v2320, -inf
    %2322 = vmax.xlane.f32.xlu0 %v2321
    %v2323 = vpop.xlane.xlu0 %2322
    %vm2324 = vcmp.eq.f32.partialorder %v2320, %v2323
    %v2325 = vsel %vm2324, %v375, 128
    %v2326 = vsel %vm690, %v2325, 2147483647
    %v2327 = vand.u32 %v2326, 65535
    %v2328 = vshra.s32 %v2326, 16
    %v2329 = vcvt.s32.f32 %v2327
    %v2330 = vcvt.s32.f32 %v2328
    %2331 = vmin.xlane.f32.xlu0 %v2330
    %v2332 = vpop.xlane.xlu0 %2331
    %vm2333 = vcmp.eq.f32.partialorder %v2330, %v2332
    %v2334 = vsel %vm2333, %v2329, inf
    %2335 = vmin.xlane.f32.xlu0 %v2334
    %v2336 = vpop.xlane.xlu0 %2335
    %v2337 = vcvt.f32.s32 %v2336
    %v2338 = vcvt.f32.s32 %v2332
    %v2339 = vshll.u32 %v2338, 16
    %v2340 = vadd.s32 %v2339, %v2337
    %vm2341 = vcmp.eq.s32.totalorder %v375, 6
    %v2342 = vsel %vm2341, %v2340, %v2070
    %vm2343 = vcmp.eq.s32.totalorder %v2340, 1
    %vm2344 = vmor %vm2072, %vm2343
    %v2345 = vsel %vm2344, %v2073, %v2340
    %vm2346 = vcmp.eq.s32.totalorder %v375, %v2345
    %v2347 = vsel %vm2346, 1, 0
    %v2348 = vcvt.s32.f32 %v2347
    %2349 = vmatpush.msra.mxu0 %v439
    %2350 = vmatpush.msra.mxu0 %v435
    %2351 = vmatpush.msra.mxu0 %v431
    %2352 = vmatpush.msra.mxu0 %v427
    %2353 = vmatpush.msra.mxu0 %v423
    %2354 = vmatpush.msra.mxu0 %v419
    %2355 = vmatpush.msra.mxu0 %v415
    %2356 = vmatpush.msra.mxu0 %v411
    %2357 = vmatpush.msra.mxu0 %v407
    %2358 = vmatpush.msra.mxu0 %v403
    %2359 = vmatpush.msra.mxu0 %v399
    %2360 = vmatpush.msra.mxu0 %v395
    %2361 = vmatpush.msra.mxu0 %v391
    %2362 = vmatpush.msra.mxu0 %v387
    %2363 = vmatpush.msra.mxu0 %v383
    %2364 = vmatpush.msra.mxu0 %v379
    %2365 = vmatmul.f32.gmra.mxu0 %v2348
    %v2366 = vpop.f32.mrf.mxu0
    %v2367 = vadd.f32 %v2238, %v2366
    %2368 = vdwg.mxu0
    %2369 = vmatpush.msra.mxu0 %v440
    %2370 = vmatpush.msra.mxu0 %v436
    %2371 = vmatpush.msra.mxu0 %v432
    %2372 = vmatpush.msra.mxu0 %v428
    %2373 = vmatpush.msra.mxu0 %v424
    %2374 = vmatpush.msra.mxu0 %v420
    %2375 = vmatpush.msra.mxu0 %v416
    %2376 = vmatpush.msra.mxu0 %v412
    %2377 = vmatpush.msra.mxu0 %v408
    %2378 = vmatpush.msra.mxu0 %v404
    %2379 = vmatpush.msra.mxu0 %v400
    %2380 = vmatpush.msra.mxu0 %v396
    %2381 = vmatpush.msra.mxu0 %v392
    %2382 = vmatpush.msra.mxu0 %v388
    %2383 = vmatpush.msra.mxu0 %v384
    %2384 = vmatpush.msra.mxu0 %v380
    %2385 = vmatmul.f32.gmra.mxu0 %v2348
    %v2386 = vpop.f32.mrf.mxu0
    %v2387 = vadd.f32 %v2258, %v2386
    %2388 = vdwg.mxu0
    %2389 = vmatpush.msra.mxu0 %v441
    %2390 = vmatpush.msra.mxu0 %v437
    %2391 = vmatpush.msra.mxu0 %v433
    %2392 = vmatpush.msra.mxu0 %v429
    %2393 = vmatpush.msra.mxu0 %v425
    %2394 = vmatpush.msra.mxu0 %v421
    %2395 = vmatpush.msra.mxu0 %v417
    %2396 = vmatpush.msra.mxu0 %v413
    %2397 = vmatpush.msra.mxu0 %v409
    %2398 = vmatpush.msra.mxu0 %v405
    %2399 = vmatpush.msra.mxu0 %v401
    %2400 = vmatpush.msra.mxu0 %v397
    %2401 = vmatpush.msra.mxu0 %v393
    %2402 = vmatpush.msra.mxu0 %v389
    %2403 = vmatpush.msra.mxu0 %v385
    %2404 = vmatpush.msra.mxu0 %v381
    %2405 = vmatmul.f32.gmra.mxu0 %v2348
    %v2406 = vpop.f32.mrf.mxu0
    %v2407 = vadd.f32 %v2278, %v2406
    %2408 = vdwg.mxu0
    %2409 = vmatpush.msra.mxu0 %v442
    %2410 = vmatpush.msra.mxu0 %v438
    %2411 = vmatpush.msra.mxu0 %v434
    %2412 = vmatpush.msra.mxu0 %v430
    %2413 = vmatpush.msra.mxu0 %v426
    %2414 = vmatpush.msra.mxu0 %v422
    %2415 = vmatpush.msra.mxu0 %v418
    %2416 = vmatpush.msra.mxu0 %v414
    %2417 = vmatpush.msra.mxu0 %v410
    %2418 = vmatpush.msra.mxu0 %v406
    %2419 = vmatpush.msra.mxu0 %v402
    %2420 = vmatpush.msra.mxu0 %v398
    %2421 = vmatpush.msra.mxu0 %v394
    %2422 = vmatpush.msra.mxu0 %v390
    %2423 = vmatpush.msra.mxu0 %v386
    %2424 = vmatpush.msra.mxu0 %v382
    %2425 = vmatmul.f32.gmra.mxu0 %v2348
    %v2426 = vpop.f32.mrf.mxu0
    %v2427 = vadd.f32 %v2298, %v2426
    %2428 = vdwg.mxu0
    %v2429 = vxor.u32 %v2367, 2147483648
    %v2430 = vmul.f32 %v2429, 1.442695
    %v2431 = vpow.pop %v2430
    %v2432 = vadd.f32 %v2431, 1.0
    %v2433 = vrcp.pop %v2432
    %v2434 = vmul.f32 %v2432, %v2433
    %v2435 = vsub.f32 1.0, %v2434
    %v2436 = vmul.f32 %v2433, %v2435
    %v2437 = vadd.f32 %v2433, %v2436
    %vm2438 = vweird.f32 %v2432
    %vm2439 = vweird.f32 %v2433
    %vm2440 = vmor %vm2438, %vm2439
    %v2441 = vsel %vm2440, %v2433, %v2437
    %v2442 = vand.u32 2147483647, %v2432
    %vm2443 = vcmp.eq.f32.partialorder %v2442, 8.507059e+37
    %v2444 = vand.u32 %v2432, 2147483648
    %v2445 = vor.u32 1.1754944e-38, %v2444
    %v2446 = vsel %vm2443, %v2445, %v2441
    %v2447 = vmul.f32 1.0, %v2446
    %v2448 = vxor.u32 %v2387, 2147483648
    %v2449 = vmul.f32 %v2448, 1.442695
    %v2450 = vpow.pop %v2449
    %v2451 = vadd.f32 %v2450, 1.0
    %v2452 = vrcp.pop %v2451
    %v2453 = vmul.f32 %v2451, %v2452
    %v2454 = vsub.f32 1.0, %v2453
    %v2455 = vmul.f32 %v2452, %v2454
    %v2456 = vadd.f32 %v2452, %v2455
    %vm2457 = vweird.f32 %v2451
    %vm2458 = vweird.f32 %v2452
    %vm2459 = vmor %vm2457, %vm2458
    %v2460 = vsel %vm2459, %v2452, %v2456
    %v2461 = vand.u32 2147483647, %v2451
    %vm2462 = vcmp.eq.f32.partialorder %v2461, 8.507059e+37
    %v2463 = vand.u32 %v2451, 2147483648
    %v2464 = vor.u32 1.1754944e-38, %v2463
    %v2465 = vsel %vm2462, %v2464, %v2460
    %v2466 = vmul.f32 1.0, %v2465
    %v2467 = vtanh.pop %v2407
    %v2468 = vxor.u32 %v2427, 2147483648
    %v2469 = vmul.f32 %v2468, 1.442695
    %v2470 = vpow.pop %v2469
    %v2471 = vadd.f32 %v2470, 1.0
    %v2472 = vrcp.pop %v2471
    %v2473 = vmul.f32 %v2471, %v2472
    %v2474 = vsub.f32 1.0, %v2473
    %v2475 = vmul.f32 %v2472, %v2474
    %v2476 = vadd.f32 %v2472, %v2475
    %vm2477 = vweird.f32 %v2471
    %vm2478 = vweird.f32 %v2472
    %vm2479 = vmor %vm2477, %vm2478
    %v2480 = vsel %vm2479, %v2472, %v2476
    %v2481 = vand.u32 2147483647, %v2471
    %vm2482 = vcmp.eq.f32.partialorder %v2481, 8.507059e+37
    %v2483 = vand.u32 %v2471, 2147483648
    %v2484 = vor.u32 1.1754944e-38, %v2483
    %v2485 = vsel %vm2482, %v2484, %v2480
    %v2486 = vmul.f32 1.0, %v2485
    %v2487 = vmul.f32 %v2466, %v2217
    %v2488 = vmul.f32 %v2447, %v2467
    %v2489 = vadd.f32 %v2487, %v2488
    %v2490 = vtanh.pop %v2489
    %v2491 = vmul.f32 %v2486, %v2490
    %2492 = vmatpush.msra.mxu0 %v293
    %2493 = vmatpush.msra.mxu0 %v288
    %2494 = vmatpush.msra.mxu0 %v283
    %2495 = vmatpush.msra.mxu0 %v278
    %2496 = vmatpush.msra.mxu0 %v273
    %2497 = vmatpush.msra.mxu0 %v268
    %2498 = vmatpush.msra.mxu0 %v263
    %2499 = vmatpush.msra.mxu0 %v258
    %2500 = vmatpush.msra.mxu0 %v253
    %2501 = vmatpush.msra.mxu0 %v248
    %2502 = vmatpush.msra.mxu0 %v243
    %2503 = vmatpush.msra.mxu0 %v238
    %2504 = vmatpush.msra.mxu0 %v233
    %2505 = vmatpush.msra.mxu0 %v228
    %2506 = vmatpush.msra.mxu0 %v223
    %2507 = vmatpush.msra.mxu0 %v218
    %2508 = vmatmul.f32.gmra.mxu0 %v2491
    %v2509 = vpop.f32.mrf.mxu0
    %v2510 = vadd.f32 0.0, %v2509
    %2511 = vdwg.mxu0
    %v2512 = vadd.f32 %v2510, %v687
    %v2513 = vsel %vm690, %v2512, -inf
    %2514 = vmax.xlane.f32.xlu0 %v2513
    %v2515 = vpop.xlane.xlu0 %2514
    %vm2516 = vcmp.eq.f32.partialorder %v2512, %v2515
    %v2517 = vsel %vm2516, %v375, 128
    %v2518 = vsel %vm690, %v2517, 2147483647
    %v2519 = vand.u32 %v2518, 65535
    %v2520 = vshra.s32 %v2518, 16
    %v2521 = vcvt.s32.f32 %v2519
    %v2522 = vcvt.s32.f32 %v2520
    %2523 = vmin.xlane.f32.xlu0 %v2522
    %v2524 = vpop.xlane.xlu0 %2523
    %vm2525 = vcmp.eq.f32.partialorder %v2522, %v2524
    %v2526 = vsel %vm2525, %v2521, inf
    %2527 = vmin.xlane.f32.xlu0 %v2526
    %v2528 = vpop.xlane.xlu0 %2527
    %v2529 = vcvt.f32.s32 %v2528
    %v2530 = vcvt.f32.s32 %v2524
    %v2531 = vshll.u32 %v2530, 16
    %v2532 = vadd.s32 %v2531, %v2529
    %vm2533 = vcmp.eq.s32.totalorder %v375, 7
    %v2534 = vsel %vm2533, %v2532, %v2342
    %vm2535 = vcmask 58368
    %2536 = vst.msk [vmem:[#allocation11] sm:$0x3] %vm2535, %v2534
    %2537 = vst [vmem:[#allocation12] sm:$0x3] %v2491
    %2538 = vst [vmem:[#allocation14] sm:$0x3] %v2489
    // Predicated region
    $region46: #{tpu_custom_call.1} parent=1 // pred_check
      _
    $region47: #{tpu_custom_call.1} parent=1 // pred_check_branch
      %2540 = sbr.rel (0) target = $region49
    $region48: #{tpu_custom_call.1} parent=1 // pred_region
      %2542 = vsyncadd [#allocation4], 0
      %s2544 = sshll.u32 [#allocation11], 4
      %s2545 = int_to_ptr.vmem [resolvable:$true] %s2544
      %s2546 = sshll.u32 %s6, 4
      %s2547 = int_to_ptr.hbm [resolvable:$true] %s2546
      %2549 = dma.vmem_to_hbm [thread:$0]  %s2545, 32, %s2547, [#allocation4]
    $region49: #{tpu_custom_call.1} parent=1 // pred_fallthru
      _
    // Predicated region
    $region50: #{tpu_custom_call.1} parent=1 // pred_check
      _
    $region51: #{tpu_custom_call.1} parent=1 // pred_check_branch
      %2551 = sbr.rel (0) target = $region53
    $region52: #{tpu_custom_call.1} parent=1 // pred_region
      %2553 = vsyncadd [#allocation13], 0
      %s2555 = sshll.u32 [#allocation12], 4
      %s2556 = int_to_ptr.vmem [resolvable:$true] %s2555
      %s2557 = sshll.u32 %s7, 4
      %s2558 = int_to_ptr.hbm [resolvable:$true] %s2557
      %2560 = dma.vmem_to_hbm [thread:$0]  %s2556, 32, %s2558, [#allocation13]
    $region53: #{tpu_custom_call.1} parent=1 // pred_fallthru
      _
    // Predicated region
    $region54: #{tpu_custom_call.1} parent=1 // pred_check
      _
    $region55: #{tpu_custom_call.1} parent=1 // pred_check_branch
      %2562 = sbr.rel (0) target = $region57
    $region56: #{tpu_custom_call.1} parent=1 // pred_region
      %2564 = vsyncadd [#allocation13], 0
      %s2566 = sshll.u32 [#allocation14], 4
      %s2567 = int_to_ptr.vmem [resolvable:$true] %s2566
      %s2568 = sshll.u32 %s8, 4
      %s2569 = int_to_ptr.hbm [resolvable:$true] %s2568
      %2571 = dma.vmem_to_hbm [thread:$0]  %s2567, 32, %s2569, [#allocation13]
    $region57: #{tpu_custom_call.1} parent=1 // pred_fallthru
      _
    // Predicated region
    $region58: #{tpu_custom_call.1} parent=1 // pred_check
      _
    $region59: #{tpu_custom_call.1} parent=1 // pred_check_branch
      %2573 = sbr.rel (0) target = $region61
    $region60: #{tpu_custom_call.1} parent=1 // pred_region
      %2575 = dma.done [#allocation4], 32
    $region61: #{tpu_custom_call.1} parent=1 // pred_fallthru
      _
    // Predicated region
    $region62: #{tpu_custom_call.1} parent=1 // pred_check
      _
    $region63: #{tpu_custom_call.1} parent=1 // pred_check_branch
      %2577 = sbr.rel (0) target = $region65
    $region64: #{tpu_custom_call.1} parent=1 // pred_region
      %2579 = dma.done [#allocation13], 32
    $region65: #{tpu_custom_call.1} parent=1 // pred_fallthru
      _
    // Predicated region
    $region66: #{tpu_custom_call.1} parent=1 // pred_check
      _
    $region67: #{tpu_custom_call.1} parent=1 // pred_check_branch
      %2581 = sbr.rel (0) target = $region69
    $region68: #{tpu_custom_call.1} parent=1 // pred_region
      %2583 = dma.done [#allocation13], 32
    $region69: #{tpu_custom_call.1} parent=1 // pred_fallthru
      _
    %2584 = vsyncpa [#allocation3], 1
    %2585 = vsyncpa [#allocation6], 1
    %2586 = vsyncpa [#allocation9], 1
    %2587 = vsyncpa [#allocation4], 1
    %2588 = vsyncpa [#allocation13], 1

</llo_original>
